<compile_context>
chip_gen: v6e
topology: v6e:2x2x1
jax: 0.10.0
libtpu: 0.0.40
codegen_flags: <defaults>
</compile_context>

<pallas_src>
import jax
import jax.numpy as jnp
from jax import lax
from jax.experimental import pallas as pl
from jax.experimental.pallas import tpu as pltpu

# ---- problem sizes (state_size = (width, height, num_channels)) -------------
WIDTH, HEIGHT, NUM_CHANNELS = 16, 16, 4
NUM_ACTIONS = HEIGHT                    # per the module: num_actions = height
HIDDEN = 128
C1, C2 = 16, 32                         # conv output channels


def conv2d_size_out(size, kernel_size, stride=1):
    return (size - (kernel_size - 1) - 1) // stride + 1


H1 = conv2d_size_out(HEIGHT, 3)         # 14
W1 = conv2d_size_out(WIDTH, 3)          # 14
H2 = conv2d_size_out(H1, 2)             # 13
W2 = conv2d_size_out(W1, 2)             # 13

HW = HEIGHT * WIDTH                     # 256: lane-dense flattened image rows
L1 = (H1 - 1) * WIDTH + W1              # 222: full-width conv1 output span
L2 = (H2 - 1) * WIDTH + W2              # 205: full-width conv2 output span
SPAD = ((H2 * W2 + 15) // 16) * 16      # 176: per-channel padded spatial size
FLAT = C2 * H2 * W2                     # 5408: torch.flatten(x, 1) size
FLAT_PAD = C2 * SPAD                    # 5632 = 44 * 128 (lane aligned)
NK = 2                                  # K-pipeline steps for the fc layer
TK = FLAT_PAD // NK                     # 2816 = 22 * 128
assert TK % 128 == 0 and TK % 16 == 0


# ---------------------------- Pallas kernels ---------------------------------
def conv_kernel(x_ref, w1_ref, b1_ref, w2_ref, b2_ref, out_ref):
    """One image: conv1(3x3)+ReLU then conv2(2x2)+ReLU, one matmul per layer.

    x_ref  : (1, CIN, 256)   image with rows flattened onto lanes
    w1_ref : (C1, 9*CIN)     rows ordered (kh, kw, cin)
    b1_ref : (C1, 1)
    w2_ref : (C2, 4*C1)      rows ordered (kh, kw, c1)
    b2_ref : (C2, 1)
    out_ref: (1, C2, SPAD)   cols [0,169): (h2*13 + w2);  cols [169,176): 0
    """
    x = x_ref[0]                                               # (CIN, 256)

    # conv1: im2col via 9 full-width lane shifts -> (C1,9CIN)@(9CIN,222)
    p1 = jnp.concatenate(
        [x[:, kh * WIDTH + kw: kh * WIDTH + kw + L1]
         for kh in range(3) for kw in range(3)], axis=0)       # (9*CIN, 222)
    y1 = jnp.maximum(
        jnp.dot(w1_ref[...], p1, preferred_element_type=jnp.float32)
        + b1_ref[...], 0.0)                                    # (C1, 222)

    # conv2: im2col via 4 full-width lane shifts -> (C2,4C1)@(4C1,205)
    p2 = jnp.concatenate(
        [y1[:, kh * WIDTH + kw: kh * WIDTH + kw + L2]
         for kh in range(2) for kw in range(2)], axis=0)       # (4*C1, 205)
    y2 = jnp.maximum(
        jnp.dot(w2_ref[...], p2, preferred_element_type=jnp.float32)
        + b2_ref[...], 0.0)                                    # (C2, 205)

    # Compact the full-width (stride-16) layout to contiguous 13-wide rows in
    # torch.flatten order, padding to SPAD lanes (zero columns) so the flat
    # feature dim downstream is 128-aligned.
    out_ref[0] = jnp.concatenate(
        [y2[:, h * WIDTH: h * WIDTH + W2] for h in range(H2)]
        + [jnp.zeros((C2, SPAD - H2 * W2), jnp.float32)], axis=1)


def head_kernel(x_ref, wv_ref, bv_ref, wa_ref, ba_ref, vw_ref, vb_ref,
                aw_ref, ab_ref, q_ref, hv_acc, ha_acc):
    """Dueling head, K-pipelined over the flattened feature dim.

    x_ref : (B, TK) f32     wv_ref/wa_ref : (TK, 128) bf16   bv/ba : (1, 128)
    vw_ref: (128, 1)        aw_ref : (128, A)                vb/ab : (1,1)/(1,A)
    q_ref : (B, A)          hv_acc/ha_acc : VMEM (B, 128) f32 accumulators
    """
    k = pl.program_id(0)

    @pl.when(k == 0)
    def _():
        hv_acc[...] = jnp.zeros_like(hv_acc)
        ha_acc[...] = jnp.zeros_like(ha_acc)

    xb = x_ref[...].astype(jnp.bfloat16)                       # (B, TK)
    hv_acc[...] += jnp.dot(xb, wv_ref[...], preferred_element_type=jnp.float32)
    ha_acc[...] += jnp.dot(xb, wa_ref[...], preferred_element_type=jnp.float32)

    @pl.when(k == pl.num_programs(0) - 1)
    def _():
        hv = jnp.maximum(hv_acc[...] + bv_ref[...], 0.0)       # fc_value + ReLU
        ha = jnp.maximum(ha_acc[...] + ba_ref[...], 0.0)       # fc_adv   + ReLU
        # dropout_val / dropout_adv: identity at inference.
        value = jnp.dot(hv, vw_ref[...],
                        preferred_element_type=jnp.float32) + vb_ref[...]  # (B,1)
        adv = jnp.dot(ha, aw_ref[...],
                      preferred_element_type=jnp.float32) + ab_ref[...]    # (B,A)
        q_ref[...] = value + adv - jnp.mean(adv, axis=1, keepdims=True)


# ------------------------------ wrappers --------------------------------------
def prepare_params(params):
    """One-time re-layout of PyTorch-style parameters for the kernels."""
    w1, b1, w2, b2, wv, bv, wa, ba, vw, vb, aw, ab = params
    cin = w1.shape[1]
    # conv weights (Cout,Cin,KH,KW) -> (Cout, KH*KW*Cin): taps major, cin minor
    w1m = jnp.transpose(w1, (0, 2, 3, 1)).reshape(C1, 9 * cin)
    w2m = jnp.transpose(w2, (0, 2, 3, 1)).reshape(C2, 4 * C1)

    def pad_fc(w):   # (FLAT, H) -> (FLAT_PAD, H): zero rows at the pad columns
        w3 = w.reshape(C2, H2 * W2, HIDDEN)
        w3 = jnp.pad(w3, ((0, 0), (0, SPAD - H2 * W2), (0, 0)))
        return w3.reshape(FLAT_PAD, HIDDEN)

    return (w1m, b1.reshape(C1, 1), w2m, b2.reshape(C2, 1),
            pad_fc(wv).astype(jnp.bfloat16), bv.reshape(1, HIDDEN),
            pad_fc(wa).astype(jnp.bfloat16), ba.reshape(1, HIDDEN),
            vw, vb.reshape(1, 1), aw, ab.reshape(1, NUM_ACTIONS))


@jax.jit
def cnn_ddqn_forward(x, prep):
    (w1m, b1c, w2m, b2c, wv_bf, bv_r, wa_bf, ba_r, vw, vb_r, aw, ab_r) = prep
    B, cin = x.shape[0], x.shape[1]
    xf = x.reshape(B, cin, HW)                      # lane-dense image rows

    conv_out = pl.pallas_call(
        conv_kernel,
        out_shape=jax.ShapeDtypeStruct((B, C2, SPAD), jnp.float32),
        grid=(B,),
        in_specs=[
            pl.BlockSpec((1, cin, HW), lambda b: (b, 0, 0)),
            pl.BlockSpec((C1, 9 * cin), lambda b: (0, 0)),
            pl.BlockSpec((C1, 1), lambda b: (0, 0)),
            pl.BlockSpec((C2, 4 * C1), lambda b: (0, 0)),
            pl.BlockSpec((C2, 1), lambda b: (0, 0)),
        ],
        out_specs=pl.BlockSpec((1, C2, SPAD), lambda b: (b, 0, 0)),
        compiler_params=pltpu.CompilerParams(
            dimension_semantics=("parallel",)),
    )(xf, w1m, b1c, w2m, b2c)

    # torch.flatten(x, 1) ordering is encoded in the (c, h2*13+w2 [+pad]) slab;
    # collapsing minor dims here is a free bitcast.
    flat = conv_out.reshape(B, FLAT_PAD)

    q = pl.pallas_call(
        head_kernel,
        out_shape=jax.ShapeDtypeStruct((B, NUM_ACTIONS), jnp.float32),
        grid=(NK,),
        in_specs=[
            pl.BlockSpec((B, TK), lambda k: (0, k)),
            pl.BlockSpec((TK, HIDDEN), lambda k: (k, 0)),
            pl.BlockSpec((1, HIDDEN), lambda k: (0, 0)),
            pl.BlockSpec((TK, HIDDEN), lambda k: (k, 0)),
            pl.BlockSpec((1, HIDDEN), lambda k: (0, 0)),
            pl.BlockSpec((HIDDEN, 1), lambda k: (0, 0)),
            pl.BlockSpec((1, 1), lambda k: (0, 0)),
            pl.BlockSpec((HIDDEN, NUM_ACTIONS), lambda k: (0, 0)),
            pl.BlockSpec((1, NUM_ACTIONS), lambda k: (0, 0)),
        ],
        out_specs=pl.BlockSpec((B, NUM_ACTIONS), lambda k: (0, 0)),
        scratch_shapes=[pltpu.VMEM((B, HIDDEN), jnp.float32),
                        pltpu.VMEM((B, HIDDEN), jnp.float32)],
        compiler_params=pltpu.CompilerParams(
            dimension_semantics=("arbitrary",)),
    )(flat, wv_bf, bv_r, wa_bf, ba_r, vw, vb_r, aw, ab_r)
    return q


# ------------------------- pure-JAX reference ---------------------------------
def reference_forward(x, params):
    w1, b1, w2, b2, wv, bv, wa, ba, vw, vb, aw, ab = params
    dn = ("NCHW", "OIHW", "NCHW")
    y = lax.conv_general_dilated(x, w1, (1, 1), "VALID", dimension_numbers=dn)
    y = jnp.maximum(y + b1.reshape(1, -1, 1, 1), 0.0)
    y = lax.conv_general_dilated(y, w2, (1, 1), "VALID", dimension_numbers=dn)
    y = jnp.maximum(y + b2.reshape(1, -1, 1, 1), 0.0)
    f = y.reshape(x.shape[0], -1)
    hv = jnp.maximum(f @ wv + bv, 0.0)
    ha = jnp.maximum(f @ wa + ba, 0.0)
    value = hv @ vw + vb
    adv = ha @ aw + ab
    return value + adv - jnp.mean(adv, axis=1, keepdims=True)


# ------------------------------- main ------------------------------------------
if __name__ == "__main__":
    key = jax.random.PRNGKey(0)
    ks = jax.random.split(key, 13)
    CIN = NUM_CHANNELS

    # Deterministic synthetic parameters (shapes from CNN_DDQN.__init__).
    w1 = 0.05 * jax.random.normal(ks[0], (C1, CIN, 3, 3), jnp.float32)
    b1 = 0.05 * jax.random.normal(ks[1], (C1,), jnp.float32)
    w2 = 0.05 * jax.random.normal(ks[2], (C2, C1, 2, 2), jnp.float32)
    b2 = 0.05 * jax.random.normal(ks[3], (C2,), jnp.float32)
    wv = (1.0 / jnp.sqrt(FLAT)) * jax.random.normal(ks[4], (FLAT, HIDDEN), jnp.float32)
    bv = 0.05 * jax.random.normal(ks[5], (HIDDEN,), jnp.float32)
    wa = (1.0 / jnp.sqrt(FLAT)) * jax.random.normal(ks[6], (FLAT, HIDDEN), jnp.float32)
    ba = 0.05 * jax.random.normal(ks[7], (HIDDEN,), jnp.float32)
    vw = (1.0 / jnp.sqrt(HIDDEN)) * jax.random.normal(ks[8], (HIDDEN, 1), jnp.float32)
    vb = 0.05 * jax.random.normal(ks[9], (1,), jnp.float32)
    aw = (1.0 / jnp.sqrt(HIDDEN)) * jax.random.normal(ks[10], (HIDDEN, NUM_ACTIONS), jnp.float32)
    ab = 0.05 * jax.random.normal(ks[11], (NUM_ACTIONS,), jnp.float32)
    params = (w1, b1, w2, b2, wv, bv, wa, ba, vw, vb, aw, ab)

    # Input: batch=2, NCHW = (2, 4, 16, 16).
    x = jax.random.normal(ks[12], (2, CIN, HEIGHT, WIDTH), jnp.float32)

    prep = prepare_params(params)
    q = cnn_ddqn_forward(x, prep)
    q = jax.block_until_ready(q)

    q_ref = reference_forward(x, params)
    assert q.shape == (2, NUM_ACTIONS)
    assert jnp.allclose(q, q_ref, rtol=1e-2, atol=1e-2), "mismatch vs reference"

    print("KERNEL_OK")
</pallas_src>

<mosaic_0001>
module attributes {stable_mosaic.version = 11 : i64} {
  func.func @conv_kernel(%arg0: i32, %arg1: memref<1x4x256xf32, #tpu.memory_space<vmem>>, %arg2: memref<16x36xf32, #tpu.memory_space<vmem>>, %arg3: memref<16x1xf32, #tpu.memory_space<vmem>>, %arg4: memref<32x64xf32, #tpu.memory_space<vmem>>, %arg5: memref<32x1xf32, #tpu.memory_space<vmem>>, %arg6: memref<1x32x176xf32, #tpu.memory_space<vmem>>) attributes {dimension_semantics = [#tpu.dimension_semantics<parallel>], iteration_bounds = array<i64: 2>, scalar_prefetch = 0 : i64, scratch_operands = 0 : i64, tpu.core_type = #tpu.core_type<tc>, window_params = [{transform_indices = @transform_0, window_bounds = array<i64: 1, 4, 256>}, {pipeline_mode = #tpu.pipeline_mode<synchronous>, transform_indices = @transform_1, window_bounds = array<i64: 16, 36>}, {pipeline_mode = #tpu.pipeline_mode<synchronous>, transform_indices = @transform_2, window_bounds = array<i64: 16, 1>}, {pipeline_mode = #tpu.pipeline_mode<synchronous>, transform_indices = @transform_3, window_bounds = array<i64: 32, 64>}, {pipeline_mode = #tpu.pipeline_mode<synchronous>, transform_indices = @transform_4, window_bounds = array<i64: 32, 1>}, {transform_indices = @transform_5, window_bounds = array<i64: 1, 32, 176>}]} {
    %c0 = arith.constant 0 : index
    %c0_0 = arith.constant 0 : index
    %c0_1 = arith.constant 0 : index
    %0 = vector.load %arg1[%c0, %c0_0, %c0_1] : memref<1x4x256xf32, #tpu.memory_space<vmem>>, vector<1x4x256xf32>
    %1 = vector.shape_cast %0 : vector<1x4x256xf32> to vector<4x256xf32>
    %2 = vector.extract_strided_slice %1 {offsets = [0, 0], sizes = [4, 222], strides = [1, 1]} : vector<4x256xf32> to vector<4x222xf32>
    %3 = vector.extract_strided_slice %1 {offsets = [0, 1], sizes = [4, 222], strides = [1, 1]} : vector<4x256xf32> to vector<4x222xf32>
    %4 = vector.extract_strided_slice %1 {offsets = [0, 2], sizes = [4, 222], strides = [1, 1]} : vector<4x256xf32> to vector<4x222xf32>
    %5 = vector.extract_strided_slice %1 {offsets = [0, 16], sizes = [4, 222], strides = [1, 1]} : vector<4x256xf32> to vector<4x222xf32>
    %6 = vector.extract_strided_slice %1 {offsets = [0, 17], sizes = [4, 222], strides = [1, 1]} : vector<4x256xf32> to vector<4x222xf32>
    %7 = vector.extract_strided_slice %1 {offsets = [0, 18], sizes = [4, 222], strides = [1, 1]} : vector<4x256xf32> to vector<4x222xf32>
    %8 = vector.extract_strided_slice %1 {offsets = [0, 32], sizes = [4, 222], strides = [1, 1]} : vector<4x256xf32> to vector<4x222xf32>
    %9 = vector.extract_strided_slice %1 {offsets = [0, 33], sizes = [4, 222], strides = [1, 1]} : vector<4x256xf32> to vector<4x222xf32>
    %10 = vector.extract_strided_slice %1 {offsets = [0, 34], sizes = [4, 222], strides = [1, 1]} : vector<4x256xf32> to vector<4x222xf32>
    %11 = tpu.concatenate %2, %3, %4, %5, %6, %7, %8, %9, %10 in 0 : vector<4x222xf32>, vector<4x222xf32>, vector<4x222xf32>, vector<4x222xf32>, vector<4x222xf32>, vector<4x222xf32>, vector<4x222xf32>, vector<4x222xf32>, vector<4x222xf32> -> vector<36x222xf32>
    %c0_2 = arith.constant 0 : index
    %c0_3 = arith.constant 0 : index
    %12 = vector.load %arg2[%c0_2, %c0_3] : memref<16x36xf32, #tpu.memory_space<vmem>>, vector<16x36xf32>
    %cst = arith.constant dense<0.000000e+00> : vector<16x222xf32>
    %13 = tpu.matmul %12, %11, %cst {dimension_numbers = #tpu.dot_dimension_numbers<[1], [0], [0], [1], [0, 0, 1, 1], [], []>} : vector<16x36xf32>, vector<36x222xf32>, vector<16x222xf32> -> vector<16x222xf32>
    %c0_4 = arith.constant 0 : index
    %c0_5 = arith.constant 0 : index
    %14 = vector.load %arg3[%c0_4, %c0_5] : memref<16x1xf32, #tpu.memory_space<vmem>>, vector<16x1xf32>
    %15 = vector.broadcast %14 : vector<16x1xf32> to vector<16x222xf32>
    %16 = arith.addf %13, %15 : vector<16x222xf32>
    %cst_6 = arith.constant 0.000000e+00 : f32
    %17 = vector.broadcast %cst_6 : f32 to vector<16x222xf32>
    %18 = arith.maximumf %16, %17 : vector<16x222xf32>
    %19 = vector.extract_strided_slice %18 {offsets = [0, 0], sizes = [16, 205], strides = [1, 1]} : vector<16x222xf32> to vector<16x205xf32>
    %20 = vector.extract_strided_slice %18 {offsets = [0, 1], sizes = [16, 205], strides = [1, 1]} : vector<16x222xf32> to vector<16x205xf32>
    %21 = vector.extract_strided_slice %18 {offsets = [0, 16], sizes = [16, 205], strides = [1, 1]} : vector<16x222xf32> to vector<16x205xf32>
    %22 = vector.extract_strided_slice %18 {offsets = [0, 17], sizes = [16, 205], strides = [1, 1]} : vector<16x222xf32> to vector<16x205xf32>
    %23 = tpu.concatenate %19, %20, %21, %22 in 0 : vector<16x205xf32>, vector<16x205xf32>, vector<16x205xf32>, vector<16x205xf32> -> vector<64x205xf32>
    %c0_7 = arith.constant 0 : index
    %c0_8 = arith.constant 0 : index
    %24 = vector.load %arg4[%c0_7, %c0_8] : memref<32x64xf32, #tpu.memory_space<vmem>>, vector<32x64xf32>
    %cst_9 = arith.constant dense<0.000000e+00> : vector<32x205xf32>
    %25 = tpu.matmul %24, %23, %cst_9 {dimension_numbers = #tpu.dot_dimension_numbers<[1], [0], [0], [1], [0, 0, 1, 1], [], []>} : vector<32x64xf32>, vector<64x205xf32>, vector<32x205xf32> -> vector<32x205xf32>
    %c0_10 = arith.constant 0 : index
    %c0_11 = arith.constant 0 : index
    %26 = vector.load %arg5[%c0_10, %c0_11] : memref<32x1xf32, #tpu.memory_space<vmem>>, vector<32x1xf32>
    %27 = vector.broadcast %26 : vector<32x1xf32> to vector<32x205xf32>
    %28 = arith.addf %25, %27 : vector<32x205xf32>
    %cst_12 = arith.constant 0.000000e+00 : f32
    %29 = vector.broadcast %cst_12 : f32 to vector<32x205xf32>
    %30 = arith.maximumf %28, %29 : vector<32x205xf32>
    %31 = vector.extract_strided_slice %30 {offsets = [0, 0], sizes = [32, 13], strides = [1, 1]} : vector<32x205xf32> to vector<32x13xf32>
    %32 = vector.extract_strided_slice %30 {offsets = [0, 16], sizes = [32, 13], strides = [1, 1]} : vector<32x205xf32> to vector<32x13xf32>
    %33 = vector.extract_strided_slice %30 {offsets = [0, 32], sizes = [32, 13], strides = [1, 1]} : vector<32x205xf32> to vector<32x13xf32>
    %34 = vector.extract_strided_slice %30 {offsets = [0, 48], sizes = [32, 13], strides = [1, 1]} : vector<32x205xf32> to vector<32x13xf32>
    %35 = vector.extract_strided_slice %30 {offsets = [0, 64], sizes = [32, 13], strides = [1, 1]} : vector<32x205xf32> to vector<32x13xf32>
    %36 = vector.extract_strided_slice %30 {offsets = [0, 80], sizes = [32, 13], strides = [1, 1]} : vector<32x205xf32> to vector<32x13xf32>
    %37 = vector.extract_strided_slice %30 {offsets = [0, 96], sizes = [32, 13], strides = [1, 1]} : vector<32x205xf32> to vector<32x13xf32>
    %38 = vector.extract_strided_slice %30 {offsets = [0, 112], sizes = [32, 13], strides = [1, 1]} : vector<32x205xf32> to vector<32x13xf32>
    %39 = vector.extract_strided_slice %30 {offsets = [0, 128], sizes = [32, 13], strides = [1, 1]} : vector<32x205xf32> to vector<32x13xf32>
    %40 = vector.extract_strided_slice %30 {offsets = [0, 144], sizes = [32, 13], strides = [1, 1]} : vector<32x205xf32> to vector<32x13xf32>
    %41 = vector.extract_strided_slice %30 {offsets = [0, 160], sizes = [32, 13], strides = [1, 1]} : vector<32x205xf32> to vector<32x13xf32>
    %42 = vector.extract_strided_slice %30 {offsets = [0, 176], sizes = [32, 13], strides = [1, 1]} : vector<32x205xf32> to vector<32x13xf32>
    %43 = vector.extract_strided_slice %30 {offsets = [0, 192], sizes = [32, 13], strides = [1, 1]} : vector<32x205xf32> to vector<32x13xf32>
    %cst_13 = arith.constant 0.000000e+00 : f32
    %44 = vector.broadcast %cst_13 : f32 to vector<32x7xf32>
    %45 = tpu.concatenate %31, %32, %33, %34, %35, %36, %37, %38, %39, %40, %41, %42, %43, %44 in 1 : vector<32x13xf32>, vector<32x13xf32>, vector<32x13xf32>, vector<32x13xf32>, vector<32x13xf32>, vector<32x13xf32>, vector<32x13xf32>, vector<32x13xf32>, vector<32x13xf32>, vector<32x13xf32>, vector<32x13xf32>, vector<32x13xf32>, vector<32x13xf32>, vector<32x7xf32> -> vector<32x176xf32>
    %c0_14 = arith.constant 0 : index
    %c0_15 = arith.constant 0 : index
    %c0_16 = arith.constant 0 : index
    %46 = vector.load %arg6[%c0_14, %c0_15, %c0_16] : memref<1x32x176xf32, #tpu.memory_space<vmem>>, vector<1x32x176xf32>
    %47 = vector.shape_cast %46 : vector<1x32x176xf32> to vector<32x176xf32>
    %48 = vector.shape_cast %45 : vector<32x176xf32> to vector<1x32x176xf32>
    tpu.vector_store %arg6[%c0_14, %c0_15, %c0_16], %48 {strides = array<i32>} : memref<1x32x176xf32, #tpu.memory_space<vmem>>, vector<1x32x176xf32>,
    return
  }
  func.func @transform_0(%arg0: i32) -> (i32, i32, i32) {
    %c0_i32 = arith.constant 0 : i32
    %c0_i32_0 = arith.constant 0 : i32
    %c0_i32_1 = arith.constant 0 : i32
    return %arg0, %c0_i32, %c0_i32_0 : i32, i32, i32
  }
  func.func @transform_1(%arg0: i32) -> (i32, i32) {
    %c0_i32 = arith.constant 0 : i32
    %c0_i32_0 = arith.constant 0 : i32
    %c0_i32_1 = arith.constant 0 : i32
    return %c0_i32, %c0_i32_0 : i32, i32
  }
  func.func @transform_2(%arg0: i32) -> (i32, i32) {
    %c0_i32 = arith.constant 0 : i32
    %c0_i32_0 = arith.constant 0 : i32
    %c0_i32_1 = arith.constant 0 : i32
    return %c0_i32, %c0_i32_0 : i32, i32
  }
  func.func @transform_3(%arg0: i32) -> (i32, i32) {
    %c0_i32 = arith.constant 0 : i32
    %c0_i32_0 = arith.constant 0 : i32
    %c0_i32_1 = arith.constant 0 : i32
    return %c0_i32, %c0_i32_0 : i32, i32
  }
  func.func @transform_4(%arg0: i32) -> (i32, i32) {
    %c0_i32 = arith.constant 0 : i32
    %c0_i32_0 = arith.constant 0 : i32
    %c0_i32_1 = arith.constant 0 : i32
    return %c0_i32, %c0_i32_0 : i32, i32
  }
  func.func @transform_5(%arg0: i32) -> (i32, i32, i32) {
    %c0_i32 = arith.constant 0 : i32
    %c0_i32_0 = arith.constant 0 : i32
    %c0_i32_1 = arith.constant 0 : i32
    return %arg0, %c0_i32, %c0_i32_0 : i32, i32, i32
  }
}

module attributes {stable_mosaic.version = 11 : i64} {
  func.func @head_kernel(%arg0: i32, %arg1: memref<2x2816xf32, #tpu.memory_space<vmem>>, %arg2: memref<2816x128xbf16, #tpu.memory_space<vmem>>, %arg3: memref<1x128xf32, #tpu.memory_space<vmem>>, %arg4: memref<2816x128xbf16, #tpu.memory_space<vmem>>, %arg5: memref<1x128xf32, #tpu.memory_space<vmem>>, %arg6: memref<128x1xf32, #tpu.memory_space<vmem>>, %arg7: memref<1x1xf32, #tpu.memory_space<vmem>>, %arg8: memref<128x16xf32, #tpu.memory_space<vmem>>, %arg9: memref<1x16xf32, #tpu.memory_space<vmem>>, %arg10: memref<2x16xf32, #tpu.memory_space<vmem>>, %arg11: memref<2x128xf32, #tpu.memory_space<vmem>>, %arg12: memref<2x128xf32, #tpu.memory_space<vmem>>) attributes {dimension_semantics = [#tpu.dimension_semantics<arbitrary>], iteration_bounds = array<i64: 2>, scalar_prefetch = 0 : i64, scratch_operands = 2 : i64, tpu.core_type = #tpu.core_type<tc>, window_params = [{transform_indices = @transform_0, window_bounds = array<i64: 2, 2816>}, {transform_indices = @transform_1, window_bounds = array<i64: 2816, 128>}, {pipeline_mode = #tpu.pipeline_mode<synchronous>, transform_indices = @transform_2, window_bounds = array<i64: 1, 128>}, {transform_indices = @transform_3, window_bounds = array<i64: 2816, 128>}, {pipeline_mode = #tpu.pipeline_mode<synchronous>, transform_indices = @transform_4, window_bounds = array<i64: 1, 128>}, {pipeline_mode = #tpu.pipeline_mode<synchronous>, transform_indices = @transform_5, window_bounds = array<i64: 128, 1>}, {pipeline_mode = #tpu.pipeline_mode<synchronous>, transform_indices = @transform_6, window_bounds = array<i64: 1, 1>}, {pipeline_mode = #tpu.pipeline_mode<synchronous>, transform_indices = @transform_7, window_bounds = array<i64: 128, 16>}, {pipeline_mode = #tpu.pipeline_mode<synchronous>, transform_indices = @transform_8, window_bounds = array<i64: 1, 16>}, {pipeline_mode = #tpu.pipeline_mode<synchronous>, transform_indices = @transform_9, window_bounds = array<i64: 2, 16>}]} {
    %c0_i32 = arith.constant 0 : i32
    %0 = arith.cmpi eq, %arg0, %c0_i32 : i32
    %1 = arith.extui %0 : i1 to i32
    %c0_i32_0 = arith.constant 0 : i32
    %2 = arith.cmpi ne, %1, %c0_i32_0 : i32
    scf.if %2 {
      %cst_16 = arith.constant 0.000000e+00 : f32
      %18 = vector.broadcast %cst_16 : f32 to vector<2x128xf32>
      %c0_17 = arith.constant 0 : index
      %c0_18 = arith.constant 0 : index
      %19 = vector.load %arg11[%c0_17, %c0_18] : memref<2x128xf32, #tpu.memory_space<vmem>>, vector<2x128xf32>
      tpu.vector_store %arg11[%c0_17, %c0_18], %18 {strides = array<i32>} : memref<2x128xf32, #tpu.memory_space<vmem>>, vector<2x128xf32>,
      %cst_19 = arith.constant 0.000000e+00 : f32
      %20 = vector.broadcast %cst_19 : f32 to vector<2x128xf32>
      %c0_20 = arith.constant 0 : index
      %c0_21 = arith.constant 0 : index
      %21 = vector.load %arg12[%c0_20, %c0_21] : memref<2x128xf32, #tpu.memory_space<vmem>>, vector<2x128xf32>
      tpu.vector_store %arg12[%c0_20, %c0_21], %20 {strides = array<i32>} : memref<2x128xf32, #tpu.memory_space<vmem>>, vector<2x128xf32>,
    } else {
    }
    %c0 = arith.constant 0 : index
    %c0_1 = arith.constant 0 : index
    %3 = vector.load %arg1[%c0, %c0_1] : memref<2x2816xf32, #tpu.memory_space<vmem>>, vector<2x2816xf32>
    %4 = arith.truncf %3 : vector<2x2816xf32> to vector<2x2816xbf16>
    %c0_2 = arith.constant 0 : index
    %c0_3 = arith.constant 0 : index
    %5 = vector.load %arg11[%c0_2, %c0_3] : memref<2x128xf32, #tpu.memory_space<vmem>>, vector<2x128xf32>
    %c0_4 = arith.constant 0 : index
    %c0_5 = arith.constant 0 : index
    %6 = vector.load %arg2[%c0_4, %c0_5] : memref<2816x128xbf16, #tpu.memory_space<vmem>>, vector<2816x128xbf16>
    %cst = arith.constant dense<0.000000e+00> : vector<2x128xf32>
    %7 = tpu.matmul %4, %6, %cst {dimension_numbers = #tpu.dot_dimension_numbers<[1], [0], [0], [1], [0, 0, 1, 1], [], []>} : vector<2x2816xbf16>, vector<2816x128xbf16>, vector<2x128xf32> -> vector<2x128xf32>
    %8 = arith.addf %5, %7 : vector<2x128xf32>
    %c0_6 = arith.constant 0 : index
    %c0_7 = arith.constant 0 : index
    %9 = vector.load %arg11[%c0_6, %c0_7] : memref<2x128xf32, #tpu.memory_space<vmem>>, vector<2x128xf32>
    tpu.vector_store %arg11[%c0_6, %c0_7], %8 {strides = array<i32>} : memref<2x128xf32, #tpu.memory_space<vmem>>, vector<2x128xf32>,
    %c0_8 = arith.constant 0 : index
    %c0_9 = arith.constant 0 : index
    %10 = vector.load %arg12[%c0_8, %c0_9] : memref<2x128xf32, #tpu.memory_space<vmem>>, vector<2x128xf32>
    %c0_10 = arith.constant 0 : index
    %c0_11 = arith.constant 0 : index
    %11 = vector.load %arg4[%c0_10, %c0_11] : memref<2816x128xbf16, #tpu.memory_space<vmem>>, vector<2816x128xbf16>
    %cst_12 = arith.constant dense<0.000000e+00> : vector<2x128xf32>
    %12 = tpu.matmul %4, %11, %cst_12 {dimension_numbers = #tpu.dot_dimension_numbers<[1], [0], [0], [1], [0, 0, 1, 1], [], []>} : vector<2x2816xbf16>, vector<2816x128xbf16>, vector<2x128xf32> -> vector<2x128xf32>
    %13 = arith.addf %10, %12 : vector<2x128xf32>
    %c0_13 = arith.constant 0 : index
    %c0_14 = arith.constant 0 : index
    %14 = vector.load %arg12[%c0_13, %c0_14] : memref<2x128xf32, #tpu.memory_space<vmem>>, vector<2x128xf32>
    tpu.vector_store %arg12[%c0_13, %c0_14], %13 {strides = array<i32>} : memref<2x128xf32, #tpu.memory_space<vmem>>, vector<2x128xf32>,
    %c1_i32 = arith.constant 1 : i32
    %15 = arith.cmpi eq, %arg0, %c1_i32 : i32
    %16 = arith.extui %15 : i1 to i32
    %c0_i32_15 = arith.constant 0 : i32
    %17 = arith.cmpi ne, %16, %c0_i32_15 : i32
    scf.if %17 {
      %c0_16 = arith.constant 0 : index
      %c0_17 = arith.constant 0 : index
      %18 = vector.load %arg11[%c0_16, %c0_17] : memref<2x128xf32, #tpu.memory_space<vmem>>, vector<2x128xf32>
      %c0_18 = arith.constant 0 : index
      %c0_19 = arith.constant 0 : index
      %19 = vector.load %arg3[%c0_18, %c0_19] : memref<1x128xf32, #tpu.memory_space<vmem>>, vector<1x128xf32>
      %20 = vector.broadcast %19 : vector<1x128xf32> to vector<2x128xf32>
      %21 = arith.addf %18, %20 : vector<2x128xf32>
      %cst_20 = arith.constant 0.000000e+00 : f32
      %22 = vector.broadcast %cst_20 : f32 to vector<2x128xf32>
      %23 = arith.maximumf %21, %22 : vector<2x128xf32>
      %c0_21 = arith.constant 0 : index
      %c0_22 = arith.constant 0 : index
      %24 = vector.load %arg12[%c0_21, %c0_22] : memref<2x128xf32, #tpu.memory_space<vmem>>, vector<2x128xf32>
      %c0_23 = arith.constant 0 : index
      %c0_24 = arith.constant 0 : index
      %25 = vector.load %arg5[%c0_23, %c0_24] : memref<1x128xf32, #tpu.memory_space<vmem>>, vector<1x128xf32>
      %26 = vector.broadcast %25 : vector<1x128xf32> to vector<2x128xf32>
      %27 = arith.addf %24, %26 : vector<2x128xf32>
      %cst_25 = arith.constant 0.000000e+00 : f32
      %28 = vector.broadcast %cst_25 : f32 to vector<2x128xf32>
      %29 = arith.maximumf %27, %28 : vector<2x128xf32>
      %c0_26 = arith.constant 0 : index
      %c0_27 = arith.constant 0 : index
      %30 = vector.load %arg6[%c0_26, %c0_27] : memref<128x1xf32, #tpu.memory_space<vmem>>, vector<128x1xf32>
      %cst_28 = arith.constant dense<0.000000e+00> : vector<2x1xf32>
      %31 = tpu.matmul %23, %30, %cst_28 {dimension_numbers = #tpu.dot_dimension_numbers<[1], [0], [0], [1], [0, 0, 1, 1], [], []>} : vector<2x128xf32>, vector<128x1xf32>, vector<2x1xf32> -> vector<2x1xf32>
      %c0_29 = arith.constant 0 : index
      %c0_30 = arith.constant 0 : index
      %32 = vector.load %arg7[%c0_29, %c0_30] : memref<1x1xf32, #tpu.memory_space<vmem>>, vector<1x1xf32>
      %33 = vector.broadcast %32 : vector<1x1xf32> to vector<2x1xf32>
      %34 = arith.addf %31, %33 : vector<2x1xf32>
      %c0_31 = arith.constant 0 : index
      %c0_32 = arith.constant 0 : index
      %35 = vector.load %arg8[%c0_31, %c0_32] : memref<128x16xf32, #tpu.memory_space<vmem>>, vector<128x16xf32>
      %cst_33 = arith.constant dense<0.000000e+00> : vector<2x16xf32>
      %36 = tpu.matmul %29, %35, %cst_33 {dimension_numbers = #tpu.dot_dimension_numbers<[1], [0], [0], [1], [0, 0, 1, 1], [], []>} : vector<2x128xf32>, vector<128x16xf32>, vector<2x16xf32> -> vector<2x16xf32>
      %c0_34 = arith.constant 0 : index
      %c0_35 = arith.constant 0 : index
      %37 = vector.load %arg9[%c0_34, %c0_35] : memref<1x16xf32, #tpu.memory_space<vmem>>, vector<1x16xf32>
      %38 = vector.broadcast %37 : vector<1x16xf32> to vector<2x16xf32>
      %39 = arith.addf %36, %38 : vector<2x16xf32>
      %40 = vector.broadcast %34 : vector<2x1xf32> to vector<2x16xf32>
      %41 = arith.addf %40, %39 : vector<2x16xf32>
      %cst_36 = arith.constant dense<0.000000e+00> : vector<2xf32>
      %42 = vector.multi_reduction <add>, %39, %cst_36 [1] : vector<2x16xf32> to vector<2xf32>
      %43 = vector.shape_cast %42 : vector<2xf32> to vector<2x1xf32>
      %cst_37 = arith.constant 1.600000e+01 : f32
      %44 = vector.broadcast %cst_37 : f32 to vector<2x1xf32>
      %45 = arith.divf %43, %44 : vector<2x1xf32>
      %46 = vector.broadcast %45 : vector<2x1xf32> to vector<2x16xf32>
      %47 = arith.subf %41, %46 : vector<2x16xf32>
      %c0_38 = arith.constant 0 : index
      %c0_39 = arith.constant 0 : index
      %48 = vector.load %arg10[%c0_38, %c0_39] : memref<2x16xf32, #tpu.memory_space<vmem>>, vector<2x16xf32>
      tpu.vector_store %arg10[%c0_38, %c0_39], %47 {strides = array<i32>} : memref<2x16xf32, #tpu.memory_space<vmem>>, vector<2x16xf32>,
    } else {
    }
    return
  }
  func.func @transform_0(%arg0: i32) -> (i32, i32) {
    %c0_i32 = arith.constant 0 : i32
    %c0_i32_0 = arith.constant 0 : i32
    return %c0_i32, %arg0 : i32, i32
  }
  func.func @transform_1(%arg0: i32) -> (i32, i32) {
    %c0_i32 = arith.constant 0 : i32
    %c0_i32_0 = arith.constant 0 : i32
    return %arg0, %c0_i32 : i32, i32
  }
  func.func @transform_2(%arg0: i32) -> (i32, i32) {
    %c0_i32 = arith.constant 0 : i32
    %c0_i32_0 = arith.constant 0 : i32
    %c0_i32_1 = arith.constant 0 : i32
    return %c0_i32, %c0_i32_0 : i32, i32
  }
  func.func @transform_3(%arg0: i32) -> (i32, i32) {
    %c0_i32 = arith.constant 0 : i32
    %c0_i32_0 = arith.constant 0 : i32
    return %arg0, %c0_i32 : i32, i32
  }
  func.func @transform_4(%arg0: i32) -> (i32, i32) {
    %c0_i32 = arith.constant 0 : i32
    %c0_i32_0 = arith.constant 0 : i32
    %c0_i32_1 = arith.constant 0 : i32
    return %c0_i32, %c0_i32_0 : i32, i32
  }
  func.func @transform_5(%arg0: i32) -> (i32, i32) {
    %c0_i32 = arith.constant 0 : i32
    %c0_i32_0 = arith.constant 0 : i32
    %c0_i32_1 = arith.constant 0 : i32
    return %c0_i32, %c0_i32_0 : i32, i32
  }
  func.func @transform_6(%arg0: i32) -> (i32, i32) {
    %c0_i32 = arith.constant 0 : i32
    %c0_i32_0 = arith.constant 0 : i32
    %c0_i32_1 = arith.constant 0 : i32
    return %c0_i32, %c0_i32_0 : i32, i32
  }
  func.func @transform_7(%arg0: i32) -> (i32, i32) {
    %c0_i32 = arith.constant 0 : i32
    %c0_i32_0 = arith.constant 0 : i32
    %c0_i32_1 = arith.constant 0 : i32
    return %c0_i32, %c0_i32_0 : i32, i32
  }
  func.func @transform_8(%arg0: i32) -> (i32, i32) {
    %c0_i32 = arith.constant 0 : i32
    %c0_i32_0 = arith.constant 0 : i32
    %c0_i32_1 = arith.constant 0 : i32
    return %c0_i32, %c0_i32_0 : i32, i32
  }
  func.func @transform_9(%arg0: i32) -> (i32, i32) {
    %c0_i32 = arith.constant 0 : i32
    %c0_i32_0 = arith.constant 0 : i32
    %c0_i32_1 = arith.constant 0 : i32
    return %c0_i32, %c0_i32_0 : i32, i32
  }
}

</mosaic_0001>

<llo_original>
// kernel: cnn_ddqn_forward.2
$region0: #{cnn_ddqn_forward.2}
  #allocation0 [shape = 'u32[]', space=smem, size = 0x4, offset = 0x4, fixed_abs, tag = 'smem constant byte address 0x4 - core index']
  #allocation1 [shape = 'u32[144,128]{1,0:T(1,128)}', space=vmem, size = 0x12000, scoped, tag = 'internal scratch']
  %s0 = inlined_call_operand.vmem [shape: f32[2,4,256], index: 0, kind: input, shape index: {}]
  %s1 = inlined_call_operand.hbm [shape: f32[16,36], index: 1, kind: input, shape index: {}]
  %s2 = inlined_call_operand.vmem [shape: f32[16,1], index: 2, kind: input, shape index: {}]
  %s3 = inlined_call_operand.hbm [shape: f32[32,64], index: 3, kind: input, shape index: {}]
  %s4 = inlined_call_operand.vmem [shape: f32[32,1], index: 4, kind: input, shape index: {}]
  %s5 = inlined_call_operand.vmem [shape: f32[2,32,176], index: 5, kind: output, shape index: {}]
  %s6 = sld [smem:[#allocation0]]
  $region61: #{cnn_ddqn_forward.2} parent=0
    _
  %s8 = ssub.s32 1, %s6
  %s9 = scalar_select 0, %s8, %s6
  $region1: #{cnn_ddqn_forward.2} parent=0
    #allocation2 [shape = 'u8[8192]{0}', space=vmem, size = 0x2000, scoped, tag = 'input window, operand 1, single buffered']
    #allocation3 [shape = 's32[2]{0}', space=sflag, size = 0x8, scoped, tag = 'scoped memory for cnn_ddqn_forward.2']
    #allocation4 [shape = 'u8[16384]{0}', space=vmem, size = 0x4000, scoped, tag = 'input window, operand 3, single buffered']
    #allocation5 [shape = 's32[1]{0}', space=sflag, size = 0x4, scoped, tag = 'scoped memory for cnn_ddqn_forward.2']
    %10 = vsyncpa [#allocation3], 0
    %11 = vsyncpa [#allocation5], 0
    loop: start=0, step=1, limit=4
    $region2: #{cnn_ddqn_forward.2} parent=1 // loop_pre_header
      _
    $region3: #{cnn_ddqn_forward.2} parent=1 // loop_header
      %s13 = sphi 0, %s17
      %p14 = scmp.ge.s32.totalorder %s13, 4
      %s23 = sphi 0, %s25
      %s26 = sphi 0, %s23
      %s27 = sphi 0, %s26
      %s43 = sphi 0, %s27
      %s47 = sphi 0, %s47
      %s49 = sphi 0, %s47
      %s50 = sphi 0, %s49
      %s64 = sphi 0, %s50
      %s68 = sphi 0, %s68
      %s70 = sphi 0, %s68
      %s71 = sphi 0, %s70
      %s85 = sphi 0, %s71
      %s89 = sphi 0, %s89
      %s91 = sphi 0, %s89
      %s92 = sphi 0, %s91
      %s106 = sphi 0, %s92
      %s110 = sphi 0, %s110
      %s112 = sphi 0, %s110
      %s113 = sphi 0, %s112
      %s127 = sphi 0, %s113
      %s133 = sphi 0, %s135
      %s136 = sphi 0, %s133
      %s137 = sphi 0, %s136
      %s153 = sphi 0, %s137
    $region4: #{cnn_ddqn_forward.2} parent=1 // loop_header_branch
      %16 = sbr.rel (%p14) target = $region8
    $region5: #{cnn_ddqn_forward.2} parent=1 // loop_body
      %s18 = ssub.s32 %s13, 1
      %s19 = ssub.s32 %s13, 2
      %s20 = sadd.s32 %s13, 1
      %s21 = ssub.s32 %s13, %s20
      %p22 = scmp.eq.s32.totalorder %s21, 0
      %s24 = sadd.s32 %s23, 1
      %s25 = scalar_select %p22, %s23, %s24
      %p28 = pneg %p22
      %p29 = scmp.eq.s32.totalorder %s13, 1
      %p30 = por %p28, %p29
      %p31 = scmp.ne.s32.totalorder %s23, %s26
      %p32 = scmp.eq.s32.totalorder %s13, 0
      %p33 = por %p31, %p32
      %p34 = scmp.ne.s32.totalorder %s23, %s26
      %p35 = scmp.eq.s32.totalorder %s18, 1
      %p36 = por %p34, %p35
      %p37 = scmp.ne.s32.totalorder %s26, %s27
      %p38 = scmp.eq.s32.totalorder %s18, 0
      %p39 = por %p37, %p38
      %p40 = scmp.ne.s32.totalorder %s26, %s27
      %p41 = scmp.eq.s32.totalorder %s19, 1
      %p42 = por %p40, %p41
      %p44 = scmp.ne.s32.totalorder %s27, %s43
      %p45 = scmp.eq.s32.totalorder %s19, 0
      %p46 = por %p44, %p45
      %s48 = sadd.s32 %s47, 1
      %p51 = scmp.eq.s32.totalorder %s13, 1
      %p52 = scmp.ne.s32.totalorder %s47, %s49
      %p53 = scmp.eq.s32.totalorder %s13, 0
      %p54 = por %p52, %p53
      %p55 = scmp.ne.s32.totalorder %s47, %s49
      %p56 = scmp.eq.s32.totalorder %s18, 1
      %p57 = por %p55, %p56
      %p58 = scmp.ne.s32.totalorder %s49, %s50
      %p59 = scmp.eq.s32.totalorder %s18, 0
      %p60 = por %p58, %p59
      %p61 = scmp.ne.s32.totalorder %s49, %s50
      %p62 = scmp.eq.s32.totalorder %s19, 1
      %p63 = por %p61, %p62
      %p65 = scmp.ne.s32.totalorder %s50, %s64
      %p66 = scmp.eq.s32.totalorder %s19, 0
      %p67 = por %p65, %p66
      %s69 = sadd.s32 %s68, 1
      %p72 = scmp.eq.s32.totalorder %s13, 1
      %p73 = scmp.ne.s32.totalorder %s68, %s70
      %p74 = scmp.eq.s32.totalorder %s13, 0
      %p75 = por %p73, %p74
      %p76 = scmp.ne.s32.totalorder %s68, %s70
      %p77 = scmp.eq.s32.totalorder %s18, 1
      %p78 = por %p76, %p77
      %p79 = scmp.ne.s32.totalorder %s70, %s71
      %p80 = scmp.eq.s32.totalorder %s18, 0
      %p81 = por %p79, %p80
      %p82 = scmp.ne.s32.totalorder %s70, %s71
      %p83 = scmp.eq.s32.totalorder %s19, 1
      %p84 = por %p82, %p83
      %p86 = scmp.ne.s32.totalorder %s71, %s85
      %p87 = scmp.eq.s32.totalorder %s19, 0
      %p88 = por %p86, %p87
      %s90 = sadd.s32 %s89, 1
      %p93 = scmp.eq.s32.totalorder %s13, 1
      %p94 = scmp.ne.s32.totalorder %s89, %s91
      %p95 = scmp.eq.s32.totalorder %s13, 0
      %p96 = por %p94, %p95
      %p97 = scmp.ne.s32.totalorder %s89, %s91
      %p98 = scmp.eq.s32.totalorder %s18, 1
      %p99 = por %p97, %p98
      %p100 = scmp.ne.s32.totalorder %s91, %s92
      %p101 = scmp.eq.s32.totalorder %s18, 0
      %p102 = por %p100, %p101
      %p103 = scmp.ne.s32.totalorder %s91, %s92
      %p104 = scmp.eq.s32.totalorder %s19, 1
      %p105 = por %p103, %p104
      %p107 = scmp.ne.s32.totalorder %s92, %s106
      %p108 = scmp.eq.s32.totalorder %s19, 0
      %p109 = por %p107, %p108
      %s111 = sadd.s32 %s110, 1
      %p114 = scmp.eq.s32.totalorder %s13, 1
      %p115 = scmp.ne.s32.totalorder %s110, %s112
      %p116 = scmp.eq.s32.totalorder %s13, 0
      %p117 = por %p115, %p116
      %p118 = scmp.ne.s32.totalorder %s110, %s112
      %p119 = scmp.eq.s32.totalorder %s18, 1
      %p120 = por %p118, %p119
      %p121 = scmp.ne.s32.totalorder %s112, %s113
      %p122 = scmp.eq.s32.totalorder %s18, 0
      %p123 = por %p121, %p122
      %p124 = scmp.ne.s32.totalorder %s112, %s113
      %p125 = scmp.eq.s32.totalorder %s19, 1
      %p126 = por %p124, %p125
      %p128 = scmp.ne.s32.totalorder %s113, %s127
      %p129 = scmp.eq.s32.totalorder %s19, 0
      %p130 = por %p128, %p129
      %s131 = ssub.s32 %s13, %s20
      %p132 = scmp.eq.s32.totalorder %s131, 0
      %s134 = sadd.s32 %s133, 1
      %s135 = scalar_select %p132, %s133, %s134
      %p138 = pneg %p132
      %p139 = scmp.eq.s32.totalorder %s13, 1
      %p140 = por %p138, %p139
      %p141 = scmp.ne.s32.totalorder %s133, %s136
      %p142 = scmp.eq.s32.totalorder %s13, 0
      %p143 = por %p141, %p142
      %p144 = scmp.ne.s32.totalorder %s133, %s136
      %p145 = scmp.eq.s32.totalorder %s18, 1
      %p146 = por %p144, %p145
      %p147 = scmp.ne.s32.totalorder %s136, %s137
      %p148 = scmp.eq.s32.totalorder %s18, 0
      %p149 = por %p147, %p148
      %p150 = scmp.ne.s32.totalorder %s136, %s137
      %p151 = scmp.eq.s32.totalorder %s19, 1
      %p152 = por %p150, %p151
      %p154 = scmp.ne.s32.totalorder %s137, %s153
      %p155 = scmp.eq.s32.totalorder %s19, 0
      %p156 = por %p154, %p155
      %p157 = scmp.le.s32.totalorder 1, %s13
      %p158 = scmp.lt.s32.totalorder %s13, 3
      %p159 = pnand %p157, %p158
      %p160 = pneg %p159
      // Predicated region
      $region9: #{cnn_ddqn_forward.2} parent=5 // pred_check
        _
      $region10: #{cnn_ddqn_forward.2} parent=5 // pred_check_branch
        %162 = sbr.rel (%p159) target = $region12
      $region11: #{cnn_ddqn_forward.2} parent=5 // pred_region
        %s163 = ssub.s32 %s13, 1
        // Predicated region
        $region13: #{cnn_ddqn_forward.2} parent=11 // pred_check
          %p164 = pneg %p60
        $region14: #{cnn_ddqn_forward.2} parent=11 // pred_check_branch
          %166 = sbr.rel (%p164) target = $region16
        $region15: #{cnn_ddqn_forward.2} parent=11 // pred_region
          %s168 = ssub.s32 256, 256
          %169 = vsyncadd [#allocation3], %s168
          %s170 = sshll.u32 [#allocation2], 4
          %s171 = int_to_ptr.vmem [resolvable:$true] %s170
          %176 = dma.hbm_to_vmem [thread:$0]  %s1, 256, %s171, [#allocation3], 128, 128, 8
        $region16: #{cnn_ddqn_forward.2} parent=11 // pred_fallthru
          _
        // Predicated region
        $region17: #{cnn_ddqn_forward.2} parent=11 // pred_check
          %p177 = pneg %p81
        $region18: #{cnn_ddqn_forward.2} parent=11 // pred_check_branch
          %179 = sbr.rel (%p177) target = $region20
        $region19: #{cnn_ddqn_forward.2} parent=11 // pred_region
          _
        $region20: #{cnn_ddqn_forward.2} parent=11 // pred_fallthru
          _
        // Predicated region
        $region21: #{cnn_ddqn_forward.2} parent=11 // pred_check
          %p180 = pneg %p102
        $region22: #{cnn_ddqn_forward.2} parent=11 // pred_check_branch
          %182 = sbr.rel (%p180) target = $region24
        $region23: #{cnn_ddqn_forward.2} parent=11 // pred_region
          %s184 = ssub.s32 512, 512
          %185 = vsyncadd [#allocation5], %s184
          %s186 = sshll.u32 [#allocation4], 4
          %s187 = int_to_ptr.vmem [resolvable:$true] %s186
          %192 = dma.hbm_to_vmem [thread:$0]  %s3, 512, %s187, [#allocation5], 128, 128, 8
        $region24: #{cnn_ddqn_forward.2} parent=11 // pred_fallthru
          _
        // Predicated region
        $region25: #{cnn_ddqn_forward.2} parent=11 // pred_check
          %p193 = pneg %p123
        $region26: #{cnn_ddqn_forward.2} parent=11 // pred_check_branch
          %195 = sbr.rel (%p193) target = $region28
        $region27: #{cnn_ddqn_forward.2} parent=11 // pred_region
          _
        $region28: #{cnn_ddqn_forward.2} parent=11 // pred_fallthru
          _
      $region12: #{cnn_ddqn_forward.2} parent=5 // pred_fallthru
        _
      %p196 = scmp.lt.s32.totalorder %s13, 2
      // Predicated region
      $region29: #{cnn_ddqn_forward.2} parent=5 // pred_check
        %p197 = pneg %p196
      $region30: #{cnn_ddqn_forward.2} parent=5 // pred_check_branch
        %199 = sbr.rel (%p197) target = $region32
      $region31: #{cnn_ddqn_forward.2} parent=5 // pred_region
        // Predicated region
        $region33: #{cnn_ddqn_forward.2} parent=31 // pred_check
          %p200 = pneg %p33
        $region34: #{cnn_ddqn_forward.2} parent=31 // pred_check_branch
          %202 = sbr.rel (%p200) target = $region36
        $region35: #{cnn_ddqn_forward.2} parent=31 // pred_region
          %p203 = scmp.lt.s32.totalorder %s13, 1
          %s204 = scalar_select %p203, %s13, 1
          %s205 = smul.addr %s204, 2
          %s206 = smul.addr %s205, 4
          %s207 = scalar_lea.vmem %s0, %s206
        $region36: #{cnn_ddqn_forward.2} parent=31 // pred_fallthru
          _
      $region32: #{cnn_ddqn_forward.2} parent=5 // pred_fallthru
        _
      %p208 = scmp.le.s32.totalorder 1, %s13
      %p209 = scmp.lt.s32.totalorder %s13, 3
      %p210 = pnand %p208, %p209
      %p211 = pneg %p210
      // Predicated region
      $region37: #{cnn_ddqn_forward.2} parent=5 // pred_check
        _
      $region38: #{cnn_ddqn_forward.2} parent=5 // pred_check_branch
        %213 = sbr.rel (%p210) target = $region40
      $region39: #{cnn_ddqn_forward.2} parent=5 // pred_region
        %s214 = ssub.s32 %s13, 1
        // Predicated region
        $region41: #{cnn_ddqn_forward.2} parent=39 // pred_check
          %p215 = pneg %p60
        $region42: #{cnn_ddqn_forward.2} parent=39 // pred_check_branch
          %217 = sbr.rel (%p215) target = $region44
        $region43: #{cnn_ddqn_forward.2} parent=39 // pred_region
          %218 = dma.done [#allocation3], 256
        $region44: #{cnn_ddqn_forward.2} parent=39 // pred_fallthru
          _
        // Predicated region
        $region45: #{cnn_ddqn_forward.2} parent=39 // pred_check
          %p219 = pneg %p102
        $region46: #{cnn_ddqn_forward.2} parent=39 // pred_check_branch
          %221 = sbr.rel (%p219) target = $region48
        $region47: #{cnn_ddqn_forward.2} parent=39 // pred_region
          %222 = dma.done [#allocation5], 512
        $region48: #{cnn_ddqn_forward.2} parent=39 // pred_fallthru
          _
        %p223 = scmp.lt.s32.totalorder %s18, 1
        %s224 = scalar_select %p223, %s18, 1
        %s225 = smul.addr %s224, 2
        %s226 = smul.addr %s225, 4
        %s227 = scalar_lea.vmem %s0, %s226
        %p228 = pneg %p39
        %p229 = pneg %p36
        %p230 = pneg %p60
        %p231 = pneg %p57
        %p232 = pneg %p81
        %p233 = pneg %p78
        %p234 = pneg %p102
        %p235 = pneg %p99
        %p236 = pneg %p123
        %p237 = pneg %p120
        %p238 = pneg %p149
        %p239 = pneg %p146
        %p240 = scmp.lt.s32.totalorder %s18, 1
        %s241 = scalar_select %p240, %s18, 1
        %s242 = smul.addr %s241, 8
        %s243 = smul.addr %s242, 8
        %s244 = scalar_lea.vmem %s5, %s243
        %p245 = scmp.lt.s32.totalorder %s18, 1
        %s246 = scalar_select %p245, %s18, 1
        %s247 = smul.addr %s246, 2
        %s248 = smul.addr %s247, 4
        %s249 = scalar_lea.vmem %s0, %s248
        %p250 = scmp.lt.s32.totalorder %s18, 1
        %s251 = scalar_select %p250, %s18, 1
        %s252 = smul.addr %s251, 8
        %s253 = smul.addr %s252, 8
        %s254 = scalar_lea.vmem %s5, %s253
        %v255 = vld [vmem:[%s249] sm:$0xff]
        %v257 = vcombine.high %v255, %v255
        %v259 = vcombine.low %v255, %v255
        %260 = vrot.lane.b32.xlu0 %v259, 127
        %v261 = vpop.permute.xlu0 %260
        %262 = vrot.lane.b32.xlu0 %v255, 127
        %v263 = vpop.permute.xlu0 %262
        %vm264 = vcmask 1039360
        %v265 = vsel %vm264, %v261, %v263
        %268 = vrot.lane.b32.xlu0 %v255, 126
        %v269 = vpop.permute.xlu0 %268
        %270 = vrot.lane.b32.xlu0 %v257, 126
        %v271 = vpop.permute.xlu0 %270
        %vm272 = vcmask 1031168
        %v273 = vsel %vm272, %v269, %v271
        %276 = vrot.lane.b32.xlu0 %v259, 112
        %v277 = vpop.permute.xlu0 %276
        %278 = vrot.lane.b32.xlu0 %v255, 112
        %v279 = vpop.permute.xlu0 %278
        %vm280 = vcmask 916480
        %v281 = vsel %vm280, %v277, %v279
        %284 = vrot.lane.b32.xlu0 %v255, 111
        %v285 = vpop.permute.xlu0 %284
        %286 = vrot.lane.b32.xlu0 %v257, 111
        %v287 = vpop.permute.xlu0 %286
        %vm288 = vcmask 908288
        %v289 = vsel %vm288, %v285, %v287
        %292 = vrot.lane.b32.xlu0 %v259, 110
        %v293 = vpop.permute.xlu0 %292
        %294 = vrot.lane.b32.xlu0 %v255, 110
        %v295 = vpop.permute.xlu0 %294
        %vm296 = vcmask 900096
        %v297 = vsel %vm296, %v293, %v295
        %300 = vrot.lane.b32.xlu0 %v255, 96
        %v301 = vpop.permute.xlu0 %300
        %302 = vrot.lane.b32.xlu0 %v257, 96
        %v303 = vpop.permute.xlu0 %302
        %vm304 = vcmask 785408
        %v305 = vsel %vm304, %v301, %v303
        %308 = vrot.lane.b32.xlu0 %v259, 95
        %v309 = vpop.permute.xlu0 %308
        %310 = vrot.lane.b32.xlu0 %v255, 95
        %v311 = vpop.permute.xlu0 %310
        %vm312 = vcmask 777216
        %v313 = vsel %vm312, %v309, %v311
        %316 = vrot.lane.b32.xlu0 %v255, 94
        %v317 = vpop.permute.xlu0 %316
        %318 = vrot.lane.b32.xlu0 %v257, 94
        %v319 = vpop.permute.xlu0 %318
        %vm320 = vcmask 769024
        %v321 = vsel %vm320, %v317, %v319
        %vm322 = vcmask 1043456
        %v323 = vsel %vm322, %v255, %v265
        %v324 = vsel %vm322, %v257, %v263
        %v325 = vsel %vm322, %v273, %v281
        %v326 = vsel %vm322, %v271, %v279
        %v327 = vsel %vm322, %v289, %v297
        %v328 = vsel %vm322, %v287, %v295
        %v329 = vsel %vm322, %v305, %v313
        %v330 = vsel %vm322, %v303, %v311
        %v331 = vld [vmem:[#allocation2] sm:$0xff]
        %v332 = vld [vmem:[#allocation2 + $0x8] sm:$0xff]
        %v333 = vld [vmem:[%s2] sm:$0xff]
        %v334 = vld [vmem:[%s2 + $0x8] sm:$0xff]
        %336 = vset.pattern.permute.xlu0 0
        %337 = vperm.xlu0 %336, %v333
        %v338 = vpop.permute.xlu0 %337
        %341 = vset.pattern.permute.xlu0 0
        %342 = vperm.xlu0 %341, %v334
        %v343 = vpop.permute.xlu0 %342
        %vm345 = vcmask 293888
        %v347 = vsel %vm345, %v331, 0
        %v350 = vsel %vm345, %v332, 0
        %v352 = vsel %vm322, %v321, 0
        %v354 = vsel %vm322, %v319, 0
        %356 = vmatprep.subr.mxu0 0.0
        %357 = vmatpush1.msra.mxu0 0.0
        %358 = vmatprep.subr.mxu0 0.0
        %359 = vmatpush1.msra.mxu0 0.0
        %360 = vmatprep.subr.mxu0 0.0
        %361 = vmatpush1.msra.mxu0 0.0
        %362 = vmatprep.subr.mxu0 0.0
        %363 = vmatpush1.msra.mxu0 0.0
        %364 = vmatprep.subr.mxu0 0.0
        %365 = vmatpush1.msra.mxu0 0.0
        %366 = vmatprep.subr.mxu0 0.0
        %367 = vmatpush1.msra.mxu0 0.0
        %368 = vmatprep.subr.mxu0 0.0
        %369 = vmatpush1.msra.mxu0 0.0
        %370 = vmatprep.subr.mxu0 0.0
        %371 = vmatpush1.msra.mxu0 0.0
        %372 = vmatprep.subr.mxu0 0.0
        %373 = vmatpush1.msra.mxu0 0.0
        %374 = vmatprep.subr.mxu0 0.0
        %375 = vmatpush1.msra.mxu0 0.0
        %376 = vmatprep.subr.mxu0 0.0
        %377 = vmatpush1.msra.mxu0 0.0
        %378 = vmatprep.subr.mxu0 %v354
        %379 = vmatpush1.msra.mxu0 %v352
        %380 = vmatprep.subr.mxu0 %v330
        %381 = vmatpush1.msra.mxu0 %v329
        %382 = vmatprep.subr.mxu0 %v328
        %383 = vmatpush1.msra.mxu0 %v327
        %384 = vmatprep.subr.mxu0 %v326
        %385 = vmatpush1.msra.mxu0 %v325
        %386 = vmatprep.subr.mxu0 %v324
        %387 = vmatpush1.msra.mxu0 %v323
        %388 = vmatprep.subr.mxu0 0.0
        %389 = vmatpush2.msra.mxu0 0.0
        %390 = vmatprep.subr.mxu0 0.0
        %391 = vmatpush2.msra.mxu0 0.0
        %392 = vmatprep.subr.mxu0 0.0
        %393 = vmatpush2.msra.mxu0 0.0
        %394 = vmatprep.subr.mxu0 0.0
        %395 = vmatpush2.msra.mxu0 0.0
        %396 = vmatprep.subr.mxu0 0.0
        %397 = vmatpush2.msra.mxu0 0.0
        %398 = vmatprep.subr.mxu0 0.0
        %399 = vmatpush2.msra.mxu0 0.0
        %400 = vmatprep.subr.mxu0 0.0
        %401 = vmatpush2.msra.mxu0 0.0
        %402 = vmatprep.subr.mxu0 0.0
        %403 = vmatpush2.msra.mxu0 0.0
        %404 = vmatprep.subr.mxu0 0.0
        %405 = vmatpush2.msra.mxu0 0.0
        %406 = vmatprep.subr.mxu0 0.0
        %407 = vmatpush2.msra.mxu0 0.0
        %408 = vmatprep.subr.mxu0 0.0
        %409 = vmatpush2.msra.mxu0 0.0
        %410 = vmatprep.subr.mxu0 0.0
        %411 = vmatpush2.msra.mxu0 0.0
        %412 = vmatprep.subr.mxu0 0.0
        %413 = vmatpush2.msra.mxu0 0.0
        %414 = vmatprep.subr.mxu0 0.0
        %415 = vmatpush2.msra.mxu0 0.0
        %416 = vmatprep.subr.mxu0 0.0
        %417 = vmatpush2.msra.mxu0 0.0
        %418 = vmatprep.subr.mxu0 0.0
        %419 = vmatpush2.msra.mxu0 0.0
        %420 = vmatprep.mubr.f32.mxu0 0.0
        %421 = vmatmul.mubr.f32.gmra.mxu0 %v347
        %v422 = vpop.f32.mrf.mxu0
        %v423 = vadd.f32 %v338, %v422
        %v424 = vpop.f32.mrf.mxu0
        %v425 = vadd.f32 %v338, %v424
        %426 = vmatprep.mubr.f32.mxu0 0.0
        %427 = vmatmul.mubr.f32.gmra.mxu0 %v350
        %v428 = vpop.f32.mrf.mxu0
        %v429 = vadd.f32 %v343, %v428
        %v430 = vpop.f32.mrf.mxu0
        %v431 = vadd.f32 %v343, %v430
        %432 = vdwg.mxu0
        %v433 = vmax.f32 %v423, 0.0
        %v434 = vmax.f32 %v425, 0.0
        %v435 = vmax.f32 %v429, 0.0
        %v436 = vmax.f32 %v431, 0.0
        %441 = vrot.lane.b32.xlu0 %v433, 127
        %v442 = vpop.permute.xlu0 %441
        %443 = vrot.lane.b32.xlu0 %v434, 127
        %v444 = vpop.permute.xlu0 %443
        %445 = vrot.lane.b32.xlu0 %v435, 127
        %v446 = vpop.permute.xlu0 %445
        %447 = vrot.lane.b32.xlu0 %v436, 127
        %v448 = vpop.permute.xlu0 %447
        %v449 = vsel %vm264, %v442, %v444
        %v450 = vsel %vm264, %v446, %v448
        %455 = vrot.lane.b32.xlu0 %v433, 112
        %v456 = vpop.permute.xlu0 %455
        %457 = vrot.lane.b32.xlu0 %v434, 112
        %v458 = vpop.permute.xlu0 %457
        %459 = vrot.lane.b32.xlu0 %v435, 112
        %v460 = vpop.permute.xlu0 %459
        %461 = vrot.lane.b32.xlu0 %v436, 112
        %v462 = vpop.permute.xlu0 %461
        %v463 = vsel %vm280, %v456, %v458
        %v464 = vsel %vm280, %v460, %v462
        %469 = vrot.lane.b32.xlu0 %v433, 111
        %v470 = vpop.permute.xlu0 %469
        %471 = vrot.lane.b32.xlu0 %v434, 111
        %v472 = vpop.permute.xlu0 %471
        %473 = vrot.lane.b32.xlu0 %v435, 111
        %v474 = vpop.permute.xlu0 %473
        %475 = vrot.lane.b32.xlu0 %v436, 111
        %v476 = vpop.permute.xlu0 %475
        %v477 = vsel %vm288, %v470, %v472
        %v478 = vsel %vm288, %v474, %v476
        %v483 = vld [vmem:[#allocation4] sm:$0xff]
        %v484 = vld [vmem:[#allocation4 + $0x8] sm:$0xff]
        %v485 = vld [vmem:[#allocation4 + $0x10] sm:$0xff]
        %v486 = vld [vmem:[#allocation4 + $0x18] sm:$0xff]
        %v487 = vld [vmem:[%s4] sm:$0xff]
        %v488 = vld [vmem:[%s4 + $0x8] sm:$0xff]
        %v489 = vld [vmem:[%s4 + $0x10] sm:$0xff]
        %v490 = vld [vmem:[%s4 + $0x18] sm:$0xff]
        %492 = vset.pattern.permute.xlu0 0
        %493 = vperm.xlu0 %492, %v487
        %v494 = vpop.permute.xlu0 %493
        %497 = vset.pattern.permute.xlu0 0
        %498 = vperm.xlu0 %497, %v488
        %v499 = vpop.permute.xlu0 %498
        %502 = vset.pattern.permute.xlu0 0
        %503 = vperm.xlu0 %502, %v489
        %v504 = vpop.permute.xlu0 %503
        %507 = vset.pattern.permute.xlu0 0
        %508 = vperm.xlu0 %507, %v490
        %v509 = vpop.permute.xlu0 %508
        %vm511 = vcmask 523264
        %v513 = vsel %vm511, %v483, 0
        %v516 = vsel %vm511, %v484, 0
        %v519 = vsel %vm511, %v485, 0
        %v522 = vsel %vm511, %v486, 0
        %524 = vmatprep.subr.mxu0 0.0
        %525 = vmatpush1.msra.mxu0 0.0
        %526 = vmatprep.subr.mxu0 0.0
        %527 = vmatpush1.msra.mxu0 0.0
        %528 = vmatprep.subr.mxu0 0.0
        %529 = vmatpush1.msra.mxu0 0.0
        %530 = vmatprep.subr.mxu0 0.0
        %531 = vmatpush1.msra.mxu0 0.0
        %532 = vmatprep.subr.mxu0 0.0
        %533 = vmatpush1.msra.mxu0 0.0
        %534 = vmatprep.subr.mxu0 0.0
        %535 = vmatpush1.msra.mxu0 0.0
        %536 = vmatprep.subr.mxu0 0.0
        %537 = vmatpush1.msra.mxu0 0.0
        %538 = vmatprep.subr.mxu0 0.0
        %539 = vmatpush1.msra.mxu0 0.0
        %540 = vmatprep.subr.mxu0 %v476
        %541 = vmatpush1.msra.mxu0 %v478
        %542 = vmatprep.subr.mxu0 %v472
        %543 = vmatpush1.msra.mxu0 %v477
        %544 = vmatprep.subr.mxu0 %v462
        %545 = vmatpush1.msra.mxu0 %v464
        %546 = vmatprep.subr.mxu0 %v458
        %547 = vmatpush1.msra.mxu0 %v463
        %548 = vmatprep.subr.mxu0 %v448
        %549 = vmatpush1.msra.mxu0 %v450
        %550 = vmatprep.subr.mxu0 %v444
        %551 = vmatpush1.msra.mxu0 %v449
        %552 = vmatprep.subr.mxu0 %v436
        %553 = vmatpush1.msra.mxu0 %v435
        %554 = vmatprep.subr.mxu0 %v434
        %555 = vmatpush1.msra.mxu0 %v433
        %556 = vmatprep.subr.mxu0 0.0
        %557 = vmatpush2.msra.mxu0 0.0
        %558 = vmatprep.subr.mxu0 0.0
        %559 = vmatpush2.msra.mxu0 0.0
        %560 = vmatprep.subr.mxu0 0.0
        %561 = vmatpush2.msra.mxu0 0.0
        %562 = vmatprep.subr.mxu0 0.0
        %563 = vmatpush2.msra.mxu0 0.0
        %564 = vmatprep.subr.mxu0 0.0
        %565 = vmatpush2.msra.mxu0 0.0
        %566 = vmatprep.subr.mxu0 0.0
        %567 = vmatpush2.msra.mxu0 0.0
        %568 = vmatprep.subr.mxu0 0.0
        %569 = vmatpush2.msra.mxu0 0.0
        %570 = vmatprep.subr.mxu0 0.0
        %571 = vmatpush2.msra.mxu0 0.0
        %572 = vmatprep.subr.mxu0 0.0
        %573 = vmatpush2.msra.mxu0 0.0
        %574 = vmatprep.subr.mxu0 0.0
        %575 = vmatpush2.msra.mxu0 0.0
        %576 = vmatprep.subr.mxu0 0.0
        %577 = vmatpush2.msra.mxu0 0.0
        %578 = vmatprep.subr.mxu0 0.0
        %579 = vmatpush2.msra.mxu0 0.0
        %580 = vmatprep.subr.mxu0 0.0
        %581 = vmatpush2.msra.mxu0 0.0
        %582 = vmatprep.subr.mxu0 0.0
        %583 = vmatpush2.msra.mxu0 0.0
        %584 = vmatprep.subr.mxu0 0.0
        %585 = vmatpush2.msra.mxu0 0.0
        %586 = vmatprep.subr.mxu0 0.0
        %587 = vmatpush2.msra.mxu0 0.0
        %588 = vmatprep.mubr.f32.mxu0 0.0
        %589 = vmatmul.mubr.f32.gmra.mxu0 %v513
        %v590 = vpop.f32.mrf.mxu0
        %v591 = vadd.f32 %v494, %v590
        %v592 = vpop.f32.mrf.mxu0
        %v593 = vadd.f32 %v494, %v592
        %594 = vmatprep.mubr.f32.mxu0 0.0
        %595 = vmatmul.mubr.f32.gmra.mxu0 %v516
        %v596 = vpop.f32.mrf.mxu0
        %v597 = vadd.f32 %v499, %v596
        %v598 = vpop.f32.mrf.mxu0
        %v599 = vadd.f32 %v499, %v598
        %600 = vmatprep.mubr.f32.mxu0 0.0
        %601 = vmatmul.mubr.f32.gmra.mxu0 %v519
        %v602 = vpop.f32.mrf.mxu0
        %v603 = vadd.f32 %v504, %v602
        %v604 = vpop.f32.mrf.mxu0
        %v605 = vadd.f32 %v504, %v604
        %606 = vmatprep.mubr.f32.mxu0 0.0
        %607 = vmatmul.mubr.f32.gmra.mxu0 %v522
        %v608 = vpop.f32.mrf.mxu0
        %v609 = vadd.f32 %v509, %v608
        %v610 = vpop.f32.mrf.mxu0
        %v611 = vadd.f32 %v509, %v610
        %612 = vdwg.mxu0
        %v613 = vmax.f32 %v591, 0.0
        %v614 = vmax.f32 %v593, 0.0
        %v615 = vmax.f32 %v597, 0.0
        %v616 = vmax.f32 %v599, 0.0
        %v617 = vmax.f32 %v603, 0.0
        %v618 = vmax.f32 %v605, 0.0
        %v619 = vmax.f32 %v609, 0.0
        %v620 = vmax.f32 %v611, 0.0
        %625 = vrot.lane.b32.xlu0 %v613, 125
        %v626 = vpop.permute.xlu0 %625
        %627 = vrot.lane.b32.xlu0 %v615, 125
        %v628 = vpop.permute.xlu0 %627
        %629 = vrot.lane.b32.xlu0 %v617, 125
        %v630 = vpop.permute.xlu0 %629
        %631 = vrot.lane.b32.xlu0 %v619, 125
        %v632 = vpop.permute.xlu0 %631
        %637 = vrot.lane.b32.xlu0 %v613, 122
        %v638 = vpop.permute.xlu0 %637
        %639 = vrot.lane.b32.xlu0 %v615, 122
        %v640 = vpop.permute.xlu0 %639
        %641 = vrot.lane.b32.xlu0 %v617, 122
        %v642 = vpop.permute.xlu0 %641
        %643 = vrot.lane.b32.xlu0 %v619, 122
        %v644 = vpop.permute.xlu0 %643
        %649 = vrot.lane.b32.xlu0 %v613, 119
        %v650 = vpop.permute.xlu0 %649
        %651 = vrot.lane.b32.xlu0 %v615, 119
        %v652 = vpop.permute.xlu0 %651
        %653 = vrot.lane.b32.xlu0 %v617, 119
        %v654 = vpop.permute.xlu0 %653
        %655 = vrot.lane.b32.xlu0 %v619, 119
        %v656 = vpop.permute.xlu0 %655
        %661 = vrot.lane.b32.xlu0 %v613, 116
        %v662 = vpop.permute.xlu0 %661
        %663 = vrot.lane.b32.xlu0 %v615, 116
        %v664 = vpop.permute.xlu0 %663
        %665 = vrot.lane.b32.xlu0 %v617, 116
        %v666 = vpop.permute.xlu0 %665
        %667 = vrot.lane.b32.xlu0 %v619, 116
        %v668 = vpop.permute.xlu0 %667
        %673 = vrot.lane.b32.xlu0 %v613, 113
        %v674 = vpop.permute.xlu0 %673
        %675 = vrot.lane.b32.xlu0 %v615, 113
        %v676 = vpop.permute.xlu0 %675
        %677 = vrot.lane.b32.xlu0 %v617, 113
        %v678 = vpop.permute.xlu0 %677
        %679 = vrot.lane.b32.xlu0 %v619, 113
        %v680 = vpop.permute.xlu0 %679
        %685 = vrot.lane.b32.xlu0 %v613, 110
        %v686 = vpop.permute.xlu0 %685
        %687 = vrot.lane.b32.xlu0 %v615, 110
        %v688 = vpop.permute.xlu0 %687
        %689 = vrot.lane.b32.xlu0 %v617, 110
        %v690 = vpop.permute.xlu0 %689
        %691 = vrot.lane.b32.xlu0 %v619, 110
        %v692 = vpop.permute.xlu0 %691
        %697 = vrot.lane.b32.xlu0 %v613, 107
        %v698 = vpop.permute.xlu0 %697
        %699 = vrot.lane.b32.xlu0 %v615, 107
        %v700 = vpop.permute.xlu0 %699
        %701 = vrot.lane.b32.xlu0 %v617, 107
        %v702 = vpop.permute.xlu0 %701
        %703 = vrot.lane.b32.xlu0 %v619, 107
        %v704 = vpop.permute.xlu0 %703
        %713 = vrot.lane.b32.xlu0 %v614, 104
        %v714 = vpop.permute.xlu0 %713
        %715 = vrot.lane.b32.xlu0 %v616, 104
        %v716 = vpop.permute.xlu0 %715
        %717 = vrot.lane.b32.xlu0 %v618, 104
        %v718 = vpop.permute.xlu0 %717
        %719 = vrot.lane.b32.xlu0 %v620, 104
        %v720 = vpop.permute.xlu0 %719
        %725 = vrot.lane.b32.xlu0 %v614, 101
        %v726 = vpop.permute.xlu0 %725
        %727 = vrot.lane.b32.xlu0 %v616, 101
        %v728 = vpop.permute.xlu0 %727
        %729 = vrot.lane.b32.xlu0 %v618, 101
        %v730 = vpop.permute.xlu0 %729
        %731 = vrot.lane.b32.xlu0 %v620, 101
        %v732 = vpop.permute.xlu0 %731
        %737 = vrot.lane.b32.xlu0 %v614, 98
        %v738 = vpop.permute.xlu0 %737
        %739 = vrot.lane.b32.xlu0 %v616, 98
        %v740 = vpop.permute.xlu0 %739
        %741 = vrot.lane.b32.xlu0 %v618, 98
        %v742 = vpop.permute.xlu0 %741
        %743 = vrot.lane.b32.xlu0 %v620, 98
        %v744 = vpop.permute.xlu0 %743
        %749 = vrot.lane.b32.xlu0 %v614, 95
        %v750 = vpop.permute.xlu0 %749
        %751 = vrot.lane.b32.xlu0 %v616, 95
        %v752 = vpop.permute.xlu0 %751
        %753 = vrot.lane.b32.xlu0 %v618, 95
        %v754 = vpop.permute.xlu0 %753
        %755 = vrot.lane.b32.xlu0 %v620, 95
        %v756 = vpop.permute.xlu0 %755
        %761 = vrot.lane.b32.xlu0 %v614, 92
        %v762 = vpop.permute.xlu0 %761
        %763 = vrot.lane.b32.xlu0 %v616, 92
        %v764 = vpop.permute.xlu0 %763
        %765 = vrot.lane.b32.xlu0 %v618, 92
        %v766 = vpop.permute.xlu0 %765
        %767 = vrot.lane.b32.xlu0 %v620, 92
        %v768 = vpop.permute.xlu0 %767
        %vm773 = vcmask 105472
        %v774 = vsel %vm773, %v613, %v626
        %v775 = vsel %vm773, %v615, %v628
        %v776 = vsel %vm773, %v617, %v630
        %v777 = vsel %vm773, %v619, %v632
        %vm778 = vcmask 211968
        %v779 = vsel %vm778, %v774, %v638
        %v780 = vsel %vm778, %v775, %v640
        %v781 = vsel %vm778, %v776, %v642
        %v782 = vsel %vm778, %v777, %v644
        %vm783 = vcmask 318464
        %v784 = vsel %vm783, %v779, %v650
        %v785 = vsel %vm783, %v780, %v652
        %v786 = vsel %vm783, %v781, %v654
        %v787 = vsel %vm783, %v782, %v656
        %vm788 = vcmask 424960
        %v789 = vsel %vm788, %v784, %v662
        %v790 = vsel %vm788, %v785, %v664
        %v791 = vsel %vm788, %v786, %v666
        %v792 = vsel %vm788, %v787, %v668
        %vm793 = vcmask 531456
        %v794 = vsel %vm793, %v789, %v674
        %v795 = vsel %vm793, %v790, %v676
        %v796 = vsel %vm793, %v791, %v678
        %v797 = vsel %vm793, %v792, %v680
        %vm798 = vcmask 637952
        %v799 = vsel %vm798, %v794, %v686
        %v800 = vsel %vm798, %v795, %v688
        %v801 = vsel %vm798, %v796, %v690
        %v802 = vsel %vm798, %v797, %v692
        %vm803 = vcmask 744448
        %v804 = vsel %vm803, %v799, %v698
        %v805 = vsel %vm803, %v800, %v700
        %v806 = vsel %vm803, %v801, %v702
        %v807 = vsel %vm803, %v802, %v704
        %vm808 = vcmask 850944
        %v809 = vsel %vm808, %v804, %v714
        %v810 = vsel %vm808, %v805, %v716
        %v811 = vsel %vm808, %v806, %v718
        %v812 = vsel %vm808, %v807, %v720
        %vm813 = vcmask 957440
        %v814 = vsel %vm813, %v809, %v726
        %v815 = vsel %vm813, %v810, %v728
        %v816 = vsel %vm813, %v811, %v730
        %v817 = vsel %vm813, %v812, %v732
        %vm818 = vcmask 15360
        %v819 = vsel %vm818, %v726, %v738
        %v820 = vsel %vm818, %v728, %v740
        %v821 = vsel %vm818, %v730, %v742
        %v822 = vsel %vm818, %v732, %v744
        %vm823 = vcmask 121856
        %v824 = vsel %vm823, %v819, %v750
        %v825 = vsel %vm823, %v820, %v752
        %v826 = vsel %vm823, %v821, %v754
        %v827 = vsel %vm823, %v822, %v756
        %vm828 = vcmask 228352
        %v829 = vsel %vm828, %v824, %v762
        %v830 = vsel %vm828, %v825, %v764
        %v831 = vsel %vm828, %v826, %v766
        %v832 = vsel %vm828, %v827, %v768
        %vm833 = vcmask 334848
        %v834 = vsel %vm833, %v829, 0.0
        %v835 = vsel %vm833, %v830, 0.0
        %v836 = vsel %vm833, %v831, 0.0
        %v837 = vsel %vm833, %v832, 0.0
        %838 = vst [vmem:[%s254] sm:$0xff] %v814
        %vm839 = vcmask 392192
        %840 = vst.msk [vmem:[%s254 + $0x8] sm:$0xff] %vm839, %v834
        %841 = vst [vmem:[%s254 + $0x10] sm:$0xff] %v815
        %842 = vst.msk [vmem:[%s254 + $0x18] sm:$0xff] %vm839, %v835
        %843 = vst [vmem:[%s254 + $0x20] sm:$0xff] %v816
        %844 = vst.msk [vmem:[%s254 + $0x28] sm:$0xff] %vm839, %v836
        %845 = vst [vmem:[%s254 + $0x30] sm:$0xff] %v817
        %846 = vst.msk [vmem:[%s254 + $0x38] sm:$0xff] %vm839, %v837
        %p847 = scmp.lt.s32.totalorder %s18, 1
        %s848 = scalar_select %p847, %s18, 1
        %s849 = smul.addr %s848, 8
        %s850 = smul.addr %s849, 8
        %s851 = scalar_lea.vmem %s5, %s850
        // Predicated region
        $region49: #{cnn_ddqn_forward.2} parent=39 // pred_check
          %p852 = pneg %p146
        $region50: #{cnn_ddqn_forward.2} parent=39 // pred_check_branch
          %854 = sbr.rel (%p852) target = $region52
        $region51: #{cnn_ddqn_forward.2} parent=39 // pred_region
          _
        $region52: #{cnn_ddqn_forward.2} parent=39 // pred_fallthru
          _
      $region40: #{cnn_ddqn_forward.2} parent=5 // pred_fallthru
        _
      %p855 = scmp.le.s32.totalorder 2, %s13
      // Predicated region
      $region53: #{cnn_ddqn_forward.2} parent=5 // pred_check
        %p856 = pneg %p855
      $region54: #{cnn_ddqn_forward.2} parent=5 // pred_check_branch
        %858 = sbr.rel (%p856) target = $region56
      $region55: #{cnn_ddqn_forward.2} parent=5 // pred_region
        %s859 = ssub.s32 %s13, 2
        // Predicated region
        $region57: #{cnn_ddqn_forward.2} parent=55 // pred_check
          %p860 = pneg %p152
        $region58: #{cnn_ddqn_forward.2} parent=55 // pred_check_branch
          %862 = sbr.rel (%p860) target = $region60
        $region59: #{cnn_ddqn_forward.2} parent=55 // pred_region
          %p863 = scmp.lt.s32.totalorder %s19, 1
          %s864 = scalar_select %p863, %s19, 1
          %s865 = smul.addr %s864, 8
          %s866 = smul.addr %s865, 8
          %s867 = scalar_lea.vmem %s5, %s866
        $region60: #{cnn_ddqn_forward.2} parent=55 // pred_fallthru
          _
      $region56: #{cnn_ddqn_forward.2} parent=5 // pred_fallthru
        _
    $region6: #{cnn_ddqn_forward.2} parent=1 // loop_footer
      %s17 = sadd.s32 1, %s13
    $region7: #{cnn_ddqn_forward.2} parent=1 // loop_footer_branch
      %12 = sbr.rel target = $region3
    $region8: #{cnn_ddqn_forward.2} parent=1 // loop_exit
      _
    %868 = vsyncpa [#allocation3], 1
    %s869 = scalar_lea.sflag [#allocation3], 1
    %870 = vsyncpa %s869, 1
    %871 = vsyncpa [#allocation5], 1

// kernel: cnn_ddqn_forward.3
$region0: #{cnn_ddqn_forward.3}
  #allocation0 [shape = 'u32[]', space=smem, size = 0x4, offset = 0x4, fixed_abs, tag = 'smem constant byte address 0x4 - core index']
  #allocation1 [shape = 'u32[144,128]{1,0:T(1,128)}', space=vmem, size = 0x12000, scoped, tag = 'internal scratch']
  #allocation2 [shape = 'f32[2,128]{1,0:T(2,128)}', space=vmem, size = 0x400, scoped, tag = 'scratch operand']
  #allocation3 [shape = 'f32[2,128]{1,0:T(2,128)}', space=vmem, size = 0x400, scoped, tag = 'scratch operand']
  #allocation4 [shape = 'f32[1,1]{1,0:T(1,128)S(1)}', space=vmem, size = 0x200, scoped, tag = 'scoped memory for cnn_ddqn_forward.3']
  %s0 = inlined_call_operand.vmem [shape: f32[2,5632], index: 0, kind: input, shape index: {}]
  %s1 = inlined_call_operand.hbm [shape: bf16[5632,128], index: 1, kind: input, shape index: {}]
  %s2 = inlined_call_operand.hbm [shape: f32[1,128], index: 2, kind: input, shape index: {}]
  %s3 = inlined_call_operand.hbm [shape: bf16[5632,128], index: 3, kind: input, shape index: {}]
  %s4 = inlined_call_operand.hbm [shape: f32[1,128], index: 4, kind: input, shape index: {}]
  %s5 = inlined_call_operand.vmem [shape: f32[128,1], index: 5, kind: input, shape index: {}]
  %s6 = inlined_call_operand.<no memory space> [shape: f32[1,1], index: 6, kind: input, shape index: {}]
  %s7 = inlined_call_operand.vmem [shape: f32[128,16], index: 7, kind: input, shape index: {}]
  %s8 = inlined_call_operand.hbm [shape: f32[1,16], index: 8, kind: input, shape index: {}]
  %s9 = inlined_call_operand.hbm [shape: f32[2,16], index: 9, kind: output, shape index: {}]
  %s10 = sld [smem:[#allocation0]]
  $region97: #{cnn_ddqn_forward.3} parent=0
    _
  %s12 = ssub.s32 1, %s10
  %s13 = scalar_select 0, %s12, %s10
  %v14 = vstv %s6
  %15 = vst [vmem:[#allocation4] sm:$0x1] %v14
  $region1: #{cnn_ddqn_forward.3} parent=0
    #allocation5 [shape = 'u8[1441792]{0}', space=vmem, size = 0x160000, scoped, tag = 'input window, operand 1']
    #allocation6 [shape = 's32[2]{0}', space=sflag, size = 0x8, scoped, tag = 'scoped memory for cnn_ddqn_forward.3']
    #allocation7 [shape = 's32[2]{0}', space=sflag, size = 0x8, scoped, tag = 'scoped memory for cnn_ddqn_forward.3']
    #allocation8 [shape = 'u8[512]{0}', space=vmem, size = 0x400, scoped, tag = 'input window, operand 2, single buffered']
    #allocation9 [shape = 's32[1]{0}', space=sflag, size = 0x4, scoped, tag = 'scoped memory for cnn_ddqn_forward.3']
    #allocation10 [shape = 'u8[1441792]{0}', space=vmem, size = 0x160000, scoped, tag = 'input window, operand 3']
    #allocation11 [shape = 'u8[512]{0}', space=vmem, size = 0x400, scoped, tag = 'input window, operand 4, single buffered']
    #allocation12 [shape = 'u8[512]{0}', space=vmem, size = 0x400, scoped, tag = 'input window, operand 8, single buffered']
    #allocation13 [shape = 's32[1]{0}', space=sflag, size = 0x4, scoped, tag = 'scoped memory for cnn_ddqn_forward.3']
    #allocation14 [shape = 'u8[1024]{0}', space=vmem, size = 0x400, scoped, tag = 'output window, operand 0, single buffered']
    %16 = vsyncpa [#allocation6], 0
    %s17 = scalar_lea.sflag [#allocation6], 1
    %18 = vsyncpa %s17, 0
    %19 = vsyncpa [#allocation9], 0
    %20 = vsyncpa [#allocation13], 0
    %21 = vsyncpa [#allocation7], 0
    loop: start=0, step=1, limit=4
    $region2: #{cnn_ddqn_forward.3} parent=1 // loop_pre_header
      _
    $region3: #{cnn_ddqn_forward.3} parent=1 // loop_header
      %s23 = sphi 0, %s27
      %p24 = scmp.ge.s32.totalorder %s23, 4
      %s33 = sphi 0, %s35
      %s36 = sphi 0, %s33
      %s37 = sphi 0, %s36
      %s53 = sphi 0, %s37
      %s59 = sphi 0, %s61
      %s62 = sphi 0, %s59
      %s63 = sphi 0, %s62
      %s79 = sphi 0, %s63
      %s83 = sphi 0, %s83
      %s85 = sphi 0, %s83
      %s86 = sphi 0, %s85
      %s100 = sphi 0, %s86
      %s106 = sphi 0, %s108
      %s109 = sphi 0, %s106
      %s110 = sphi 0, %s109
      %s126 = sphi 0, %s110
      %s130 = sphi 0, %s130
      %s132 = sphi 0, %s130
      %s133 = sphi 0, %s132
      %s147 = sphi 0, %s133
      %s151 = sphi 0, %s151
      %s153 = sphi 0, %s151
      %s154 = sphi 0, %s153
      %s168 = sphi 0, %s154
      %s172 = sphi 0, %s172
      %s174 = sphi 0, %s172
      %s175 = sphi 0, %s174
      %s189 = sphi 0, %s175
      %s193 = sphi 0, %s193
      %s195 = sphi 0, %s193
      %s196 = sphi 0, %s195
      %s210 = sphi 0, %s196
      %s214 = sphi 0, %s214
      %s216 = sphi 0, %s214
      %s217 = sphi 0, %s216
      %s231 = sphi 0, %s217
      %s235 = sphi 0, %s235
      %s237 = sphi 0, %s235
      %s238 = sphi 0, %s237
      %s252 = sphi 0, %s238
    $region4: #{cnn_ddqn_forward.3} parent=1 // loop_header_branch
      %26 = sbr.rel (%p24) target = $region8
    $region5: #{cnn_ddqn_forward.3} parent=1 // loop_body
      %s28 = ssub.s32 %s23, 1
      %s29 = ssub.s32 %s23, 2
      %s30 = sadd.s32 %s23, 1
      %s31 = ssub.s32 %s23, %s30
      %p32 = scmp.eq.s32.totalorder %s31, 0
      %s34 = sadd.s32 %s33, 1
      %s35 = scalar_select %p32, %s33, %s34
      %p38 = pneg %p32
      %p39 = scmp.eq.s32.totalorder %s23, 1
      %p40 = por %p38, %p39
      %p41 = scmp.ne.s32.totalorder %s33, %s36
      %p42 = scmp.eq.s32.totalorder %s23, 0
      %p43 = por %p41, %p42
      %p44 = scmp.ne.s32.totalorder %s33, %s36
      %p45 = scmp.eq.s32.totalorder %s28, 1
      %p46 = por %p44, %p45
      %p47 = scmp.ne.s32.totalorder %s36, %s37
      %p48 = scmp.eq.s32.totalorder %s28, 0
      %p49 = por %p47, %p48
      %p50 = scmp.ne.s32.totalorder %s36, %s37
      %p51 = scmp.eq.s32.totalorder %s29, 1
      %p52 = por %p50, %p51
      %p54 = scmp.ne.s32.totalorder %s37, %s53
      %p55 = scmp.eq.s32.totalorder %s29, 0
      %p56 = por %p54, %p55
      %s57 = ssub.s32 %s23, %s30
      %p58 = scmp.eq.s32.totalorder %s57, 0
      %s60 = sadd.s32 %s59, 1
      %s61 = scalar_select %p58, %s59, %s60
      %p64 = pneg %p58
      %p65 = scmp.eq.s32.totalorder %s23, 1
      %p66 = por %p64, %p65
      %p67 = scmp.ne.s32.totalorder %s59, %s62
      %p68 = scmp.eq.s32.totalorder %s23, 0
      %p69 = por %p67, %p68
      %p70 = scmp.ne.s32.totalorder %s59, %s62
      %p71 = scmp.eq.s32.totalorder %s28, 1
      %p72 = por %p70, %p71
      %p73 = scmp.ne.s32.totalorder %s62, %s63
      %p74 = scmp.eq.s32.totalorder %s28, 0
      %p75 = por %p73, %p74
      %p76 = scmp.ne.s32.totalorder %s62, %s63
      %p77 = scmp.eq.s32.totalorder %s29, 1
      %p78 = por %p76, %p77
      %p80 = scmp.ne.s32.totalorder %s63, %s79
      %p81 = scmp.eq.s32.totalorder %s29, 0
      %p82 = por %p80, %p81
      %s84 = sadd.s32 %s83, 1
      %p87 = scmp.eq.s32.totalorder %s23, 1
      %p88 = scmp.ne.s32.totalorder %s83, %s85
      %p89 = scmp.eq.s32.totalorder %s23, 0
      %p90 = por %p88, %p89
      %p91 = scmp.ne.s32.totalorder %s83, %s85
      %p92 = scmp.eq.s32.totalorder %s28, 1
      %p93 = por %p91, %p92
      %p94 = scmp.ne.s32.totalorder %s85, %s86
      %p95 = scmp.eq.s32.totalorder %s28, 0
      %p96 = por %p94, %p95
      %p97 = scmp.ne.s32.totalorder %s85, %s86
      %p98 = scmp.eq.s32.totalorder %s29, 1
      %p99 = por %p97, %p98
      %p101 = scmp.ne.s32.totalorder %s86, %s100
      %p102 = scmp.eq.s32.totalorder %s29, 0
      %p103 = por %p101, %p102
      %s104 = ssub.s32 %s23, %s30
      %p105 = scmp.eq.s32.totalorder %s104, 0
      %s107 = sadd.s32 %s106, 1
      %s108 = scalar_select %p105, %s106, %s107
      %p111 = pneg %p105
      %p112 = scmp.eq.s32.totalorder %s23, 1
      %p113 = por %p111, %p112
      %p114 = scmp.ne.s32.totalorder %s106, %s109
      %p115 = scmp.eq.s32.totalorder %s23, 0
      %p116 = por %p114, %p115
      %p117 = scmp.ne.s32.totalorder %s106, %s109
      %p118 = scmp.eq.s32.totalorder %s28, 1
      %p119 = por %p117, %p118
      %p120 = scmp.ne.s32.totalorder %s109, %s110
      %p121 = scmp.eq.s32.totalorder %s28, 0
      %p122 = por %p120, %p121
      %p123 = scmp.ne.s32.totalorder %s109, %s110
      %p124 = scmp.eq.s32.totalorder %s29, 1
      %p125 = por %p123, %p124
      %p127 = scmp.ne.s32.totalorder %s110, %s126
      %p128 = scmp.eq.s32.totalorder %s29, 0
      %p129 = por %p127, %p128
      %s131 = sadd.s32 %s130, 1
      %p134 = scmp.eq.s32.totalorder %s23, 1
      %p135 = scmp.ne.s32.totalorder %s130, %s132
      %p136 = scmp.eq.s32.totalorder %s23, 0
      %p137 = por %p135, %p136
      %p138 = scmp.ne.s32.totalorder %s130, %s132
      %p139 = scmp.eq.s32.totalorder %s28, 1
      %p140 = por %p138, %p139
      %p141 = scmp.ne.s32.totalorder %s132, %s133
      %p142 = scmp.eq.s32.totalorder %s28, 0
      %p143 = por %p141, %p142
      %p144 = scmp.ne.s32.totalorder %s132, %s133
      %p145 = scmp.eq.s32.totalorder %s29, 1
      %p146 = por %p144, %p145
      %p148 = scmp.ne.s32.totalorder %s133, %s147
      %p149 = scmp.eq.s32.totalorder %s29, 0
      %p150 = por %p148, %p149
      %s152 = sadd.s32 %s151, 1
      %p155 = scmp.eq.s32.totalorder %s23, 1
      %p156 = scmp.ne.s32.totalorder %s151, %s153
      %p157 = scmp.eq.s32.totalorder %s23, 0
      %p158 = por %p156, %p157
      %p159 = scmp.ne.s32.totalorder %s151, %s153
      %p160 = scmp.eq.s32.totalorder %s28, 1
      %p161 = por %p159, %p160
      %p162 = scmp.ne.s32.totalorder %s153, %s154
      %p163 = scmp.eq.s32.totalorder %s28, 0
      %p164 = por %p162, %p163
      %p165 = scmp.ne.s32.totalorder %s153, %s154
      %p166 = scmp.eq.s32.totalorder %s29, 1
      %p167 = por %p165, %p166
      %p169 = scmp.ne.s32.totalorder %s154, %s168
      %p170 = scmp.eq.s32.totalorder %s29, 0
      %p171 = por %p169, %p170
      %s173 = sadd.s32 %s172, 1
      %p176 = scmp.eq.s32.totalorder %s23, 1
      %p177 = scmp.ne.s32.totalorder %s172, %s174
      %p178 = scmp.eq.s32.totalorder %s23, 0
      %p179 = por %p177, %p178
      %p180 = scmp.ne.s32.totalorder %s172, %s174
      %p181 = scmp.eq.s32.totalorder %s28, 1
      %p182 = por %p180, %p181
      %p183 = scmp.ne.s32.totalorder %s174, %s175
      %p184 = scmp.eq.s32.totalorder %s28, 0
      %p185 = por %p183, %p184
      %p186 = scmp.ne.s32.totalorder %s174, %s175
      %p187 = scmp.eq.s32.totalorder %s29, 1
      %p188 = por %p186, %p187
      %p190 = scmp.ne.s32.totalorder %s175, %s189
      %p191 = scmp.eq.s32.totalorder %s29, 0
      %p192 = por %p190, %p191
      %s194 = sadd.s32 %s193, 1
      %p197 = scmp.eq.s32.totalorder %s23, 1
      %p198 = scmp.ne.s32.totalorder %s193, %s195
      %p199 = scmp.eq.s32.totalorder %s23, 0
      %p200 = por %p198, %p199
      %p201 = scmp.ne.s32.totalorder %s193, %s195
      %p202 = scmp.eq.s32.totalorder %s28, 1
      %p203 = por %p201, %p202
      %p204 = scmp.ne.s32.totalorder %s195, %s196
      %p205 = scmp.eq.s32.totalorder %s28, 0
      %p206 = por %p204, %p205
      %p207 = scmp.ne.s32.totalorder %s195, %s196
      %p208 = scmp.eq.s32.totalorder %s29, 1
      %p209 = por %p207, %p208
      %p211 = scmp.ne.s32.totalorder %s196, %s210
      %p212 = scmp.eq.s32.totalorder %s29, 0
      %p213 = por %p211, %p212
      %s215 = sadd.s32 %s214, 1
      %p218 = scmp.eq.s32.totalorder %s23, 1
      %p219 = scmp.ne.s32.totalorder %s214, %s216
      %p220 = scmp.eq.s32.totalorder %s23, 0
      %p221 = por %p219, %p220
      %p222 = scmp.ne.s32.totalorder %s214, %s216
      %p223 = scmp.eq.s32.totalorder %s28, 1
      %p224 = por %p222, %p223
      %p225 = scmp.ne.s32.totalorder %s216, %s217
      %p226 = scmp.eq.s32.totalorder %s28, 0
      %p227 = por %p225, %p226
      %p228 = scmp.ne.s32.totalorder %s216, %s217
      %p229 = scmp.eq.s32.totalorder %s29, 1
      %p230 = por %p228, %p229
      %p232 = scmp.ne.s32.totalorder %s217, %s231
      %p233 = scmp.eq.s32.totalorder %s29, 0
      %p234 = por %p232, %p233
      %s236 = sadd.s32 %s235, 1
      %p239 = scmp.eq.s32.totalorder %s23, 1
      %p240 = scmp.ne.s32.totalorder %s235, %s237
      %p241 = scmp.eq.s32.totalorder %s23, 0
      %p242 = por %p240, %p241
      %p243 = scmp.ne.s32.totalorder %s235, %s237
      %p244 = scmp.eq.s32.totalorder %s28, 1
      %p245 = por %p243, %p244
      %p246 = scmp.ne.s32.totalorder %s237, %s238
      %p247 = scmp.eq.s32.totalorder %s28, 0
      %p248 = por %p246, %p247
      %p249 = scmp.ne.s32.totalorder %s237, %s238
      %p250 = scmp.eq.s32.totalorder %s29, 1
      %p251 = por %p249, %p250
      %p253 = scmp.ne.s32.totalorder %s238, %s252
      %p254 = scmp.eq.s32.totalorder %s29, 0
      %p255 = por %p253, %p254
      %p256 = scmp.le.s32.totalorder 1, %s23
      %p257 = scmp.lt.s32.totalorder %s23, 3
      %p258 = pnand %p256, %p257
      %p259 = pneg %p258
      // Predicated region
      $region9: #{cnn_ddqn_forward.3} parent=5 // pred_check
        _
      $region10: #{cnn_ddqn_forward.3} parent=5 // pred_check_branch
        %261 = sbr.rel (%p258) target = $region12
      $region11: #{cnn_ddqn_forward.3} parent=5 // pred_region
        %s262 = ssub.s32 %s23, 1
        // Predicated region
        $region13: #{cnn_ddqn_forward.3} parent=11 // pred_check
          %p263 = pneg %p96
        $region14: #{cnn_ddqn_forward.3} parent=11 // pred_check_branch
          %265 = sbr.rel (%p263) target = $region16
        $region15: #{cnn_ddqn_forward.3} parent=11 // pred_region
          %s267 = ssub.s32 16, 16
          %268 = vsyncadd [#allocation9], %s267
          %s270 = sshll.u32 [#allocation8], 4
          %s271 = int_to_ptr.vmem [resolvable:$true] %s270
          %273 = dma.hbm_to_vmem [thread:$0]  %s2, 16, %s271, [#allocation9]
        $region16: #{cnn_ddqn_forward.3} parent=11 // pred_fallthru
          _
        // Predicated region
        $region17: #{cnn_ddqn_forward.3} parent=11 // pred_check
          %p274 = pneg %p143
        $region18: #{cnn_ddqn_forward.3} parent=11 // pred_check_branch
          %276 = sbr.rel (%p274) target = $region20
        $region19: #{cnn_ddqn_forward.3} parent=11 // pred_region
          %s278 = ssub.s32 16, 16
          %279 = vsyncadd [#allocation9], %s278
          %s281 = sshll.u32 [#allocation11], 4
          %s282 = int_to_ptr.vmem [resolvable:$true] %s281
          %284 = dma.hbm_to_vmem [thread:$0]  %s4, 16, %s282, [#allocation9]
        $region20: #{cnn_ddqn_forward.3} parent=11 // pred_fallthru
          _
        // Predicated region
        $region21: #{cnn_ddqn_forward.3} parent=11 // pred_check
          %p285 = pneg %p164
        $region22: #{cnn_ddqn_forward.3} parent=11 // pred_check_branch
          %287 = sbr.rel (%p285) target = $region24
        $region23: #{cnn_ddqn_forward.3} parent=11 // pred_region
          _
        $region24: #{cnn_ddqn_forward.3} parent=11 // pred_fallthru
          _
        // Predicated region
        $region25: #{cnn_ddqn_forward.3} parent=11 // pred_check
          %p288 = pneg %p185
        $region26: #{cnn_ddqn_forward.3} parent=11 // pred_check_branch
          %290 = sbr.rel (%p288) target = $region28
        $region27: #{cnn_ddqn_forward.3} parent=11 // pred_region
          _
        $region28: #{cnn_ddqn_forward.3} parent=11 // pred_fallthru
          _
        // Predicated region
        $region29: #{cnn_ddqn_forward.3} parent=11 // pred_check
          %p291 = pneg %p206
        $region30: #{cnn_ddqn_forward.3} parent=11 // pred_check_branch
          %293 = sbr.rel (%p291) target = $region32
        $region31: #{cnn_ddqn_forward.3} parent=11 // pred_region
          _
        $region32: #{cnn_ddqn_forward.3} parent=11 // pred_fallthru
          _
        // Predicated region
        $region33: #{cnn_ddqn_forward.3} parent=11 // pred_check
          %p294 = pneg %p227
        $region34: #{cnn_ddqn_forward.3} parent=11 // pred_check_branch
          %296 = sbr.rel (%p294) target = $region36
        $region35: #{cnn_ddqn_forward.3} parent=11 // pred_region
          %s298 = ssub.s32 16, 16
          %299 = vsyncadd [#allocation13], %s298
          %s301 = sshll.u32 [#allocation12], 4
          %s302 = int_to_ptr.vmem [resolvable:$true] %s301
          %304 = dma.hbm_to_vmem [thread:$0]  %s8, 16, %s302, [#allocation13]
        $region36: #{cnn_ddqn_forward.3} parent=11 // pred_fallthru
          _
      $region12: #{cnn_ddqn_forward.3} parent=5 // pred_fallthru
        _
      %p305 = scmp.lt.s32.totalorder %s23, 2
      // Predicated region
      $region37: #{cnn_ddqn_forward.3} parent=5 // pred_check
        %p306 = pneg %p305
      $region38: #{cnn_ddqn_forward.3} parent=5 // pred_check_branch
        %308 = sbr.rel (%p306) target = $region40
      $region39: #{cnn_ddqn_forward.3} parent=5 // pred_region
        // Predicated region
        $region41: #{cnn_ddqn_forward.3} parent=39 // pred_check
          %p309 = pneg %p43
        $region42: #{cnn_ddqn_forward.3} parent=39 // pred_check_branch
          %311 = sbr.rel (%p309) target = $region44
        $region43: #{cnn_ddqn_forward.3} parent=39 // pred_region
          %s312 = smul.u32 22, %s23
          %p313 = scmp.lt.s32.totalorder %s312, 43
          %s314 = scalar_select %p313, %s312, 43
          %s315 = smul.addr %s314, 2
          %s316 = scalar_lea.vmem %s0, %s315
          %s317 = smul.u32 22, %s23
        $region44: #{cnn_ddqn_forward.3} parent=39 // pred_fallthru
          _
        // Predicated region
        $region45: #{cnn_ddqn_forward.3} parent=39 // pred_check
          %p318 = pneg %p69
        $region46: #{cnn_ddqn_forward.3} parent=39 // pred_check_branch
          %320 = sbr.rel (%p318) target = $region48
        $region47: #{cnn_ddqn_forward.3} parent=39 // pred_region
          %s321 = sand.u32 %s23, 1
          %s322 = scalar_lea.sflag [#allocation6], %s321
          %s323 = sand.u32 %s59, 1
          %s324 = smul.addr %s323, 1408
          %s325 = scalar_lea.vmem [#allocation5], %s324
          %s326 = smul.u32 352, %s23
          %s328 = ssub.s32 22528, 22528
          %329 = vsyncadd %s322, %s328
          %s330 = smul.addr %s326, 64
          %s331 = scalar_lea.hbm %s1, %s330
          %s332 = sshll.u32 %s325, 4
          %s333 = int_to_ptr.vmem [resolvable:$true] %s332
          %338 = dma.hbm_to_vmem [thread:$0]  %s331, 22528, %s333, %s322, 64, 64, 4
        $region48: #{cnn_ddqn_forward.3} parent=39 // pred_fallthru
          _
        // Predicated region
        $region49: #{cnn_ddqn_forward.3} parent=39 // pred_check
          %p339 = pneg %p116
        $region50: #{cnn_ddqn_forward.3} parent=39 // pred_check_branch
          %341 = sbr.rel (%p339) target = $region52
        $region51: #{cnn_ddqn_forward.3} parent=39 // pred_region
          %s342 = sand.u32 %s23, 1
          %s343 = scalar_lea.sflag [#allocation6], %s342
          %s344 = sand.u32 %s106, 1
          %s345 = smul.addr %s344, 1408
          %s346 = scalar_lea.vmem [#allocation10], %s345
          %s347 = smul.u32 352, %s23
          %s349 = ssub.s32 22528, 22528
          %350 = vsyncadd %s343, %s349
          %s351 = smul.addr %s347, 64
          %s352 = scalar_lea.hbm %s3, %s351
          %s353 = sshll.u32 %s346, 4
          %s354 = int_to_ptr.vmem [resolvable:$true] %s353
          %359 = dma.hbm_to_vmem [thread:$0]  %s352, 22528, %s354, %s343, 64, 64, 4
        $region52: #{cnn_ddqn_forward.3} parent=39 // pred_fallthru
          _
      $region40: #{cnn_ddqn_forward.3} parent=5 // pred_fallthru
        _
      %p360 = scmp.le.s32.totalorder 1, %s23
      %p361 = scmp.lt.s32.totalorder %s23, 3
      %p362 = pnand %p360, %p361
      %p363 = pneg %p362
      // Predicated region
      $region53: #{cnn_ddqn_forward.3} parent=5 // pred_check
        _
      $region54: #{cnn_ddqn_forward.3} parent=5 // pred_check_branch
        %365 = sbr.rel (%p362) target = $region56
      $region55: #{cnn_ddqn_forward.3} parent=5 // pred_region
        %s366 = ssub.s32 %s23, 1
        %s367 = sand.u32 %s28, 1
        %s368 = scalar_lea.sflag [#allocation6], %s367
        %s369 = sand.u32 %s62, 1
        %s370 = smul.addr %s369, 1408
        %s371 = scalar_lea.vmem [#allocation5], %s370
        // Predicated region
        $region57: #{cnn_ddqn_forward.3} parent=55 // pred_check
          %p372 = pneg %p75
        $region58: #{cnn_ddqn_forward.3} parent=55 // pred_check_branch
          %374 = sbr.rel (%p372) target = $region60
        $region59: #{cnn_ddqn_forward.3} parent=55 // pred_region
          %375 = dma.done %s368, 22528
        $region60: #{cnn_ddqn_forward.3} parent=55 // pred_fallthru
          _
        // Predicated region
        $region61: #{cnn_ddqn_forward.3} parent=55 // pred_check
          %p376 = pneg %p96
        $region62: #{cnn_ddqn_forward.3} parent=55 // pred_check_branch
          %378 = sbr.rel (%p376) target = $region64
        $region63: #{cnn_ddqn_forward.3} parent=55 // pred_region
          %379 = dma.done [#allocation9], 16
        $region64: #{cnn_ddqn_forward.3} parent=55 // pred_fallthru
          _
        %s380 = sand.u32 %s28, 1
        %s381 = scalar_lea.sflag [#allocation6], %s380
        %s382 = sand.u32 %s109, 1
        %s383 = smul.addr %s382, 1408
        %s384 = scalar_lea.vmem [#allocation10], %s383
        // Predicated region
        $region65: #{cnn_ddqn_forward.3} parent=55 // pred_check
          %p385 = pneg %p122
        $region66: #{cnn_ddqn_forward.3} parent=55 // pred_check_branch
          %387 = sbr.rel (%p385) target = $region68
        $region67: #{cnn_ddqn_forward.3} parent=55 // pred_region
          %388 = dma.done %s381, 22528
        $region68: #{cnn_ddqn_forward.3} parent=55 // pred_fallthru
          _
        // Predicated region
        $region69: #{cnn_ddqn_forward.3} parent=55 // pred_check
          %p389 = pneg %p143
        $region70: #{cnn_ddqn_forward.3} parent=55 // pred_check_branch
          %391 = sbr.rel (%p389) target = $region72
        $region71: #{cnn_ddqn_forward.3} parent=55 // pred_region
          %392 = dma.done [#allocation9], 16
        $region72: #{cnn_ddqn_forward.3} parent=55 // pred_fallthru
          _
        // Predicated region
        $region73: #{cnn_ddqn_forward.3} parent=55 // pred_check
          %p393 = pneg %p227
        $region74: #{cnn_ddqn_forward.3} parent=55 // pred_check_branch
          %395 = sbr.rel (%p393) target = $region76
        $region75: #{cnn_ddqn_forward.3} parent=55 // pred_region
          %396 = dma.done [#allocation13], 16
        $region76: #{cnn_ddqn_forward.3} parent=55 // pred_fallthru
          _
        %s397 = smul.u32 22, %s28
        %p398 = scmp.lt.s32.totalorder %s397, 43
        %s399 = scalar_select %p398, %s397, 43
        %s400 = smul.addr %s399, 2
        %s401 = scalar_lea.vmem %s0, %s400
        %p402 = pneg %p49
        %p403 = pneg %p46
        %s404 = sand.u32 %s28, 1
        %s405 = scalar_lea.sflag [#allocation6], %s404
        %s406 = sand.u32 %s62, 1
        %s407 = smul.addr %s406, 1408
        %s408 = scalar_lea.vmem [#allocation5], %s407
        %p409 = pneg %p75
        %p410 = pneg %p72
        %p411 = pneg %p96
        %p412 = pneg %p93
        %s413 = sand.u32 %s28, 1
        %s414 = scalar_lea.sflag [#allocation6], %s413
        %s415 = sand.u32 %s109, 1
        %s416 = smul.addr %s415, 1408
        %s417 = scalar_lea.vmem [#allocation10], %s416
        %p418 = pneg %p122
        %p419 = pneg %p119
        %p420 = pneg %p143
        %p421 = pneg %p140
        %p422 = pneg %p164
        %p423 = pneg %p161
        %p424 = pneg %p185
        %p425 = pneg %p182
        %p426 = pneg %p206
        %p427 = pneg %p203
        %p428 = pneg %p227
        %p429 = pneg %p224
        %p430 = pneg %p248
        %p431 = pneg %p245
        %s432 = smul.u32 22, %s28
        %p433 = scmp.lt.s32.totalorder %s432, 43
        %s434 = scalar_select %p433, %s432, 43
        %s435 = smul.addr %s434, 2
        %s436 = scalar_lea.vmem %s0, %s435
        %s437 = smul.u32 22, %s28
        %s438 = smul.u32 352, %s28
        %s439 = smul.u32 352, %s28
        %p441 = scmp.eq.s32.totalorder %s28, 0
        // Predicated region
        $region77: #{cnn_ddqn_forward.3} parent=55 // pred_check
          %p442 = pneg %p441
        $region78: #{cnn_ddqn_forward.3} parent=55 // pred_check_branch
          %444 = sbr.rel (%p442) target = $region80
        $region79: #{cnn_ddqn_forward.3} parent=55 // pred_region
          %445 = vst [vmem:[#allocation2] sm:$0x3] 0.0
          %446 = vst [vmem:[#allocation3] sm:$0x3] 0.0
        $region80: #{cnn_ddqn_forward.3} parent=55 // pred_fallthru
          _
        %v447 = vld [vmem:[%s436] sm:$0xff]
        %v448 = vld [vmem:[%s436 + $0x8] sm:$0xff]
        %v449 = vld [vmem:[%s436 + $0x10] sm:$0xff]
        %v450 = vld [vmem:[%s436 + $0x18] sm:$0xff]
        %v451 = vld [vmem:[%s436 + $0x20] sm:$0xff]
        %v452 = vld [vmem:[%s436 + $0x28] sm:$0xf]
        %v459 = vcombine.high %v447, %v447
        %v461 = vunpack.c.l.s4 1983009808
        %v462 = vunpack.c.0.s8 %v461
        %v463 = vlaneseq
        %v464 = vshrl.u32 %v463, 7
        %v465 = vsub.s32 %v462, %v464
        %v466 = vrot.slane %v447, %v465
        %v468 = vunpack.c.l.s4 1983009808
        %v469 = vunpack.c.0.s8 %v468
        %v470 = vlaneseq
        %v471 = vshrl.u32 %v470, 7
        %v472 = vsub.s32 %v469, %v471
        %v473 = vrot.slane %v459, %v472
        %v474 = vcombine.high %v466, %v466
        %v475 = vcombine.high %v473, %v473
        %v476 = vcombine.high %v448, %v448
        %v478 = vunpack.c.l.s4 1983009808
        %v479 = vunpack.c.0.s8 %v478
        %v480 = vlaneseq
        %v481 = vshrl.u32 %v480, 7
        %v482 = vsub.s32 %v479, %v481
        %v483 = vrot.slane %v448, %v482
        %v485 = vunpack.c.l.s4 1983009808
        %v486 = vunpack.c.0.s8 %v485
        %v487 = vlaneseq
        %v488 = vshrl.u32 %v487, 7
        %v489 = vsub.s32 %v486, %v488
        %v490 = vrot.slane %v476, %v489
        %v491 = vcombine.high %v483, %v483
        %v492 = vcombine.high %v490, %v490
        %v493 = vcombine.high %v449, %v449
        %v495 = vunpack.c.l.s4 1983009808
        %v496 = vunpack.c.0.s8 %v495
        %v497 = vlaneseq
        %v498 = vshrl.u32 %v497, 7
        %v499 = vsub.s32 %v496, %v498
        %v500 = vrot.slane %v449, %v499
        %v502 = vunpack.c.l.s4 1983009808
        %v503 = vunpack.c.0.s8 %v502
        %v504 = vlaneseq
        %v505 = vshrl.u32 %v504, 7
        %v506 = vsub.s32 %v503, %v505
        %v507 = vrot.slane %v493, %v506
        %v508 = vcombine.high %v500, %v500
        %v509 = vcombine.high %v507, %v507
        %v510 = vcombine.high %v450, %v450
        %v512 = vunpack.c.l.s4 1983009808
        %v513 = vunpack.c.0.s8 %v512
        %v514 = vlaneseq
        %v515 = vshrl.u32 %v514, 7
        %v516 = vsub.s32 %v513, %v515
        %v517 = vrot.slane %v450, %v516
        %v519 = vunpack.c.l.s4 1983009808
        %v520 = vunpack.c.0.s8 %v519
        %v521 = vlaneseq
        %v522 = vshrl.u32 %v521, 7
        %v523 = vsub.s32 %v520, %v522
        %v524 = vrot.slane %v510, %v523
        %v525 = vcombine.high %v517, %v517
        %v526 = vcombine.high %v524, %v524
        %v527 = vcombine.high %v451, %v451
        %v529 = vunpack.c.l.s4 1983009808
        %v530 = vunpack.c.0.s8 %v529
        %v531 = vlaneseq
        %v532 = vshrl.u32 %v531, 7
        %v533 = vsub.s32 %v530, %v532
        %v534 = vrot.slane %v451, %v533
        %v536 = vunpack.c.l.s4 1983009808
        %v537 = vunpack.c.0.s8 %v536
        %v538 = vlaneseq
        %v539 = vshrl.u32 %v538, 7
        %v540 = vsub.s32 %v537, %v539
        %v541 = vrot.slane %v527, %v540
        %v542 = vcombine.high %v534, %v534
        %v543 = vcombine.high %v541, %v541
        %v545 = vunpack.c.l.s4 1983009808
        %v546 = vunpack.c.0.s8 %v545
        %v547 = vlaneseq
        %v548 = vshrl.u32 %v547, 7
        %v549 = vsub.s32 %v546, %v548
        %v550 = vrot.slane %v452, %v549
        %v551 = vcombine.high %v550, %v550
        %v574 = vpack.c.bf16 %v466, %v466
        %v575 = vpack.c.bf16 %v474, %v474
        %v576 = vpack.c.bf16 %v473, %v473
        %v577 = vpack.c.bf16 %v475, %v475
        %v578 = vpack.c.bf16 %v483, %v483
        %v579 = vpack.c.bf16 %v491, %v491
        %v580 = vpack.c.bf16 %v490, %v490
        %v581 = vpack.c.bf16 %v492, %v492
        %v582 = vpack.c.bf16 %v500, %v500
        %v583 = vpack.c.bf16 %v508, %v508
        %v584 = vpack.c.bf16 %v507, %v507
        %v585 = vpack.c.bf16 %v509, %v509
        %v586 = vpack.c.bf16 %v517, %v517
        %v587 = vpack.c.bf16 %v525, %v525
        %v588 = vpack.c.bf16 %v524, %v524
        %v589 = vpack.c.bf16 %v526, %v526
        %v590 = vpack.c.bf16 %v534, %v534
        %v591 = vpack.c.bf16 %v542, %v542
        %v592 = vpack.c.bf16 %v541, %v541
        %v593 = vpack.c.bf16 %v543, %v543
        %v594 = vpack.c.bf16 %v550, %v550
        %v595 = vpack.c.bf16 %v551, %v551
        %v596 = vld [vmem:[#allocation2] sm:$0x3]
        %v597 = vld [vmem:[%s371] sm:$0xf]
        %v598 = vld [vmem:[%s371 + $0x4] sm:$0xf]
        %v599 = vld [vmem:[%s371 + $0x8] sm:$0xf]
        %v600 = vld [vmem:[%s371 + $0xc] sm:$0xf]
        %v601 = vld [vmem:[%s371 + $0x10] sm:$0xf]
        %v602 = vld [vmem:[%s371 + $0x14] sm:$0xf]
        %v603 = vld [vmem:[%s371 + $0x18] sm:$0xf]
        %v604 = vld [vmem:[%s371 + $0x1c] sm:$0xf]
        %v605 = vld [vmem:[%s371 + $0x20] sm:$0xf]
        %v606 = vld [vmem:[%s371 + $0x24] sm:$0xf]
        %v607 = vld [vmem:[%s371 + $0x28] sm:$0xf]
        %v608 = vld [vmem:[%s371 + $0x2c] sm:$0xf]
        %v609 = vld [vmem:[%s371 + $0x30] sm:$0xf]
        %v610 = vld [vmem:[%s371 + $0x34] sm:$0xf]
        %v611 = vld [vmem:[%s371 + $0x38] sm:$0xf]
        %v612 = vld [vmem:[%s371 + $0x3c] sm:$0xf]
        %v613 = vld [vmem:[%s371 + $0x40] sm:$0xf]
        %v614 = vld [vmem:[%s371 + $0x44] sm:$0xf]
        %v615 = vld [vmem:[%s371 + $0x48] sm:$0xf]
        %v616 = vld [vmem:[%s371 + $0x4c] sm:$0xf]
        %v617 = vld [vmem:[%s371 + $0x50] sm:$0xf]
        %v618 = vld [vmem:[%s371 + $0x54] sm:$0xf]
        %v619 = vld [vmem:[%s371 + $0x58] sm:$0xf]
        %v620 = vld [vmem:[%s371 + $0x5c] sm:$0xf]
        %v621 = vld [vmem:[%s371 + $0x60] sm:$0xf]
        %v622 = vld [vmem:[%s371 + $0x64] sm:$0xf]
        %v623 = vld [vmem:[%s371 + $0x68] sm:$0xf]
        %v624 = vld [vmem:[%s371 + $0x6c] sm:$0xf]
        %v625 = vld [vmem:[%s371 + $0x70] sm:$0xf]
        %v626 = vld [vmem:[%s371 + $0x74] sm:$0xf]
        %v627 = vld [vmem:[%s371 + $0x78] sm:$0xf]
        %v628 = vld [vmem:[%s371 + $0x7c] sm:$0xf]
        %v629 = vld [vmem:[%s371 + $0x80] sm:$0xf]
        %v630 = vld [vmem:[%s371 + $0x84] sm:$0xf]
        %v631 = vld [vmem:[%s371 + $0x88] sm:$0xf]
        %v632 = vld [vmem:[%s371 + $0x8c] sm:$0xf]
        %v633 = vld [vmem:[%s371 + $0x90] sm:$0xf]
        %v634 = vld [vmem:[%s371 + $0x94] sm:$0xf]
        %v635 = vld [vmem:[%s371 + $0x98] sm:$0xf]
        %v636 = vld [vmem:[%s371 + $0x9c] sm:$0xf]
        %v637 = vld [vmem:[%s371 + $0xa0] sm:$0xf]
        %v638 = vld [vmem:[%s371 + $0xa4] sm:$0xf]
        %v639 = vld [vmem:[%s371 + $0xa8] sm:$0xf]
        %v640 = vld [vmem:[%s371 + $0xac] sm:$0xf]
        %v641 = vld [vmem:[%s371 + $0xb0] sm:$0xf]
        %v642 = vld [vmem:[%s371 + $0xb4] sm:$0xf]
        %v643 = vld [vmem:[%s371 + $0xb8] sm:$0xf]
        %v644 = vld [vmem:[%s371 + $0xbc] sm:$0xf]
        %v645 = vld [vmem:[%s371 + $0xc0] sm:$0xf]
        %v646 = vld [vmem:[%s371 + $0xc4] sm:$0xf]
        %v647 = vld [vmem:[%s371 + $0xc8] sm:$0xf]
        %v648 = vld [vmem:[%s371 + $0xcc] sm:$0xf]
        %v649 = vld [vmem:[%s371 + $0xd0] sm:$0xf]
        %v650 = vld [vmem:[%s371 + $0xd4] sm:$0xf]
        %v651 = vld [vmem:[%s371 + $0xd8] sm:$0xf]
        %v652 = vld [vmem:[%s371 + $0xdc] sm:$0xf]
        %v653 = vld [vmem:[%s371 + $0xe0] sm:$0xf]
        %v654 = vld [vmem:[%s371 + $0xe4] sm:$0xf]
        %v655 = vld [vmem:[%s371 + $0xe8] sm:$0xf]
        %v656 = vld [vmem:[%s371 + $0xec] sm:$0xf]
        %v657 = vld [vmem:[%s371 + $0xf0] sm:$0xf]
        %v658 = vld [vmem:[%s371 + $0xf4] sm:$0xf]
        %v659 = vld [vmem:[%s371 + $0xf8] sm:$0xf]
        %v660 = vld [vmem:[%s371 + $0xfc] sm:$0xf]
        %v661 = vld [vmem:[%s371 + $0x100] sm:$0xf]
        %v662 = vld [vmem:[%s371 + $0x104] sm:$0xf]
        %v663 = vld [vmem:[%s371 + $0x108] sm:$0xf]
        %v664 = vld [vmem:[%s371 + $0x10c] sm:$0xf]
        %v665 = vld [vmem:[%s371 + $0x110] sm:$0xf]
        %v666 = vld [vmem:[%s371 + $0x114] sm:$0xf]
        %v667 = vld [vmem:[%s371 + $0x118] sm:$0xf]
        %v668 = vld [vmem:[%s371 + $0x11c] sm:$0xf]
        %v669 = vld [vmem:[%s371 + $0x120] sm:$0xf]
        %v670 = vld [vmem:[%s371 + $0x124] sm:$0xf]
        %v671 = vld [vmem:[%s371 + $0x128] sm:$0xf]
        %v672 = vld [vmem:[%s371 + $0x12c] sm:$0xf]
        %v673 = vld [vmem:[%s371 + $0x130] sm:$0xf]
        %v674 = vld [vmem:[%s371 + $0x134] sm:$0xf]
        %v675 = vld [vmem:[%s371 + $0x138] sm:$0xf]
        %v676 = vld [vmem:[%s371 + $0x13c] sm:$0xf]
        %v677 = vld [vmem:[%s371 + $0x140] sm:$0xf]
        %v678 = vld [vmem:[%s371 + $0x144] sm:$0xf]
        %v679 = vld [vmem:[%s371 + $0x148] sm:$0xf]
        %v680 = vld [vmem:[%s371 + $0x14c] sm:$0xf]
        %v681 = vld [vmem:[%s371 + $0x150] sm:$0xf]
        %v682 = vld [vmem:[%s371 + $0x154] sm:$0xf]
        %v683 = vld [vmem:[%s371 + $0x158] sm:$0xf]
        %v684 = vld [vmem:[%s371 + $0x15c] sm:$0xf]
        %v685 = vld [vmem:[%s371 + $0x160] sm:$0xf]
        %v686 = vld [vmem:[%s371 + $0x164] sm:$0xf]
        %v687 = vld [vmem:[%s371 + $0x168] sm:$0xf]
        %v688 = vld [vmem:[%s371 + $0x16c] sm:$0xf]
        %v689 = vld [vmem:[%s371 + $0x170] sm:$0xf]
        %v690 = vld [vmem:[%s371 + $0x174] sm:$0xf]
        %v691 = vld [vmem:[%s371 + $0x178] sm:$0xf]
        %v692 = vld [vmem:[%s371 + $0x17c] sm:$0xf]
        %v693 = vld [vmem:[%s371 + $0x180] sm:$0xf]
        %v694 = vld [vmem:[%s371 + $0x184] sm:$0xf]
        %v695 = vld [vmem:[%s371 + $0x188] sm:$0xf]
        %v696 = vld [vmem:[%s371 + $0x18c] sm:$0xf]
        %v697 = vld [vmem:[%s371 + $0x190] sm:$0xf]
        %v698 = vld [vmem:[%s371 + $0x194] sm:$0xf]
        %v699 = vld [vmem:[%s371 + $0x198] sm:$0xf]
        %v700 = vld [vmem:[%s371 + $0x19c] sm:$0xf]
        %v701 = vld [vmem:[%s371 + $0x1a0] sm:$0xf]
        %v702 = vld [vmem:[%s371 + $0x1a4] sm:$0xf]
        %v703 = vld [vmem:[%s371 + $0x1a8] sm:$0xf]
        %v704 = vld [vmem:[%s371 + $0x1ac] sm:$0xf]
        %v705 = vld [vmem:[%s371 + $0x1b0] sm:$0xf]
        %v706 = vld [vmem:[%s371 + $0x1b4] sm:$0xf]
        %v707 = vld [vmem:[%s371 + $0x1b8] sm:$0xf]
        %v708 = vld [vmem:[%s371 + $0x1bc] sm:$0xf]
        %v709 = vld [vmem:[%s371 + $0x1c0] sm:$0xf]
        %v710 = vld [vmem:[%s371 + $0x1c4] sm:$0xf]
        %v711 = vld [vmem:[%s371 + $0x1c8] sm:$0xf]
        %v712 = vld [vmem:[%s371 + $0x1cc] sm:$0xf]
        %v713 = vld [vmem:[%s371 + $0x1d0] sm:$0xf]
        %v714 = vld [vmem:[%s371 + $0x1d4] sm:$0xf]
        %v715 = vld [vmem:[%s371 + $0x1d8] sm:$0xf]
        %v716 = vld [vmem:[%s371 + $0x1dc] sm:$0xf]
        %v717 = vld [vmem:[%s371 + $0x1e0] sm:$0xf]
        %v718 = vld [vmem:[%s371 + $0x1e4] sm:$0xf]
        %v719 = vld [vmem:[%s371 + $0x1e8] sm:$0xf]
        %v720 = vld [vmem:[%s371 + $0x1ec] sm:$0xf]
        %v721 = vld [vmem:[%s371 + $0x1f0] sm:$0xf]
        %v722 = vld [vmem:[%s371 + $0x1f4] sm:$0xf]
        %v723 = vld [vmem:[%s371 + $0x1f8] sm:$0xf]
        %v724 = vld [vmem:[%s371 + $0x1fc] sm:$0xf]
        %v725 = vld [vmem:[%s371 + $0x200] sm:$0xf]
        %v726 = vld [vmem:[%s371 + $0x204] sm:$0xf]
        %v727 = vld [vmem:[%s371 + $0x208] sm:$0xf]
        %v728 = vld [vmem:[%s371 + $0x20c] sm:$0xf]
        %v729 = vld [vmem:[%s371 + $0x210] sm:$0xf]
        %v730 = vld [vmem:[%s371 + $0x214] sm:$0xf]
        %v731 = vld [vmem:[%s371 + $0x218] sm:$0xf]
        %v732 = vld [vmem:[%s371 + $0x21c] sm:$0xf]
        %v733 = vld [vmem:[%s371 + $0x220] sm:$0xf]
        %v734 = vld [vmem:[%s371 + $0x224] sm:$0xf]
        %v735 = vld [vmem:[%s371 + $0x228] sm:$0xf]
        %v736 = vld [vmem:[%s371 + $0x22c] sm:$0xf]
        %v737 = vld [vmem:[%s371 + $0x230] sm:$0xf]
        %v738 = vld [vmem:[%s371 + $0x234] sm:$0xf]
        %v739 = vld [vmem:[%s371 + $0x238] sm:$0xf]
        %v740 = vld [vmem:[%s371 + $0x23c] sm:$0xf]
        %v741 = vld [vmem:[%s371 + $0x240] sm:$0xf]
        %v742 = vld [vmem:[%s371 + $0x244] sm:$0xf]
        %v743 = vld [vmem:[%s371 + $0x248] sm:$0xf]
        %v744 = vld [vmem:[%s371 + $0x24c] sm:$0xf]
        %v745 = vld [vmem:[%s371 + $0x250] sm:$0xf]
        %v746 = vld [vmem:[%s371 + $0x254] sm:$0xf]
        %v747 = vld [vmem:[%s371 + $0x258] sm:$0xf]
        %v748 = vld [vmem:[%s371 + $0x25c] sm:$0xf]
        %v749 = vld [vmem:[%s371 + $0x260] sm:$0xf]
        %v750 = vld [vmem:[%s371 + $0x264] sm:$0xf]
        %v751 = vld [vmem:[%s371 + $0x268] sm:$0xf]
        %v752 = vld [vmem:[%s371 + $0x26c] sm:$0xf]
        %v753 = vld [vmem:[%s371 + $0x270] sm:$0xf]
        %v754 = vld [vmem:[%s371 + $0x274] sm:$0xf]
        %v755 = vld [vmem:[%s371 + $0x278] sm:$0xf]
        %v756 = vld [vmem:[%s371 + $0x27c] sm:$0xf]
        %v757 = vld [vmem:[%s371 + $0x280] sm:$0xf]
        %v758 = vld [vmem:[%s371 + $0x284] sm:$0xf]
        %v759 = vld [vmem:[%s371 + $0x288] sm:$0xf]
        %v760 = vld [vmem:[%s371 + $0x28c] sm:$0xf]
        %v761 = vld [vmem:[%s371 + $0x290] sm:$0xf]
        %v762 = vld [vmem:[%s371 + $0x294] sm:$0xf]
        %v763 = vld [vmem:[%s371 + $0x298] sm:$0xf]
        %v764 = vld [vmem:[%s371 + $0x29c] sm:$0xf]
        %v765 = vld [vmem:[%s371 + $0x2a0] sm:$0xf]
        %v766 = vld [vmem:[%s371 + $0x2a4] sm:$0xf]
        %v767 = vld [vmem:[%s371 + $0x2a8] sm:$0xf]
        %v768 = vld [vmem:[%s371 + $0x2ac] sm:$0xf]
        %v769 = vld [vmem:[%s371 + $0x2b0] sm:$0xf]
        %v770 = vld [vmem:[%s371 + $0x2b4] sm:$0xf]
        %v771 = vld [vmem:[%s371 + $0x2b8] sm:$0xf]
        %v772 = vld [vmem:[%s371 + $0x2bc] sm:$0xf]
        %v773 = vld [vmem:[%s371 + $0x2c0] sm:$0xf]
        %v774 = vld [vmem:[%s371 + $0x2c4] sm:$0xf]
        %v775 = vld [vmem:[%s371 + $0x2c8] sm:$0xf]
        %v776 = vld [vmem:[%s371 + $0x2cc] sm:$0xf]
        %v777 = vld [vmem:[%s371 + $0x2d0] sm:$0xf]
        %v778 = vld [vmem:[%s371 + $0x2d4] sm:$0xf]
        %v779 = vld [vmem:[%s371 + $0x2d8] sm:$0xf]
        %v780 = vld [vmem:[%s371 + $0x2dc] sm:$0xf]
        %v781 = vld [vmem:[%s371 + $0x2e0] sm:$0xf]
        %v782 = vld [vmem:[%s371 + $0x2e4] sm:$0xf]
        %v783 = vld [vmem:[%s371 + $0x2e8] sm:$0xf]
        %v784 = vld [vmem:[%s371 + $0x2ec] sm:$0xf]
        %v785 = vld [vmem:[%s371 + $0x2f0] sm:$0xf]
        %v786 = vld [vmem:[%s371 + $0x2f4] sm:$0xf]
        %v787 = vld [vmem:[%s371 + $0x2f8] sm:$0xf]
        %v788 = vld [vmem:[%s371 + $0x2fc] sm:$0xf]
        %v789 = vld [vmem:[%s371 + $0x300] sm:$0xf]
        %v790 = vld [vmem:[%s371 + $0x304] sm:$0xf]
        %v791 = vld [vmem:[%s371 + $0x308] sm:$0xf]
        %v792 = vld [vmem:[%s371 + $0x30c] sm:$0xf]
        %v793 = vld [vmem:[%s371 + $0x310] sm:$0xf]
        %v794 = vld [vmem:[%s371 + $0x314] sm:$0xf]
        %v795 = vld [vmem:[%s371 + $0x318] sm:$0xf]
        %v796 = vld [vmem:[%s371 + $0x31c] sm:$0xf]
        %v797 = vld [vmem:[%s371 + $0x320] sm:$0xf]
        %v798 = vld [vmem:[%s371 + $0x324] sm:$0xf]
        %v799 = vld [vmem:[%s371 + $0x328] sm:$0xf]
        %v800 = vld [vmem:[%s371 + $0x32c] sm:$0xf]
        %v801 = vld [vmem:[%s371 + $0x330] sm:$0xf]
        %v802 = vld [vmem:[%s371 + $0x334] sm:$0xf]
        %v803 = vld [vmem:[%s371 + $0x338] sm:$0xf]
        %v804 = vld [vmem:[%s371 + $0x33c] sm:$0xf]
        %v805 = vld [vmem:[%s371 + $0x340] sm:$0xf]
        %v806 = vld [vmem:[%s371 + $0x344] sm:$0xf]
        %v807 = vld [vmem:[%s371 + $0x348] sm:$0xf]
        %v808 = vld [vmem:[%s371 + $0x34c] sm:$0xf]
        %v809 = vld [vmem:[%s371 + $0x350] sm:$0xf]
        %v810 = vld [vmem:[%s371 + $0x354] sm:$0xf]
        %v811 = vld [vmem:[%s371 + $0x358] sm:$0xf]
        %v812 = vld [vmem:[%s371 + $0x35c] sm:$0xf]
        %v813 = vld [vmem:[%s371 + $0x360] sm:$0xf]
        %v814 = vld [vmem:[%s371 + $0x364] sm:$0xf]
        %v815 = vld [vmem:[%s371 + $0x368] sm:$0xf]
        %v816 = vld [vmem:[%s371 + $0x36c] sm:$0xf]
        %v817 = vld [vmem:[%s371 + $0x370] sm:$0xf]
        %v818 = vld [vmem:[%s371 + $0x374] sm:$0xf]
        %v819 = vld [vmem:[%s371 + $0x378] sm:$0xf]
        %v820 = vld [vmem:[%s371 + $0x37c] sm:$0xf]
        %v821 = vld [vmem:[%s371 + $0x380] sm:$0xf]
        %v822 = vld [vmem:[%s371 + $0x384] sm:$0xf]
        %v823 = vld [vmem:[%s371 + $0x388] sm:$0xf]
        %v824 = vld [vmem:[%s371 + $0x38c] sm:$0xf]
        %v825 = vld [vmem:[%s371 + $0x390] sm:$0xf]
        %v826 = vld [vmem:[%s371 + $0x394] sm:$0xf]
        %v827 = vld [vmem:[%s371 + $0x398] sm:$0xf]
        %v828 = vld [vmem:[%s371 + $0x39c] sm:$0xf]
        %v829 = vld [vmem:[%s371 + $0x3a0] sm:$0xf]
        %v830 = vld [vmem:[%s371 + $0x3a4] sm:$0xf]
        %v831 = vld [vmem:[%s371 + $0x3a8] sm:$0xf]
        %v832 = vld [vmem:[%s371 + $0x3ac] sm:$0xf]
        %v833 = vld [vmem:[%s371 + $0x3b0] sm:$0xf]
        %v834 = vld [vmem:[%s371 + $0x3b4] sm:$0xf]
        %v835 = vld [vmem:[%s371 + $0x3b8] sm:$0xf]
        %v836 = vld [vmem:[%s371 + $0x3bc] sm:$0xf]
        %v837 = vld [vmem:[%s371 + $0x3c0] sm:$0xf]
        %v838 = vld [vmem:[%s371 + $0x3c4] sm:$0xf]
        %v839 = vld [vmem:[%s371 + $0x3c8] sm:$0xf]
        %v840 = vld [vmem:[%s371 + $0x3cc] sm:$0xf]
        %v841 = vld [vmem:[%s371 + $0x3d0] sm:$0xf]
        %v842 = vld [vmem:[%s371 + $0x3d4] sm:$0xf]
        %v843 = vld [vmem:[%s371 + $0x3d8] sm:$0xf]
        %v844 = vld [vmem:[%s371 + $0x3dc] sm:$0xf]
        %v845 = vld [vmem:[%s371 + $0x3e0] sm:$0xf]
        %v846 = vld [vmem:[%s371 + $0x3e4] sm:$0xf]
        %v847 = vld [vmem:[%s371 + $0x3e8] sm:$0xf]
        %v848 = vld [vmem:[%s371 + $0x3ec] sm:$0xf]
        %v849 = vld [vmem:[%s371 + $0x3f0] sm:$0xf]
        %v850 = vld [vmem:[%s371 + $0x3f4] sm:$0xf]
        %v851 = vld [vmem:[%s371 + $0x3f8] sm:$0xf]
        %v852 = vld [vmem:[%s371 + $0x3fc] sm:$0xf]
        %v853 = vld [vmem:[%s371 + $0x400] sm:$0xf]
        %v854 = vld [vmem:[%s371 + $0x404] sm:$0xf]
        %v855 = vld [vmem:[%s371 + $0x408] sm:$0xf]
        %v856 = vld [vmem:[%s371 + $0x40c] sm:$0xf]
        %v857 = vld [vmem:[%s371 + $0x410] sm:$0xf]
        %v858 = vld [vmem:[%s371 + $0x414] sm:$0xf]
        %v859 = vld [vmem:[%s371 + $0x418] sm:$0xf]
        %v860 = vld [vmem:[%s371 + $0x41c] sm:$0xf]
        %v861 = vld [vmem:[%s371 + $0x420] sm:$0xf]
        %v862 = vld [vmem:[%s371 + $0x424] sm:$0xf]
        %v863 = vld [vmem:[%s371 + $0x428] sm:$0xf]
        %v864 = vld [vmem:[%s371 + $0x42c] sm:$0xf]
        %v865 = vld [vmem:[%s371 + $0x430] sm:$0xf]
        %v866 = vld [vmem:[%s371 + $0x434] sm:$0xf]
        %v867 = vld [vmem:[%s371 + $0x438] sm:$0xf]
        %v868 = vld [vmem:[%s371 + $0x43c] sm:$0xf]
        %v869 = vld [vmem:[%s371 + $0x440] sm:$0xf]
        %v870 = vld [vmem:[%s371 + $0x444] sm:$0xf]
        %v871 = vld [vmem:[%s371 + $0x448] sm:$0xf]
        %v872 = vld [vmem:[%s371 + $0x44c] sm:$0xf]
        %v873 = vld [vmem:[%s371 + $0x450] sm:$0xf]
        %v874 = vld [vmem:[%s371 + $0x454] sm:$0xf]
        %v875 = vld [vmem:[%s371 + $0x458] sm:$0xf]
        %v876 = vld [vmem:[%s371 + $0x45c] sm:$0xf]
        %v877 = vld [vmem:[%s371 + $0x460] sm:$0xf]
        %v878 = vld [vmem:[%s371 + $0x464] sm:$0xf]
        %v879 = vld [vmem:[%s371 + $0x468] sm:$0xf]
        %v880 = vld [vmem:[%s371 + $0x46c] sm:$0xf]
        %v881 = vld [vmem:[%s371 + $0x470] sm:$0xf]
        %v882 = vld [vmem:[%s371 + $0x474] sm:$0xf]
        %v883 = vld [vmem:[%s371 + $0x478] sm:$0xf]
        %v884 = vld [vmem:[%s371 + $0x47c] sm:$0xf]
        %v885 = vld [vmem:[%s371 + $0x480] sm:$0xf]
        %v886 = vld [vmem:[%s371 + $0x484] sm:$0xf]
        %v887 = vld [vmem:[%s371 + $0x488] sm:$0xf]
        %v888 = vld [vmem:[%s371 + $0x48c] sm:$0xf]
        %v889 = vld [vmem:[%s371 + $0x490] sm:$0xf]
        %v890 = vld [vmem:[%s371 + $0x494] sm:$0xf]
        %v891 = vld [vmem:[%s371 + $0x498] sm:$0xf]
        %v892 = vld [vmem:[%s371 + $0x49c] sm:$0xf]
        %v893 = vld [vmem:[%s371 + $0x4a0] sm:$0xf]
        %v894 = vld [vmem:[%s371 + $0x4a4] sm:$0xf]
        %v895 = vld [vmem:[%s371 + $0x4a8] sm:$0xf]
        %v896 = vld [vmem:[%s371 + $0x4ac] sm:$0xf]
        %v897 = vld [vmem:[%s371 + $0x4b0] sm:$0xf]
        %v898 = vld [vmem:[%s371 + $0x4b4] sm:$0xf]
        %v899 = vld [vmem:[%s371 + $0x4b8] sm:$0xf]
        %v900 = vld [vmem:[%s371 + $0x4bc] sm:$0xf]
        %v901 = vld [vmem:[%s371 + $0x4c0] sm:$0xf]
        %v902 = vld [vmem:[%s371 + $0x4c4] sm:$0xf]
        %v903 = vld [vmem:[%s371 + $0x4c8] sm:$0xf]
        %v904 = vld [vmem:[%s371 + $0x4cc] sm:$0xf]
        %v905 = vld [vmem:[%s371 + $0x4d0] sm:$0xf]
        %v906 = vld [vmem:[%s371 + $0x4d4] sm:$0xf]
        %v907 = vld [vmem:[%s371 + $0x4d8] sm:$0xf]
        %v908 = vld [vmem:[%s371 + $0x4dc] sm:$0xf]
        %v909 = vld [vmem:[%s371 + $0x4e0] sm:$0xf]
        %v910 = vld [vmem:[%s371 + $0x4e4] sm:$0xf]
        %v911 = vld [vmem:[%s371 + $0x4e8] sm:$0xf]
        %v912 = vld [vmem:[%s371 + $0x4ec] sm:$0xf]
        %v913 = vld [vmem:[%s371 + $0x4f0] sm:$0xf]
        %v914 = vld [vmem:[%s371 + $0x4f4] sm:$0xf]
        %v915 = vld [vmem:[%s371 + $0x4f8] sm:$0xf]
        %v916 = vld [vmem:[%s371 + $0x4fc] sm:$0xf]
        %v917 = vld [vmem:[%s371 + $0x500] sm:$0xf]
        %v918 = vld [vmem:[%s371 + $0x504] sm:$0xf]
        %v919 = vld [vmem:[%s371 + $0x508] sm:$0xf]
        %v920 = vld [vmem:[%s371 + $0x50c] sm:$0xf]
        %v921 = vld [vmem:[%s371 + $0x510] sm:$0xf]
        %v922 = vld [vmem:[%s371 + $0x514] sm:$0xf]
        %v923 = vld [vmem:[%s371 + $0x518] sm:$0xf]
        %v924 = vld [vmem:[%s371 + $0x51c] sm:$0xf]
        %v925 = vld [vmem:[%s371 + $0x520] sm:$0xf]
        %v926 = vld [vmem:[%s371 + $0x524] sm:$0xf]
        %v927 = vld [vmem:[%s371 + $0x528] sm:$0xf]
        %v928 = vld [vmem:[%s371 + $0x52c] sm:$0xf]
        %v929 = vld [vmem:[%s371 + $0x530] sm:$0xf]
        %v930 = vld [vmem:[%s371 + $0x534] sm:$0xf]
        %v931 = vld [vmem:[%s371 + $0x538] sm:$0xf]
        %v932 = vld [vmem:[%s371 + $0x53c] sm:$0xf]
        %v933 = vld [vmem:[%s371 + $0x540] sm:$0xf]
        %v934 = vld [vmem:[%s371 + $0x544] sm:$0xf]
        %v935 = vld [vmem:[%s371 + $0x548] sm:$0xf]
        %v936 = vld [vmem:[%s371 + $0x54c] sm:$0xf]
        %v937 = vld [vmem:[%s371 + $0x550] sm:$0xf]
        %v938 = vld [vmem:[%s371 + $0x554] sm:$0xf]
        %v939 = vld [vmem:[%s371 + $0x558] sm:$0xf]
        %v940 = vld [vmem:[%s371 + $0x55c] sm:$0xf]
        %v941 = vld [vmem:[%s371 + $0x560] sm:$0xf]
        %v942 = vld [vmem:[%s371 + $0x564] sm:$0xf]
        %v943 = vld [vmem:[%s371 + $0x568] sm:$0xf]
        %v944 = vld [vmem:[%s371 + $0x56c] sm:$0xf]
        %v945 = vld [vmem:[%s371 + $0x570] sm:$0xf]
        %v946 = vld [vmem:[%s371 + $0x574] sm:$0xf]
        %v947 = vld [vmem:[%s371 + $0x578] sm:$0xf]
        %v948 = vld [vmem:[%s371 + $0x57c] sm:$0xf]
        %v1301 = vunpack.c.l.b16 %v597
        %v1302 = vunpack.c.l.b16 %v598
        %v1303 = vunpack.c.l.b16 %v599
        %v1304 = vunpack.c.l.b16 %v600
        %v1305 = vunpack.c.l.b16 %v601
        %v1306 = vunpack.c.l.b16 %v602
        %v1307 = vunpack.c.l.b16 %v603
        %v1308 = vunpack.c.l.b16 %v604
        %v1309 = vunpack.c.l.b16 %v605
        %v1310 = vunpack.c.l.b16 %v606
        %v1311 = vunpack.c.l.b16 %v607
        %v1312 = vunpack.c.l.b16 %v608
        %v1313 = vunpack.c.l.b16 %v609
        %v1314 = vunpack.c.l.b16 %v610
        %v1315 = vunpack.c.l.b16 %v611
        %v1316 = vunpack.c.l.b16 %v612
        %v1317 = vunpack.c.l.b16 %v613
        %v1318 = vunpack.c.l.b16 %v614
        %v1319 = vunpack.c.l.b16 %v615
        %v1320 = vunpack.c.l.b16 %v616
        %v1321 = vunpack.c.l.b16 %v617
        %v1322 = vunpack.c.l.b16 %v618
        %v1323 = vunpack.c.l.b16 %v619
        %v1324 = vunpack.c.l.b16 %v620
        %v1325 = vunpack.c.l.b16 %v621
        %v1326 = vunpack.c.l.b16 %v622
        %v1327 = vunpack.c.l.b16 %v623
        %v1328 = vunpack.c.l.b16 %v624
        %v1329 = vunpack.c.l.b16 %v625
        %v1330 = vunpack.c.l.b16 %v626
        %v1331 = vunpack.c.l.b16 %v627
        %v1332 = vunpack.c.l.b16 %v628
        %v1333 = vunpack.c.l.b16 %v629
        %v1334 = vunpack.c.l.b16 %v630
        %v1335 = vunpack.c.l.b16 %v631
        %v1336 = vunpack.c.l.b16 %v632
        %v1337 = vunpack.c.l.b16 %v633
        %v1338 = vunpack.c.l.b16 %v634
        %v1339 = vunpack.c.l.b16 %v635
        %v1340 = vunpack.c.l.b16 %v636
        %v1341 = vunpack.c.l.b16 %v637
        %v1342 = vunpack.c.l.b16 %v638
        %v1343 = vunpack.c.l.b16 %v639
        %v1344 = vunpack.c.l.b16 %v640
        %v1345 = vunpack.c.l.b16 %v641
        %v1346 = vunpack.c.l.b16 %v642
        %v1347 = vunpack.c.l.b16 %v643
        %v1348 = vunpack.c.l.b16 %v644
        %v1349 = vunpack.c.l.b16 %v645
        %v1350 = vunpack.c.l.b16 %v646
        %v1351 = vunpack.c.l.b16 %v647
        %v1352 = vunpack.c.l.b16 %v648
        %v1353 = vunpack.c.l.b16 %v649
        %v1354 = vunpack.c.l.b16 %v650
        %v1355 = vunpack.c.l.b16 %v651
        %v1356 = vunpack.c.l.b16 %v652
        %v1357 = vunpack.c.l.b16 %v653
        %v1358 = vunpack.c.l.b16 %v654
        %v1359 = vunpack.c.l.b16 %v655
        %v1360 = vunpack.c.l.b16 %v656
        %v1361 = vunpack.c.l.b16 %v657
        %v1362 = vunpack.c.l.b16 %v658
        %v1363 = vunpack.c.l.b16 %v659
        %v1364 = vunpack.c.l.b16 %v660
        %v1365 = vunpack.c.l.b16 %v661
        %v1366 = vunpack.c.l.b16 %v662
        %v1367 = vunpack.c.l.b16 %v663
        %v1368 = vunpack.c.l.b16 %v664
        %v1369 = vunpack.c.l.b16 %v665
        %v1370 = vunpack.c.l.b16 %v666
        %v1371 = vunpack.c.l.b16 %v667
        %v1372 = vunpack.c.l.b16 %v668
        %v1373 = vunpack.c.l.b16 %v669
        %v1374 = vunpack.c.l.b16 %v670
        %v1375 = vunpack.c.l.b16 %v671
        %v1376 = vunpack.c.l.b16 %v672
        %v1377 = vunpack.c.l.b16 %v673
        %v1378 = vunpack.c.l.b16 %v674
        %v1379 = vunpack.c.l.b16 %v675
        %v1380 = vunpack.c.l.b16 %v676
        %v1381 = vunpack.c.l.b16 %v677
        %v1382 = vunpack.c.l.b16 %v678
        %v1383 = vunpack.c.l.b16 %v679
        %v1384 = vunpack.c.l.b16 %v680
        %v1385 = vunpack.c.l.b16 %v681
        %v1386 = vunpack.c.l.b16 %v682
        %v1387 = vunpack.c.l.b16 %v683
        %v1388 = vunpack.c.l.b16 %v684
        %v1389 = vunpack.c.l.b16 %v685
        %v1390 = vunpack.c.l.b16 %v686
        %v1391 = vunpack.c.l.b16 %v687
        %v1392 = vunpack.c.l.b16 %v688
        %v1393 = vunpack.c.l.b16 %v689
        %v1394 = vunpack.c.l.b16 %v690
        %v1395 = vunpack.c.l.b16 %v691
        %v1396 = vunpack.c.l.b16 %v692
        %v1397 = vunpack.c.l.b16 %v693
        %v1398 = vunpack.c.l.b16 %v694
        %v1399 = vunpack.c.l.b16 %v695
        %v1400 = vunpack.c.l.b16 %v696
        %v1401 = vunpack.c.l.b16 %v697
        %v1402 = vunpack.c.l.b16 %v698
        %v1403 = vunpack.c.l.b16 %v699
        %v1404 = vunpack.c.l.b16 %v700
        %v1405 = vunpack.c.l.b16 %v701
        %v1406 = vunpack.c.l.b16 %v702
        %v1407 = vunpack.c.l.b16 %v703
        %v1408 = vunpack.c.l.b16 %v704
        %v1409 = vunpack.c.l.b16 %v705
        %v1410 = vunpack.c.l.b16 %v706
        %v1411 = vunpack.c.l.b16 %v707
        %v1412 = vunpack.c.l.b16 %v708
        %v1413 = vunpack.c.l.b16 %v709
        %v1414 = vunpack.c.l.b16 %v710
        %v1415 = vunpack.c.l.b16 %v711
        %v1416 = vunpack.c.l.b16 %v712
        %v1417 = vunpack.c.l.b16 %v713
        %v1418 = vunpack.c.l.b16 %v714
        %v1419 = vunpack.c.l.b16 %v715
        %v1420 = vunpack.c.l.b16 %v716
        %v1421 = vunpack.c.l.b16 %v717
        %v1422 = vunpack.c.l.b16 %v718
        %v1423 = vunpack.c.l.b16 %v719
        %v1424 = vunpack.c.l.b16 %v720
        %v1425 = vunpack.c.l.b16 %v721
        %v1426 = vunpack.c.l.b16 %v722
        %v1427 = vunpack.c.l.b16 %v723
        %v1428 = vunpack.c.l.b16 %v724
        %v1429 = vunpack.c.l.b16 %v725
        %v1430 = vunpack.c.l.b16 %v726
        %v1431 = vunpack.c.l.b16 %v727
        %v1432 = vunpack.c.l.b16 %v728
        %v1433 = vunpack.c.l.b16 %v729
        %v1434 = vunpack.c.l.b16 %v730
        %v1435 = vunpack.c.l.b16 %v731
        %v1436 = vunpack.c.l.b16 %v732
        %v1437 = vunpack.c.l.b16 %v733
        %v1438 = vunpack.c.l.b16 %v734
        %v1439 = vunpack.c.l.b16 %v735
        %v1440 = vunpack.c.l.b16 %v736
        %v1441 = vunpack.c.l.b16 %v737
        %v1442 = vunpack.c.l.b16 %v738
        %v1443 = vunpack.c.l.b16 %v739
        %v1444 = vunpack.c.l.b16 %v740
        %v1445 = vunpack.c.l.b16 %v741
        %v1446 = vunpack.c.l.b16 %v742
        %v1447 = vunpack.c.l.b16 %v743
        %v1448 = vunpack.c.l.b16 %v744
        %v1449 = vunpack.c.l.b16 %v745
        %v1450 = vunpack.c.l.b16 %v746
        %v1451 = vunpack.c.l.b16 %v747
        %v1452 = vunpack.c.l.b16 %v748
        %v1453 = vunpack.c.l.b16 %v749
        %v1454 = vunpack.c.l.b16 %v750
        %v1455 = vunpack.c.l.b16 %v751
        %v1456 = vunpack.c.l.b16 %v752
        %v1457 = vunpack.c.l.b16 %v753
        %v1458 = vunpack.c.l.b16 %v754
        %v1459 = vunpack.c.l.b16 %v755
        %v1460 = vunpack.c.l.b16 %v756
        %v1461 = vunpack.c.l.b16 %v757
        %v1462 = vunpack.c.l.b16 %v758
        %v1463 = vunpack.c.l.b16 %v759
        %v1464 = vunpack.c.l.b16 %v760
        %v1465 = vunpack.c.l.b16 %v761
        %v1466 = vunpack.c.l.b16 %v762
        %v1467 = vunpack.c.l.b16 %v763
        %v1468 = vunpack.c.l.b16 %v764
        %v1469 = vunpack.c.l.b16 %v765
        %v1470 = vunpack.c.l.b16 %v766
        %v1471 = vunpack.c.l.b16 %v767
        %v1472 = vunpack.c.l.b16 %v768
        %v1473 = vunpack.c.l.b16 %v769
        %v1474 = vunpack.c.l.b16 %v770
        %v1475 = vunpack.c.l.b16 %v771
        %v1476 = vunpack.c.l.b16 %v772
        %v1477 = vunpack.c.l.b16 %v773
        %v1478 = vunpack.c.l.b16 %v774
        %v1479 = vunpack.c.l.b16 %v775
        %v1480 = vunpack.c.l.b16 %v776
        %v1481 = vunpack.c.l.b16 %v777
        %v1482 = vunpack.c.l.b16 %v778
        %v1483 = vunpack.c.l.b16 %v779
        %v1484 = vunpack.c.l.b16 %v780
        %v1485 = vunpack.c.l.b16 %v781
        %v1486 = vunpack.c.l.b16 %v782
        %v1487 = vunpack.c.l.b16 %v783
        %v1488 = vunpack.c.l.b16 %v784
        %v1489 = vunpack.c.l.b16 %v785
        %v1490 = vunpack.c.l.b16 %v786
        %v1491 = vunpack.c.l.b16 %v787
        %v1492 = vunpack.c.l.b16 %v788
        %v1493 = vunpack.c.l.b16 %v789
        %v1494 = vunpack.c.l.b16 %v790
        %v1495 = vunpack.c.l.b16 %v791
        %v1496 = vunpack.c.l.b16 %v792
        %v1497 = vunpack.c.l.b16 %v793
        %v1498 = vunpack.c.l.b16 %v794
        %v1499 = vunpack.c.l.b16 %v795
        %v1500 = vunpack.c.l.b16 %v796
        %v1501 = vunpack.c.l.b16 %v797
        %v1502 = vunpack.c.l.b16 %v798
        %v1503 = vunpack.c.l.b16 %v799
        %v1504 = vunpack.c.l.b16 %v800
        %v1505 = vunpack.c.l.b16 %v801
        %v1506 = vunpack.c.l.b16 %v802
        %v1507 = vunpack.c.l.b16 %v803
        %v1508 = vunpack.c.l.b16 %v804
        %v1509 = vunpack.c.l.b16 %v805
        %v1510 = vunpack.c.l.b16 %v806
        %v1511 = vunpack.c.l.b16 %v807
        %v1512 = vunpack.c.l.b16 %v808
        %v1513 = vunpack.c.l.b16 %v809
        %v1514 = vunpack.c.l.b16 %v810
        %v1515 = vunpack.c.l.b16 %v811
        %v1516 = vunpack.c.l.b16 %v812
        %v1517 = vunpack.c.l.b16 %v813
        %v1518 = vunpack.c.l.b16 %v814
        %v1519 = vunpack.c.l.b16 %v815
        %v1520 = vunpack.c.l.b16 %v816
        %v1521 = vunpack.c.l.b16 %v817
        %v1522 = vunpack.c.l.b16 %v818
        %v1523 = vunpack.c.l.b16 %v819
        %v1524 = vunpack.c.l.b16 %v820
        %v1525 = vunpack.c.l.b16 %v821
        %v1526 = vunpack.c.l.b16 %v822
        %v1527 = vunpack.c.l.b16 %v823
        %v1528 = vunpack.c.l.b16 %v824
        %v1529 = vunpack.c.l.b16 %v825
        %v1530 = vunpack.c.l.b16 %v826
        %v1531 = vunpack.c.l.b16 %v827
        %v1532 = vunpack.c.l.b16 %v828
        %v1533 = vunpack.c.l.b16 %v829
        %v1534 = vunpack.c.l.b16 %v830
        %v1535 = vunpack.c.l.b16 %v831
        %v1536 = vunpack.c.l.b16 %v832
        %v1537 = vunpack.c.l.b16 %v833
        %v1538 = vunpack.c.l.b16 %v834
        %v1539 = vunpack.c.l.b16 %v835
        %v1540 = vunpack.c.l.b16 %v836
        %v1541 = vunpack.c.l.b16 %v837
        %v1542 = vunpack.c.l.b16 %v838
        %v1543 = vunpack.c.l.b16 %v839
        %v1544 = vunpack.c.l.b16 %v840
        %v1545 = vunpack.c.l.b16 %v841
        %v1546 = vunpack.c.l.b16 %v842
        %v1547 = vunpack.c.l.b16 %v843
        %v1548 = vunpack.c.l.b16 %v844
        %v1549 = vunpack.c.l.b16 %v845
        %v1550 = vunpack.c.l.b16 %v846
        %v1551 = vunpack.c.l.b16 %v847
        %v1552 = vunpack.c.l.b16 %v848
        %v1553 = vunpack.c.l.b16 %v849
        %v1554 = vunpack.c.l.b16 %v850
        %v1555 = vunpack.c.l.b16 %v851
        %v1556 = vunpack.c.l.b16 %v852
        %v1557 = vunpack.c.l.b16 %v853
        %v1558 = vunpack.c.l.b16 %v854
        %v1559 = vunpack.c.l.b16 %v855
        %v1560 = vunpack.c.l.b16 %v856
        %v1561 = vunpack.c.l.b16 %v857
        %v1562 = vunpack.c.l.b16 %v858
        %v1563 = vunpack.c.l.b16 %v859
        %v1564 = vunpack.c.l.b16 %v860
        %v1565 = vunpack.c.l.b16 %v861
        %v1566 = vunpack.c.l.b16 %v862
        %v1567 = vunpack.c.l.b16 %v863
        %v1568 = vunpack.c.l.b16 %v864
        %v1569 = vunpack.c.l.b16 %v865
        %v1570 = vunpack.c.l.b16 %v866
        %v1571 = vunpack.c.l.b16 %v867
        %v1572 = vunpack.c.l.b16 %v868
        %v1573 = vunpack.c.l.b16 %v869
        %v1574 = vunpack.c.l.b16 %v870
        %v1575 = vunpack.c.l.b16 %v871
        %v1576 = vunpack.c.l.b16 %v872
        %v1577 = vunpack.c.l.b16 %v873
        %v1578 = vunpack.c.l.b16 %v874
        %v1579 = vunpack.c.l.b16 %v875
        %v1580 = vunpack.c.l.b16 %v876
        %v1581 = vunpack.c.l.b16 %v877
        %v1582 = vunpack.c.l.b16 %v878
        %v1583 = vunpack.c.l.b16 %v879
        %v1584 = vunpack.c.l.b16 %v880
        %v1585 = vunpack.c.l.b16 %v881
        %v1586 = vunpack.c.l.b16 %v882
        %v1587 = vunpack.c.l.b16 %v883
        %v1588 = vunpack.c.l.b16 %v884
        %v1589 = vunpack.c.l.b16 %v885
        %v1590 = vunpack.c.l.b16 %v886
        %v1591 = vunpack.c.l.b16 %v887
        %v1592 = vunpack.c.l.b16 %v888
        %v1593 = vunpack.c.l.b16 %v889
        %v1594 = vunpack.c.l.b16 %v890
        %v1595 = vunpack.c.l.b16 %v891
        %v1596 = vunpack.c.l.b16 %v892
        %v1597 = vunpack.c.l.b16 %v893
        %v1598 = vunpack.c.l.b16 %v894
        %v1599 = vunpack.c.l.b16 %v895
        %v1600 = vunpack.c.l.b16 %v896
        %v1601 = vunpack.c.l.b16 %v897
        %v1602 = vunpack.c.l.b16 %v898
        %v1603 = vunpack.c.l.b16 %v899
        %v1604 = vunpack.c.l.b16 %v900
        %v1605 = vunpack.c.l.b16 %v901
        %v1606 = vunpack.c.l.b16 %v902
        %v1607 = vunpack.c.l.b16 %v903
        %v1608 = vunpack.c.l.b16 %v904
        %v1609 = vunpack.c.l.b16 %v905
        %v1610 = vunpack.c.l.b16 %v906
        %v1611 = vunpack.c.l.b16 %v907
        %v1612 = vunpack.c.l.b16 %v908
        %v1613 = vunpack.c.l.b16 %v909
        %v1614 = vunpack.c.l.b16 %v910
        %v1615 = vunpack.c.l.b16 %v911
        %v1616 = vunpack.c.l.b16 %v912
        %v1617 = vunpack.c.l.b16 %v913
        %v1618 = vunpack.c.l.b16 %v914
        %v1619 = vunpack.c.l.b16 %v915
        %v1620 = vunpack.c.l.b16 %v916
        %v1621 = vunpack.c.l.b16 %v917
        %v1622 = vunpack.c.l.b16 %v918
        %v1623 = vunpack.c.l.b16 %v919
        %v1624 = vunpack.c.l.b16 %v920
        %v1625 = vunpack.c.l.b16 %v921
        %v1626 = vunpack.c.l.b16 %v922
        %v1627 = vunpack.c.l.b16 %v923
        %v1628 = vunpack.c.l.b16 %v924
        %v1629 = vunpack.c.l.b16 %v925
        %v1630 = vunpack.c.l.b16 %v926
        %v1631 = vunpack.c.l.b16 %v927
        %v1632 = vunpack.c.l.b16 %v928
        %v1633 = vunpack.c.l.b16 %v929
        %v1634 = vunpack.c.l.b16 %v930
        %v1635 = vunpack.c.l.b16 %v931
        %v1636 = vunpack.c.l.b16 %v932
        %v1637 = vunpack.c.l.b16 %v933
        %v1638 = vunpack.c.l.b16 %v934
        %v1639 = vunpack.c.l.b16 %v935
        %v1640 = vunpack.c.l.b16 %v936
        %v1641 = vunpack.c.l.b16 %v937
        %v1642 = vunpack.c.l.b16 %v938
        %v1643 = vunpack.c.l.b16 %v939
        %v1644 = vunpack.c.l.b16 %v940
        %v1645 = vunpack.c.l.b16 %v941
        %v1646 = vunpack.c.l.b16 %v942
        %v1647 = vunpack.c.l.b16 %v943
        %v1648 = vunpack.c.l.b16 %v944
        %v1649 = vunpack.c.l.b16 %v945
        %v1650 = vunpack.c.l.b16 %v946
        %v1651 = vunpack.c.l.b16 %v947
        %v1652 = vunpack.c.l.b16 %v948
        %v1653 = vpack.c.b16 %v1302, %v1301
        %v1654 = vpack.c.b16 %v1304, %v1303
        %v1655 = vpack.c.b16 %v1306, %v1305
        %v1656 = vpack.c.b16 %v1308, %v1307
        %v1657 = vpack.c.b16 %v1310, %v1309
        %v1658 = vpack.c.b16 %v1312, %v1311
        %v1659 = vpack.c.b16 %v1314, %v1313
        %v1660 = vpack.c.b16 %v1316, %v1315
        %v1661 = vpack.c.b16 %v1318, %v1317
        %v1662 = vpack.c.b16 %v1320, %v1319
        %v1663 = vpack.c.b16 %v1322, %v1321
        %v1664 = vpack.c.b16 %v1324, %v1323
        %v1665 = vpack.c.b16 %v1326, %v1325
        %v1666 = vpack.c.b16 %v1328, %v1327
        %v1667 = vpack.c.b16 %v1330, %v1329
        %v1668 = vpack.c.b16 %v1332, %v1331
        %v1669 = vpack.c.b16 %v1334, %v1333
        %v1670 = vpack.c.b16 %v1336, %v1335
        %v1671 = vpack.c.b16 %v1338, %v1337
        %v1672 = vpack.c.b16 %v1340, %v1339
        %v1673 = vpack.c.b16 %v1342, %v1341
        %v1674 = vpack.c.b16 %v1344, %v1343
        %v1675 = vpack.c.b16 %v1346, %v1345
        %v1676 = vpack.c.b16 %v1348, %v1347
        %v1677 = vpack.c.b16 %v1350, %v1349
        %v1678 = vpack.c.b16 %v1352, %v1351
        %v1679 = vpack.c.b16 %v1354, %v1353
        %v1680 = vpack.c.b16 %v1356, %v1355
        %v1681 = vpack.c.b16 %v1358, %v1357
        %v1682 = vpack.c.b16 %v1360, %v1359
        %v1683 = vpack.c.b16 %v1362, %v1361
        %v1684 = vpack.c.b16 %v1364, %v1363
        %v1685 = vpack.c.b16 %v1366, %v1365
        %v1686 = vpack.c.b16 %v1368, %v1367
        %v1687 = vpack.c.b16 %v1370, %v1369
        %v1688 = vpack.c.b16 %v1372, %v1371
        %v1689 = vpack.c.b16 %v1374, %v1373
        %v1690 = vpack.c.b16 %v1376, %v1375
        %v1691 = vpack.c.b16 %v1378, %v1377
        %v1692 = vpack.c.b16 %v1380, %v1379
        %v1693 = vpack.c.b16 %v1382, %v1381
        %v1694 = vpack.c.b16 %v1384, %v1383
        %v1695 = vpack.c.b16 %v1386, %v1385
        %v1696 = vpack.c.b16 %v1388, %v1387
        %v1697 = vpack.c.b16 %v1390, %v1389
        %v1698 = vpack.c.b16 %v1392, %v1391
        %v1699 = vpack.c.b16 %v1394, %v1393
        %v1700 = vpack.c.b16 %v1396, %v1395
        %v1701 = vpack.c.b16 %v1398, %v1397
        %v1702 = vpack.c.b16 %v1400, %v1399
        %v1703 = vpack.c.b16 %v1402, %v1401
        %v1704 = vpack.c.b16 %v1404, %v1403
        %v1705 = vpack.c.b16 %v1406, %v1405
        %v1706 = vpack.c.b16 %v1408, %v1407
        %v1707 = vpack.c.b16 %v1410, %v1409
        %v1708 = vpack.c.b16 %v1412, %v1411
        %v1709 = vpack.c.b16 %v1414, %v1413
        %v1710 = vpack.c.b16 %v1416, %v1415
        %v1711 = vpack.c.b16 %v1418, %v1417
        %v1712 = vpack.c.b16 %v1420, %v1419
        %v1713 = vpack.c.b16 %v1422, %v1421
        %v1714 = vpack.c.b16 %v1424, %v1423
        %v1715 = vpack.c.b16 %v1426, %v1425
        %v1716 = vpack.c.b16 %v1428, %v1427
        %v1717 = vpack.c.b16 %v1430, %v1429
        %v1718 = vpack.c.b16 %v1432, %v1431
        %v1719 = vpack.c.b16 %v1434, %v1433
        %v1720 = vpack.c.b16 %v1436, %v1435
        %v1721 = vpack.c.b16 %v1438, %v1437
        %v1722 = vpack.c.b16 %v1440, %v1439
        %v1723 = vpack.c.b16 %v1442, %v1441
        %v1724 = vpack.c.b16 %v1444, %v1443
        %v1725 = vpack.c.b16 %v1446, %v1445
        %v1726 = vpack.c.b16 %v1448, %v1447
        %v1727 = vpack.c.b16 %v1450, %v1449
        %v1728 = vpack.c.b16 %v1452, %v1451
        %v1729 = vpack.c.b16 %v1454, %v1453
        %v1730 = vpack.c.b16 %v1456, %v1455
        %v1731 = vpack.c.b16 %v1458, %v1457
        %v1732 = vpack.c.b16 %v1460, %v1459
        %v1733 = vpack.c.b16 %v1462, %v1461
        %v1734 = vpack.c.b16 %v1464, %v1463
        %v1735 = vpack.c.b16 %v1466, %v1465
        %v1736 = vpack.c.b16 %v1468, %v1467
        %v1737 = vpack.c.b16 %v1470, %v1469
        %v1738 = vpack.c.b16 %v1472, %v1471
        %v1739 = vpack.c.b16 %v1474, %v1473
        %v1740 = vpack.c.b16 %v1476, %v1475
        %v1741 = vpack.c.b16 %v1478, %v1477
        %v1742 = vpack.c.b16 %v1480, %v1479
        %v1743 = vpack.c.b16 %v1482, %v1481
        %v1744 = vpack.c.b16 %v1484, %v1483
        %v1745 = vpack.c.b16 %v1486, %v1485
        %v1746 = vpack.c.b16 %v1488, %v1487
        %v1747 = vpack.c.b16 %v1490, %v1489
        %v1748 = vpack.c.b16 %v1492, %v1491
        %v1749 = vpack.c.b16 %v1494, %v1493
        %v1750 = vpack.c.b16 %v1496, %v1495
        %v1751 = vpack.c.b16 %v1498, %v1497
        %v1752 = vpack.c.b16 %v1500, %v1499
        %v1753 = vpack.c.b16 %v1502, %v1501
        %v1754 = vpack.c.b16 %v1504, %v1503
        %v1755 = vpack.c.b16 %v1506, %v1505
        %v1756 = vpack.c.b16 %v1508, %v1507
        %v1757 = vpack.c.b16 %v1510, %v1509
        %v1758 = vpack.c.b16 %v1512, %v1511
        %v1759 = vpack.c.b16 %v1514, %v1513
        %v1760 = vpack.c.b16 %v1516, %v1515
        %v1761 = vpack.c.b16 %v1518, %v1517
        %v1762 = vpack.c.b16 %v1520, %v1519
        %v1763 = vpack.c.b16 %v1522, %v1521
        %v1764 = vpack.c.b16 %v1524, %v1523
        %v1765 = vpack.c.b16 %v1526, %v1525
        %v1766 = vpack.c.b16 %v1528, %v1527
        %v1767 = vpack.c.b16 %v1530, %v1529
        %v1768 = vpack.c.b16 %v1532, %v1531
        %v1769 = vpack.c.b16 %v1534, %v1533
        %v1770 = vpack.c.b16 %v1536, %v1535
        %v1771 = vpack.c.b16 %v1538, %v1537
        %v1772 = vpack.c.b16 %v1540, %v1539
        %v1773 = vpack.c.b16 %v1542, %v1541
        %v1774 = vpack.c.b16 %v1544, %v1543
        %v1775 = vpack.c.b16 %v1546, %v1545
        %v1776 = vpack.c.b16 %v1548, %v1547
        %v1777 = vpack.c.b16 %v1550, %v1549
        %v1778 = vpack.c.b16 %v1552, %v1551
        %v1779 = vpack.c.b16 %v1554, %v1553
        %v1780 = vpack.c.b16 %v1556, %v1555
        %v1781 = vpack.c.b16 %v1558, %v1557
        %v1782 = vpack.c.b16 %v1560, %v1559
        %v1783 = vpack.c.b16 %v1562, %v1561
        %v1784 = vpack.c.b16 %v1564, %v1563
        %v1785 = vpack.c.b16 %v1566, %v1565
        %v1786 = vpack.c.b16 %v1568, %v1567
        %v1787 = vpack.c.b16 %v1570, %v1569
        %v1788 = vpack.c.b16 %v1572, %v1571
        %v1789 = vpack.c.b16 %v1574, %v1573
        %v1790 = vpack.c.b16 %v1576, %v1575
        %v1791 = vpack.c.b16 %v1578, %v1577
        %v1792 = vpack.c.b16 %v1580, %v1579
        %v1793 = vpack.c.b16 %v1582, %v1581
        %v1794 = vpack.c.b16 %v1584, %v1583
        %v1795 = vpack.c.b16 %v1586, %v1585
        %v1796 = vpack.c.b16 %v1588, %v1587
        %v1797 = vpack.c.b16 %v1590, %v1589
        %v1798 = vpack.c.b16 %v1592, %v1591
        %v1799 = vpack.c.b16 %v1594, %v1593
        %v1800 = vpack.c.b16 %v1596, %v1595
        %v1801 = vpack.c.b16 %v1598, %v1597
        %v1802 = vpack.c.b16 %v1600, %v1599
        %v1803 = vpack.c.b16 %v1602, %v1601
        %v1804 = vpack.c.b16 %v1604, %v1603
        %v1805 = vpack.c.b16 %v1606, %v1605
        %v1806 = vpack.c.b16 %v1608, %v1607
        %v1807 = vpack.c.b16 %v1610, %v1609
        %v1808 = vpack.c.b16 %v1612, %v1611
        %v1809 = vpack.c.b16 %v1614, %v1613
        %v1810 = vpack.c.b16 %v1616, %v1615
        %v1811 = vpack.c.b16 %v1618, %v1617
        %v1812 = vpack.c.b16 %v1620, %v1619
        %v1813 = vpack.c.b16 %v1622, %v1621
        %v1814 = vpack.c.b16 %v1624, %v1623
        %v1815 = vpack.c.b16 %v1626, %v1625
        %v1816 = vpack.c.b16 %v1628, %v1627
        %v1817 = vpack.c.b16 %v1630, %v1629
        %v1818 = vpack.c.b16 %v1632, %v1631
        %v1819 = vpack.c.b16 %v1634, %v1633
        %v1820 = vpack.c.b16 %v1636, %v1635
        %v1821 = vpack.c.b16 %v1638, %v1637
        %v1822 = vpack.c.b16 %v1640, %v1639
        %v1823 = vpack.c.b16 %v1642, %v1641
        %v1824 = vpack.c.b16 %v1644, %v1643
        %v1825 = vpack.c.b16 %v1646, %v1645
        %v1826 = vpack.c.b16 %v1648, %v1647
        %v1827 = vpack.c.b16 %v1650, %v1649
        %v1828 = vpack.c.b16 %v1652, %v1651
        %2005 = vmatprep.subr.bf16.mxu0 0
        %2006 = vmatpush1.bf16.msra.mxu0 %v1660
        %2007 = vmatprep.subr.bf16.mxu0 0
        %2008 = vmatpush1.bf16.msra.mxu0 %v1659
        %2009 = vmatprep.subr.bf16.mxu0 0
        %2010 = vmatpush1.bf16.msra.mxu0 %v1658
        %2011 = vmatprep.subr.bf16.mxu0 0
        %2012 = vmatpush1.bf16.msra.mxu0 %v1657
        %2013 = vmatprep.subr.bf16.mxu0 0
        %2014 = vmatpush1.bf16.msra.mxu0 %v1656
        %2015 = vmatprep.subr.bf16.mxu0 0
        %2016 = vmatpush1.bf16.msra.mxu0 %v1655
        %2017 = vmatprep.subr.bf16.mxu0 0
        %2018 = vmatpush1.bf16.msra.mxu0 %v1654
        %2019 = vmatprep.subr.bf16.mxu0 0
        %2020 = vmatpush1.bf16.msra.mxu0 %v1653
        %2021 = vmatprep.subr.bf16.mxu0 0
        %2022 = vmatpush2.bf16.msra.mxu0 %v1668
        %2023 = vmatprep.subr.bf16.mxu0 0
        %2024 = vmatpush2.bf16.msra.mxu0 %v1667
        %2025 = vmatprep.subr.bf16.mxu0 0
        %2026 = vmatpush2.bf16.msra.mxu0 %v1666
        %2027 = vmatprep.subr.bf16.mxu0 0
        %2028 = vmatpush2.bf16.msra.mxu0 %v1665
        %2029 = vmatprep.subr.bf16.mxu0 0
        %2030 = vmatpush2.bf16.msra.mxu0 %v1664
        %2031 = vmatprep.subr.bf16.mxu0 0
        %2032 = vmatpush2.bf16.msra.mxu0 %v1663
        %2033 = vmatprep.subr.bf16.mxu0 0
        %2034 = vmatpush2.bf16.msra.mxu0 %v1662
        %2035 = vmatprep.subr.bf16.mxu0 0
        %2036 = vmatpush2.bf16.msra.mxu0 %v1661
        %2037 = vmatprep.mubr.bf16.mxu0 %v575
        %2038 = vmatmul.mubr.bf16.gmra.mxu0 %v574
        %v2039 = vpop.f32.mrf.mxu0
        %v2040 = vadd.f32 0.0, %v2039
        %v2041 = vpop.f32.mrf.mxu0
        %v2042 = vpop.f32.mrf.mxu0
        %v2043 = vpop.f32.mrf.mxu0
        %2044 = vdwg.mxu0
        %2045 = vmatprep.subr.bf16.mxu0 0
        %2046 = vmatpush1.bf16.msra.mxu0 %v1676
        %2047 = vmatprep.subr.bf16.mxu0 0
        %2048 = vmatpush1.bf16.msra.mxu0 %v1675
        %2049 = vmatprep.subr.bf16.mxu0 0
        %2050 = vmatpush1.bf16.msra.mxu0 %v1674
        %2051 = vmatprep.subr.bf16.mxu0 0
        %2052 = vmatpush1.bf16.msra.mxu0 %v1673
        %2053 = vmatprep.subr.bf16.mxu0 0
        %2054 = vmatpush1.bf16.msra.mxu0 %v1672
        %2055 = vmatprep.subr.bf16.mxu0 0
        %2056 = vmatpush1.bf16.msra.mxu0 %v1671
        %2057 = vmatprep.subr.bf16.mxu0 0
        %2058 = vmatpush1.bf16.msra.mxu0 %v1670
        %2059 = vmatprep.subr.bf16.mxu0 0
        %2060 = vmatpush1.bf16.msra.mxu0 %v1669
        %2061 = vmatprep.subr.bf16.mxu0 0
        %2062 = vmatpush2.bf16.msra.mxu0 %v1684
        %2063 = vmatprep.subr.bf16.mxu0 0
        %2064 = vmatpush2.bf16.msra.mxu0 %v1683
        %2065 = vmatprep.subr.bf16.mxu0 0
        %2066 = vmatpush2.bf16.msra.mxu0 %v1682
        %2067 = vmatprep.subr.bf16.mxu0 0
        %2068 = vmatpush2.bf16.msra.mxu0 %v1681
        %2069 = vmatprep.subr.bf16.mxu0 0
        %2070 = vmatpush2.bf16.msra.mxu0 %v1680
        %2071 = vmatprep.subr.bf16.mxu0 0
        %2072 = vmatpush2.bf16.msra.mxu0 %v1679
        %2073 = vmatprep.subr.bf16.mxu0 0
        %2074 = vmatpush2.bf16.msra.mxu0 %v1678
        %2075 = vmatprep.subr.bf16.mxu0 0
        %2076 = vmatpush2.bf16.msra.mxu0 %v1677
        %2077 = vmatprep.mubr.bf16.mxu0 %v577
        %2078 = vmatmul.mubr.bf16.gmra.mxu0 %v576
        %v2079 = vpop.f32.mrf.mxu0
        %v2080 = vadd.f32 %v2040, %v2079
        %v2081 = vpop.f32.mrf.mxu0
        %v2082 = vpop.f32.mrf.mxu0
        %v2083 = vpop.f32.mrf.mxu0
        %2084 = vdwg.mxu0
        %2085 = vmatprep.subr.bf16.mxu0 0
        %2086 = vmatpush1.bf16.msra.mxu0 %v1692
        %2087 = vmatprep.subr.bf16.mxu0 0
        %2088 = vmatpush1.bf16.msra.mxu0 %v1691
        %2089 = vmatprep.subr.bf16.mxu0 0
        %2090 = vmatpush1.bf16.msra.mxu0 %v1690
        %2091 = vmatprep.subr.bf16.mxu0 0
        %2092 = vmatpush1.bf16.msra.mxu0 %v1689
        %2093 = vmatprep.subr.bf16.mxu0 0
        %2094 = vmatpush1.bf16.msra.mxu0 %v1688
        %2095 = vmatprep.subr.bf16.mxu0 0
        %2096 = vmatpush1.bf16.msra.mxu0 %v1687
        %2097 = vmatprep.subr.bf16.mxu0 0
        %2098 = vmatpush1.bf16.msra.mxu0 %v1686
        %2099 = vmatprep.subr.bf16.mxu0 0
        %2100 = vmatpush1.bf16.msra.mxu0 %v1685
        %2101 = vmatprep.subr.bf16.mxu0 0
        %2102 = vmatpush2.bf16.msra.mxu0 %v1700
        %2103 = vmatprep.subr.bf16.mxu0 0
        %2104 = vmatpush2.bf16.msra.mxu0 %v1699
        %2105 = vmatprep.subr.bf16.mxu0 0
        %2106 = vmatpush2.bf16.msra.mxu0 %v1698
        %2107 = vmatprep.subr.bf16.mxu0 0
        %2108 = vmatpush2.bf16.msra.mxu0 %v1697
        %2109 = vmatprep.subr.bf16.mxu0 0
        %2110 = vmatpush2.bf16.msra.mxu0 %v1696
        %2111 = vmatprep.subr.bf16.mxu0 0
        %2112 = vmatpush2.bf16.msra.mxu0 %v1695
        %2113 = vmatprep.subr.bf16.mxu0 0
        %2114 = vmatpush2.bf16.msra.mxu0 %v1694
        %2115 = vmatprep.subr.bf16.mxu0 0
        %2116 = vmatpush2.bf16.msra.mxu0 %v1693
        %2117 = vmatprep.mubr.bf16.mxu0 %v579
        %2118 = vmatmul.mubr.bf16.gmra.mxu0 %v578
        %v2119 = vpop.f32.mrf.mxu0
        %v2120 = vadd.f32 %v2080, %v2119
        %v2121 = vpop.f32.mrf.mxu0
        %v2122 = vpop.f32.mrf.mxu0
        %v2123 = vpop.f32.mrf.mxu0
        %2124 = vdwg.mxu0
        %2125 = vmatprep.subr.bf16.mxu0 0
        %2126 = vmatpush1.bf16.msra.mxu0 %v1708
        %2127 = vmatprep.subr.bf16.mxu0 0
        %2128 = vmatpush1.bf16.msra.mxu0 %v1707
        %2129 = vmatprep.subr.bf16.mxu0 0
        %2130 = vmatpush1.bf16.msra.mxu0 %v1706
        %2131 = vmatprep.subr.bf16.mxu0 0
        %2132 = vmatpush1.bf16.msra.mxu0 %v1705
        %2133 = vmatprep.subr.bf16.mxu0 0
        %2134 = vmatpush1.bf16.msra.mxu0 %v1704
        %2135 = vmatprep.subr.bf16.mxu0 0
        %2136 = vmatpush1.bf16.msra.mxu0 %v1703
        %2137 = vmatprep.subr.bf16.mxu0 0
        %2138 = vmatpush1.bf16.msra.mxu0 %v1702
        %2139 = vmatprep.subr.bf16.mxu0 0
        %2140 = vmatpush1.bf16.msra.mxu0 %v1701
        %2141 = vmatprep.subr.bf16.mxu0 0
        %2142 = vmatpush2.bf16.msra.mxu0 %v1716
        %2143 = vmatprep.subr.bf16.mxu0 0
        %2144 = vmatpush2.bf16.msra.mxu0 %v1715
        %2145 = vmatprep.subr.bf16.mxu0 0
        %2146 = vmatpush2.bf16.msra.mxu0 %v1714
        %2147 = vmatprep.subr.bf16.mxu0 0
        %2148 = vmatpush2.bf16.msra.mxu0 %v1713
        %2149 = vmatprep.subr.bf16.mxu0 0
        %2150 = vmatpush2.bf16.msra.mxu0 %v1712
        %2151 = vmatprep.subr.bf16.mxu0 0
        %2152 = vmatpush2.bf16.msra.mxu0 %v1711
        %2153 = vmatprep.subr.bf16.mxu0 0
        %2154 = vmatpush2.bf16.msra.mxu0 %v1710
        %2155 = vmatprep.subr.bf16.mxu0 0
        %2156 = vmatpush2.bf16.msra.mxu0 %v1709
        %2157 = vmatprep.mubr.bf16.mxu0 %v581
        %2158 = vmatmul.mubr.bf16.gmra.mxu0 %v580
        %v2159 = vpop.f32.mrf.mxu0
        %v2160 = vadd.f32 %v2120, %v2159
        %v2161 = vpop.f32.mrf.mxu0
        %v2162 = vpop.f32.mrf.mxu0
        %v2163 = vpop.f32.mrf.mxu0
        %2164 = vdwg.mxu0
        %2165 = vmatprep.subr.bf16.mxu0 0
        %2166 = vmatpush1.bf16.msra.mxu0 %v1724
        %2167 = vmatprep.subr.bf16.mxu0 0
        %2168 = vmatpush1.bf16.msra.mxu0 %v1723
        %2169 = vmatprep.subr.bf16.mxu0 0
        %2170 = vmatpush1.bf16.msra.mxu0 %v1722
        %2171 = vmatprep.subr.bf16.mxu0 0
        %2172 = vmatpush1.bf16.msra.mxu0 %v1721
        %2173 = vmatprep.subr.bf16.mxu0 0
        %2174 = vmatpush1.bf16.msra.mxu0 %v1720
        %2175 = vmatprep.subr.bf16.mxu0 0
        %2176 = vmatpush1.bf16.msra.mxu0 %v1719
        %2177 = vmatprep.subr.bf16.mxu0 0
        %2178 = vmatpush1.bf16.msra.mxu0 %v1718
        %2179 = vmatprep.subr.bf16.mxu0 0
        %2180 = vmatpush1.bf16.msra.mxu0 %v1717
        %2181 = vmatprep.subr.bf16.mxu0 0
        %2182 = vmatpush2.bf16.msra.mxu0 %v1732
        %2183 = vmatprep.subr.bf16.mxu0 0
        %2184 = vmatpush2.bf16.msra.mxu0 %v1731
        %2185 = vmatprep.subr.bf16.mxu0 0
        %2186 = vmatpush2.bf16.msra.mxu0 %v1730
        %2187 = vmatprep.subr.bf16.mxu0 0
        %2188 = vmatpush2.bf16.msra.mxu0 %v1729
        %2189 = vmatprep.subr.bf16.mxu0 0
        %2190 = vmatpush2.bf16.msra.mxu0 %v1728
        %2191 = vmatprep.subr.bf16.mxu0 0
        %2192 = vmatpush2.bf16.msra.mxu0 %v1727
        %2193 = vmatprep.subr.bf16.mxu0 0
        %2194 = vmatpush2.bf16.msra.mxu0 %v1726
        %2195 = vmatprep.subr.bf16.mxu0 0
        %2196 = vmatpush2.bf16.msra.mxu0 %v1725
        %2197 = vmatprep.mubr.bf16.mxu0 %v583
        %2198 = vmatmul.mubr.bf16.gmra.mxu0 %v582
        %v2199 = vpop.f32.mrf.mxu0
        %v2200 = vadd.f32 %v2160, %v2199
        %v2201 = vpop.f32.mrf.mxu0
        %v2202 = vpop.f32.mrf.mxu0
        %v2203 = vpop.f32.mrf.mxu0
        %2204 = vdwg.mxu0
        %2205 = vmatprep.subr.bf16.mxu0 0
        %2206 = vmatpush1.bf16.msra.mxu0 %v1740
        %2207 = vmatprep.subr.bf16.mxu0 0
        %2208 = vmatpush1.bf16.msra.mxu0 %v1739
        %2209 = vmatprep.subr.bf16.mxu0 0
        %2210 = vmatpush1.bf16.msra.mxu0 %v1738
        %2211 = vmatprep.subr.bf16.mxu0 0
        %2212 = vmatpush1.bf16.msra.mxu0 %v1737
        %2213 = vmatprep.subr.bf16.mxu0 0
        %2214 = vmatpush1.bf16.msra.mxu0 %v1736
        %2215 = vmatprep.subr.bf16.mxu0 0
        %2216 = vmatpush1.bf16.msra.mxu0 %v1735
        %2217 = vmatprep.subr.bf16.mxu0 0
        %2218 = vmatpush1.bf16.msra.mxu0 %v1734
        %2219 = vmatprep.subr.bf16.mxu0 0
        %2220 = vmatpush1.bf16.msra.mxu0 %v1733
        %2221 = vmatprep.subr.bf16.mxu0 0
        %2222 = vmatpush2.bf16.msra.mxu0 %v1748
        %2223 = vmatprep.subr.bf16.mxu0 0
        %2224 = vmatpush2.bf16.msra.mxu0 %v1747
        %2225 = vmatprep.subr.bf16.mxu0 0
        %2226 = vmatpush2.bf16.msra.mxu0 %v1746
        %2227 = vmatprep.subr.bf16.mxu0 0
        %2228 = vmatpush2.bf16.msra.mxu0 %v1745
        %2229 = vmatprep.subr.bf16.mxu0 0
        %2230 = vmatpush2.bf16.msra.mxu0 %v1744
        %2231 = vmatprep.subr.bf16.mxu0 0
        %2232 = vmatpush2.bf16.msra.mxu0 %v1743
        %2233 = vmatprep.subr.bf16.mxu0 0
        %2234 = vmatpush2.bf16.msra.mxu0 %v1742
        %2235 = vmatprep.subr.bf16.mxu0 0
        %2236 = vmatpush2.bf16.msra.mxu0 %v1741
        %2237 = vmatprep.mubr.bf16.mxu0 %v585
        %2238 = vmatmul.mubr.bf16.gmra.mxu0 %v584
        %v2239 = vpop.f32.mrf.mxu0
        %v2240 = vadd.f32 %v2200, %v2239
        %v2241 = vpop.f32.mrf.mxu0
        %v2242 = vpop.f32.mrf.mxu0
        %v2243 = vpop.f32.mrf.mxu0
        %2244 = vdwg.mxu0
        %2245 = vmatprep.subr.bf16.mxu0 0
        %2246 = vmatpush1.bf16.msra.mxu0 %v1756
        %2247 = vmatprep.subr.bf16.mxu0 0
        %2248 = vmatpush1.bf16.msra.mxu0 %v1755
        %2249 = vmatprep.subr.bf16.mxu0 0
        %2250 = vmatpush1.bf16.msra.mxu0 %v1754
        %2251 = vmatprep.subr.bf16.mxu0 0
        %2252 = vmatpush1.bf16.msra.mxu0 %v1753
        %2253 = vmatprep.subr.bf16.mxu0 0
        %2254 = vmatpush1.bf16.msra.mxu0 %v1752
        %2255 = vmatprep.subr.bf16.mxu0 0
        %2256 = vmatpush1.bf16.msra.mxu0 %v1751
        %2257 = vmatprep.subr.bf16.mxu0 0
        %2258 = vmatpush1.bf16.msra.mxu0 %v1750
        %2259 = vmatprep.subr.bf16.mxu0 0
        %2260 = vmatpush1.bf16.msra.mxu0 %v1749
        %2261 = vmatprep.subr.bf16.mxu0 0
        %2262 = vmatpush2.bf16.msra.mxu0 %v1764
        %2263 = vmatprep.subr.bf16.mxu0 0
        %2264 = vmatpush2.bf16.msra.mxu0 %v1763
        %2265 = vmatprep.subr.bf16.mxu0 0
        %2266 = vmatpush2.bf16.msra.mxu0 %v1762
        %2267 = vmatprep.subr.bf16.mxu0 0
        %2268 = vmatpush2.bf16.msra.mxu0 %v1761
        %2269 = vmatprep.subr.bf16.mxu0 0
        %2270 = vmatpush2.bf16.msra.mxu0 %v1760
        %2271 = vmatprep.subr.bf16.mxu0 0
        %2272 = vmatpush2.bf16.msra.mxu0 %v1759
        %2273 = vmatprep.subr.bf16.mxu0 0
        %2274 = vmatpush2.bf16.msra.mxu0 %v1758
        %2275 = vmatprep.subr.bf16.mxu0 0
        %2276 = vmatpush2.bf16.msra.mxu0 %v1757
        %2277 = vmatprep.mubr.bf16.mxu0 %v587
        %2278 = vmatmul.mubr.bf16.gmra.mxu0 %v586
        %v2279 = vpop.f32.mrf.mxu0
        %v2280 = vadd.f32 %v2240, %v2279
        %v2281 = vpop.f32.mrf.mxu0
        %v2282 = vpop.f32.mrf.mxu0
        %v2283 = vpop.f32.mrf.mxu0
        %2284 = vdwg.mxu0
        %2285 = vmatprep.subr.bf16.mxu0 0
        %2286 = vmatpush1.bf16.msra.mxu0 %v1772
        %2287 = vmatprep.subr.bf16.mxu0 0
        %2288 = vmatpush1.bf16.msra.mxu0 %v1771
        %2289 = vmatprep.subr.bf16.mxu0 0
        %2290 = vmatpush1.bf16.msra.mxu0 %v1770
        %2291 = vmatprep.subr.bf16.mxu0 0
        %2292 = vmatpush1.bf16.msra.mxu0 %v1769
        %2293 = vmatprep.subr.bf16.mxu0 0
        %2294 = vmatpush1.bf16.msra.mxu0 %v1768
        %2295 = vmatprep.subr.bf16.mxu0 0
        %2296 = vmatpush1.bf16.msra.mxu0 %v1767
        %2297 = vmatprep.subr.bf16.mxu0 0
        %2298 = vmatpush1.bf16.msra.mxu0 %v1766
        %2299 = vmatprep.subr.bf16.mxu0 0
        %2300 = vmatpush1.bf16.msra.mxu0 %v1765
        %2301 = vmatprep.subr.bf16.mxu0 0
        %2302 = vmatpush2.bf16.msra.mxu0 %v1780
        %2303 = vmatprep.subr.bf16.mxu0 0
        %2304 = vmatpush2.bf16.msra.mxu0 %v1779
        %2305 = vmatprep.subr.bf16.mxu0 0
        %2306 = vmatpush2.bf16.msra.mxu0 %v1778
        %2307 = vmatprep.subr.bf16.mxu0 0
        %2308 = vmatpush2.bf16.msra.mxu0 %v1777
        %2309 = vmatprep.subr.bf16.mxu0 0
        %2310 = vmatpush2.bf16.msra.mxu0 %v1776
        %2311 = vmatprep.subr.bf16.mxu0 0
        %2312 = vmatpush2.bf16.msra.mxu0 %v1775
        %2313 = vmatprep.subr.bf16.mxu0 0
        %2314 = vmatpush2.bf16.msra.mxu0 %v1774
        %2315 = vmatprep.subr.bf16.mxu0 0
        %2316 = vmatpush2.bf16.msra.mxu0 %v1773
        %2317 = vmatprep.mubr.bf16.mxu0 %v589
        %2318 = vmatmul.mubr.bf16.gmra.mxu0 %v588
        %v2319 = vpop.f32.mrf.mxu0
        %v2320 = vadd.f32 %v2280, %v2319
        %v2321 = vpop.f32.mrf.mxu0
        %v2322 = vpop.f32.mrf.mxu0
        %v2323 = vpop.f32.mrf.mxu0
        %2324 = vdwg.mxu0
        %2325 = vmatprep.subr.bf16.mxu0 0
        %2326 = vmatpush1.bf16.msra.mxu0 %v1788
        %2327 = vmatprep.subr.bf16.mxu0 0
        %2328 = vmatpush1.bf16.msra.mxu0 %v1787
        %2329 = vmatprep.subr.bf16.mxu0 0
        %2330 = vmatpush1.bf16.msra.mxu0 %v1786
        %2331 = vmatprep.subr.bf16.mxu0 0
        %2332 = vmatpush1.bf16.msra.mxu0 %v1785
        %2333 = vmatprep.subr.bf16.mxu0 0
        %2334 = vmatpush1.bf16.msra.mxu0 %v1784
        %2335 = vmatprep.subr.bf16.mxu0 0
        %2336 = vmatpush1.bf16.msra.mxu0 %v1783
        %2337 = vmatprep.subr.bf16.mxu0 0
        %2338 = vmatpush1.bf16.msra.mxu0 %v1782
        %2339 = vmatprep.subr.bf16.mxu0 0
        %2340 = vmatpush1.bf16.msra.mxu0 %v1781
        %2341 = vmatprep.subr.bf16.mxu0 0
        %2342 = vmatpush2.bf16.msra.mxu0 %v1796
        %2343 = vmatprep.subr.bf16.mxu0 0
        %2344 = vmatpush2.bf16.msra.mxu0 %v1795
        %2345 = vmatprep.subr.bf16.mxu0 0
        %2346 = vmatpush2.bf16.msra.mxu0 %v1794
        %2347 = vmatprep.subr.bf16.mxu0 0
        %2348 = vmatpush2.bf16.msra.mxu0 %v1793
        %2349 = vmatprep.subr.bf16.mxu0 0
        %2350 = vmatpush2.bf16.msra.mxu0 %v1792
        %2351 = vmatprep.subr.bf16.mxu0 0
        %2352 = vmatpush2.bf16.msra.mxu0 %v1791
        %2353 = vmatprep.subr.bf16.mxu0 0
        %2354 = vmatpush2.bf16.msra.mxu0 %v1790
        %2355 = vmatprep.subr.bf16.mxu0 0
        %2356 = vmatpush2.bf16.msra.mxu0 %v1789
        %2357 = vmatprep.mubr.bf16.mxu0 %v591
        %2358 = vmatmul.mubr.bf16.gmra.mxu0 %v590
        %v2359 = vpop.f32.mrf.mxu0
        %v2360 = vadd.f32 %v2320, %v2359
        %v2361 = vpop.f32.mrf.mxu0
        %v2362 = vpop.f32.mrf.mxu0
        %v2363 = vpop.f32.mrf.mxu0
        %2364 = vdwg.mxu0
        %2365 = vmatprep.subr.bf16.mxu0 0
        %2366 = vmatpush1.bf16.msra.mxu0 %v1804
        %2367 = vmatprep.subr.bf16.mxu0 0
        %2368 = vmatpush1.bf16.msra.mxu0 %v1803
        %2369 = vmatprep.subr.bf16.mxu0 0
        %2370 = vmatpush1.bf16.msra.mxu0 %v1802
        %2371 = vmatprep.subr.bf16.mxu0 0
        %2372 = vmatpush1.bf16.msra.mxu0 %v1801
        %2373 = vmatprep.subr.bf16.mxu0 0
        %2374 = vmatpush1.bf16.msra.mxu0 %v1800
        %2375 = vmatprep.subr.bf16.mxu0 0
        %2376 = vmatpush1.bf16.msra.mxu0 %v1799
        %2377 = vmatprep.subr.bf16.mxu0 0
        %2378 = vmatpush1.bf16.msra.mxu0 %v1798
        %2379 = vmatprep.subr.bf16.mxu0 0
        %2380 = vmatpush1.bf16.msra.mxu0 %v1797
        %2381 = vmatprep.subr.bf16.mxu0 0
        %2382 = vmatpush2.bf16.msra.mxu0 %v1812
        %2383 = vmatprep.subr.bf16.mxu0 0
        %2384 = vmatpush2.bf16.msra.mxu0 %v1811
        %2385 = vmatprep.subr.bf16.mxu0 0
        %2386 = vmatpush2.bf16.msra.mxu0 %v1810
        %2387 = vmatprep.subr.bf16.mxu0 0
        %2388 = vmatpush2.bf16.msra.mxu0 %v1809
        %2389 = vmatprep.subr.bf16.mxu0 0
        %2390 = vmatpush2.bf16.msra.mxu0 %v1808
        %2391 = vmatprep.subr.bf16.mxu0 0
        %2392 = vmatpush2.bf16.msra.mxu0 %v1807
        %2393 = vmatprep.subr.bf16.mxu0 0
        %2394 = vmatpush2.bf16.msra.mxu0 %v1806
        %2395 = vmatprep.subr.bf16.mxu0 0
        %2396 = vmatpush2.bf16.msra.mxu0 %v1805
        %2397 = vmatprep.mubr.bf16.mxu0 %v593
        %2398 = vmatmul.mubr.bf16.gmra.mxu0 %v592
        %v2399 = vpop.f32.mrf.mxu0
        %v2400 = vadd.f32 %v2360, %v2399
        %v2401 = vpop.f32.mrf.mxu0
        %v2402 = vpop.f32.mrf.mxu0
        %v2403 = vpop.f32.mrf.mxu0
        %2404 = vdwg.mxu0
        %2405 = vmatprep.subr.bf16.mxu0 0
        %2406 = vmatpush1.bf16.msra.mxu0 %v1820
        %2407 = vmatprep.subr.bf16.mxu0 0
        %2408 = vmatpush1.bf16.msra.mxu0 %v1819
        %2409 = vmatprep.subr.bf16.mxu0 0
        %2410 = vmatpush1.bf16.msra.mxu0 %v1818
        %2411 = vmatprep.subr.bf16.mxu0 0
        %2412 = vmatpush1.bf16.msra.mxu0 %v1817
        %2413 = vmatprep.subr.bf16.mxu0 0
        %2414 = vmatpush1.bf16.msra.mxu0 %v1816
        %2415 = vmatprep.subr.bf16.mxu0 0
        %2416 = vmatpush1.bf16.msra.mxu0 %v1815
        %2417 = vmatprep.subr.bf16.mxu0 0
        %2418 = vmatpush1.bf16.msra.mxu0 %v1814
        %2419 = vmatprep.subr.bf16.mxu0 0
        %2420 = vmatpush1.bf16.msra.mxu0 %v1813
        %2421 = vmatprep.subr.bf16.mxu0 0
        %2422 = vmatpush2.bf16.msra.mxu0 %v1828
        %2423 = vmatprep.subr.bf16.mxu0 0
        %2424 = vmatpush2.bf16.msra.mxu0 %v1827
        %2425 = vmatprep.subr.bf16.mxu0 0
        %2426 = vmatpush2.bf16.msra.mxu0 %v1826
        %2427 = vmatprep.subr.bf16.mxu0 0
        %2428 = vmatpush2.bf16.msra.mxu0 %v1825
        %2429 = vmatprep.subr.bf16.mxu0 0
        %2430 = vmatpush2.bf16.msra.mxu0 %v1824
        %2431 = vmatprep.subr.bf16.mxu0 0
        %2432 = vmatpush2.bf16.msra.mxu0 %v1823
        %2433 = vmatprep.subr.bf16.mxu0 0
        %2434 = vmatpush2.bf16.msra.mxu0 %v1822
        %2435 = vmatprep.subr.bf16.mxu0 0
        %2436 = vmatpush2.bf16.msra.mxu0 %v1821
        %2437 = vmatprep.mubr.bf16.mxu0 %v595
        %2438 = vmatmul.mubr.bf16.gmra.mxu0 %v594
        %v2439 = vpop.f32.mrf.mxu0
        %v2440 = vadd.f32 %v2400, %v2439
        %v2441 = vpop.f32.mrf.mxu0
        %v2442 = vpop.f32.mrf.mxu0
        %v2443 = vpop.f32.mrf.mxu0
        %2444 = vdwg.mxu0
        %v2445 = vadd.f32 %v596, %v2440
        %2446 = vst [vmem:[#allocation2] sm:$0x3] %v2445
        %v2447 = vld [vmem:[#allocation3] sm:$0x3]
        %v2448 = vld [vmem:[%s384] sm:$0xf]
        %v2449 = vld [vmem:[%s384 + $0x4] sm:$0xf]
        %v2450 = vld [vmem:[%s384 + $0x8] sm:$0xf]
        %v2451 = vld [vmem:[%s384 + $0xc] sm:$0xf]
        %v2452 = vld [vmem:[%s384 + $0x10] sm:$0xf]
        %v2453 = vld [vmem:[%s384 + $0x14] sm:$0xf]
        %v2454 = vld [vmem:[%s384 + $0x18] sm:$0xf]
        %v2455 = vld [vmem:[%s384 + $0x1c] sm:$0xf]
        %v2456 = vld [vmem:[%s384 + $0x20] sm:$0xf]
        %v2457 = vld [vmem:[%s384 + $0x24] sm:$0xf]
        %v2458 = vld [vmem:[%s384 + $0x28] sm:$0xf]
        %v2459 = vld [vmem:[%s384 + $0x2c] sm:$0xf]
        %v2460 = vld [vmem:[%s384 + $0x30] sm:$0xf]
        %v2461 = vld [vmem:[%s384 + $0x34] sm:$0xf]
        %v2462 = vld [vmem:[%s384 + $0x38] sm:$0xf]
        %v2463 = vld [vmem:[%s384 + $0x3c] sm:$0xf]
        %v2464 = vld [vmem:[%s384 + $0x40] sm:$0xf]
        %v2465 = vld [vmem:[%s384 + $0x44] sm:$0xf]
        %v2466 = vld [vmem:[%s384 + $0x48] sm:$0xf]
        %v2467 = vld [vmem:[%s384 + $0x4c] sm:$0xf]
        %v2468 = vld [vmem:[%s384 + $0x50] sm:$0xf]
        %v2469 = vld [vmem:[%s384 + $0x54] sm:$0xf]
        %v2470 = vld [vmem:[%s384 + $0x58] sm:$0xf]
        %v2471 = vld [vmem:[%s384 + $0x5c] sm:$0xf]
        %v2472 = vld [vmem:[%s384 + $0x60] sm:$0xf]
        %v2473 = vld [vmem:[%s384 + $0x64] sm:$0xf]
        %v2474 = vld [vmem:[%s384 + $0x68] sm:$0xf]
        %v2475 = vld [vmem:[%s384 + $0x6c] sm:$0xf]
        %v2476 = vld [vmem:[%s384 + $0x70] sm:$0xf]
        %v2477 = vld [vmem:[%s384 + $0x74] sm:$0xf]
        %v2478 = vld [vmem:[%s384 + $0x78] sm:$0xf]
        %v2479 = vld [vmem:[%s384 + $0x7c] sm:$0xf]
        %v2480 = vld [vmem:[%s384 + $0x80] sm:$0xf]
        %v2481 = vld [vmem:[%s384 + $0x84] sm:$0xf]
        %v2482 = vld [vmem:[%s384 + $0x88] sm:$0xf]
        %v2483 = vld [vmem:[%s384 + $0x8c] sm:$0xf]
        %v2484 = vld [vmem:[%s384 + $0x90] sm:$0xf]
        %v2485 = vld [vmem:[%s384 + $0x94] sm:$0xf]
        %v2486 = vld [vmem:[%s384 + $0x98] sm:$0xf]
        %v2487 = vld [vmem:[%s384 + $0x9c] sm:$0xf]
        %v2488 = vld [vmem:[%s384 + $0xa0] sm:$0xf]
        %v2489 = vld [vmem:[%s384 + $0xa4] sm:$0xf]
        %v2490 = vld [vmem:[%s384 + $0xa8] sm:$0xf]
        %v2491 = vld [vmem:[%s384 + $0xac] sm:$0xf]
        %v2492 = vld [vmem:[%s384 + $0xb0] sm:$0xf]
        %v2493 = vld [vmem:[%s384 + $0xb4] sm:$0xf]
        %v2494 = vld [vmem:[%s384 + $0xb8] sm:$0xf]
        %v2495 = vld [vmem:[%s384 + $0xbc] sm:$0xf]
        %v2496 = vld [vmem:[%s384 + $0xc0] sm:$0xf]
        %v2497 = vld [vmem:[%s384 + $0xc4] sm:$0xf]
        %v2498 = vld [vmem:[%s384 + $0xc8] sm:$0xf]
        %v2499 = vld [vmem:[%s384 + $0xcc] sm:$0xf]
        %v2500 = vld [vmem:[%s384 + $0xd0] sm:$0xf]
        %v2501 = vld [vmem:[%s384 + $0xd4] sm:$0xf]
        %v2502 = vld [vmem:[%s384 + $0xd8] sm:$0xf]
        %v2503 = vld [vmem:[%s384 + $0xdc] sm:$0xf]
        %v2504 = vld [vmem:[%s384 + $0xe0] sm:$0xf]
        %v2505 = vld [vmem:[%s384 + $0xe4] sm:$0xf]
        %v2506 = vld [vmem:[%s384 + $0xe8] sm:$0xf]
        %v2507 = vld [vmem:[%s384 + $0xec] sm:$0xf]
        %v2508 = vld [vmem:[%s384 + $0xf0] sm:$0xf]
        %v2509 = vld [vmem:[%s384 + $0xf4] sm:$0xf]
        %v2510 = vld [vmem:[%s384 + $0xf8] sm:$0xf]
        %v2511 = vld [vmem:[%s384 + $0xfc] sm:$0xf]
        %v2512 = vld [vmem:[%s384 + $0x100] sm:$0xf]
        %v2513 = vld [vmem:[%s384 + $0x104] sm:$0xf]
        %v2514 = vld [vmem:[%s384 + $0x108] sm:$0xf]
        %v2515 = vld [vmem:[%s384 + $0x10c] sm:$0xf]
        %v2516 = vld [vmem:[%s384 + $0x110] sm:$0xf]
        %v2517 = vld [vmem:[%s384 + $0x114] sm:$0xf]
        %v2518 = vld [vmem:[%s384 + $0x118] sm:$0xf]
        %v2519 = vld [vmem:[%s384 + $0x11c] sm:$0xf]
        %v2520 = vld [vmem:[%s384 + $0x120] sm:$0xf]
        %v2521 = vld [vmem:[%s384 + $0x124] sm:$0xf]
        %v2522 = vld [vmem:[%s384 + $0x128] sm:$0xf]
        %v2523 = vld [vmem:[%s384 + $0x12c] sm:$0xf]
        %v2524 = vld [vmem:[%s384 + $0x130] sm:$0xf]
        %v2525 = vld [vmem:[%s384 + $0x134] sm:$0xf]
        %v2526 = vld [vmem:[%s384 + $0x138] sm:$0xf]
        %v2527 = vld [vmem:[%s384 + $0x13c] sm:$0xf]
        %v2528 = vld [vmem:[%s384 + $0x140] sm:$0xf]
        %v2529 = vld [vmem:[%s384 + $0x144] sm:$0xf]
        %v2530 = vld [vmem:[%s384 + $0x148] sm:$0xf]
        %v2531 = vld [vmem:[%s384 + $0x14c] sm:$0xf]
        %v2532 = vld [vmem:[%s384 + $0x150] sm:$0xf]
        %v2533 = vld [vmem:[%s384 + $0x154] sm:$0xf]
        %v2534 = vld [vmem:[%s384 + $0x158] sm:$0xf]
        %v2535 = vld [vmem:[%s384 + $0x15c] sm:$0xf]
        %v2536 = vld [vmem:[%s384 + $0x160] sm:$0xf]
        %v2537 = vld [vmem:[%s384 + $0x164] sm:$0xf]
        %v2538 = vld [vmem:[%s384 + $0x168] sm:$0xf]
        %v2539 = vld [vmem:[%s384 + $0x16c] sm:$0xf]
        %v2540 = vld [vmem:[%s384 + $0x170] sm:$0xf]
        %v2541 = vld [vmem:[%s384 + $0x174] sm:$0xf]
        %v2542 = vld [vmem:[%s384 + $0x178] sm:$0xf]
        %v2543 = vld [vmem:[%s384 + $0x17c] sm:$0xf]
        %v2544 = vld [vmem:[%s384 + $0x180] sm:$0xf]
        %v2545 = vld [vmem:[%s384 + $0x184] sm:$0xf]
        %v2546 = vld [vmem:[%s384 + $0x188] sm:$0xf]
        %v2547 = vld [vmem:[%s384 + $0x18c] sm:$0xf]
        %v2548 = vld [vmem:[%s384 + $0x190] sm:$0xf]
        %v2549 = vld [vmem:[%s384 + $0x194] sm:$0xf]
        %v2550 = vld [vmem:[%s384 + $0x198] sm:$0xf]
        %v2551 = vld [vmem:[%s384 + $0x19c] sm:$0xf]
        %v2552 = vld [vmem:[%s384 + $0x1a0] sm:$0xf]
        %v2553 = vld [vmem:[%s384 + $0x1a4] sm:$0xf]
        %v2554 = vld [vmem:[%s384 + $0x1a8] sm:$0xf]
        %v2555 = vld [vmem:[%s384 + $0x1ac] sm:$0xf]
        %v2556 = vld [vmem:[%s384 + $0x1b0] sm:$0xf]
        %v2557 = vld [vmem:[%s384 + $0x1b4] sm:$0xf]
        %v2558 = vld [vmem:[%s384 + $0x1b8] sm:$0xf]
        %v2559 = vld [vmem:[%s384 + $0x1bc] sm:$0xf]
        %v2560 = vld [vmem:[%s384 + $0x1c0] sm:$0xf]
        %v2561 = vld [vmem:[%s384 + $0x1c4] sm:$0xf]
        %v2562 = vld [vmem:[%s384 + $0x1c8] sm:$0xf]
        %v2563 = vld [vmem:[%s384 + $0x1cc] sm:$0xf]
        %v2564 = vld [vmem:[%s384 + $0x1d0] sm:$0xf]
        %v2565 = vld [vmem:[%s384 + $0x1d4] sm:$0xf]
        %v2566 = vld [vmem:[%s384 + $0x1d8] sm:$0xf]
        %v2567 = vld [vmem:[%s384 + $0x1dc] sm:$0xf]
        %v2568 = vld [vmem:[%s384 + $0x1e0] sm:$0xf]
        %v2569 = vld [vmem:[%s384 + $0x1e4] sm:$0xf]
        %v2570 = vld [vmem:[%s384 + $0x1e8] sm:$0xf]
        %v2571 = vld [vmem:[%s384 + $0x1ec] sm:$0xf]
        %v2572 = vld [vmem:[%s384 + $0x1f0] sm:$0xf]
        %v2573 = vld [vmem:[%s384 + $0x1f4] sm:$0xf]
        %v2574 = vld [vmem:[%s384 + $0x1f8] sm:$0xf]
        %v2575 = vld [vmem:[%s384 + $0x1fc] sm:$0xf]
        %v2576 = vld [vmem:[%s384 + $0x200] sm:$0xf]
        %v2577 = vld [vmem:[%s384 + $0x204] sm:$0xf]
        %v2578 = vld [vmem:[%s384 + $0x208] sm:$0xf]
        %v2579 = vld [vmem:[%s384 + $0x20c] sm:$0xf]
        %v2580 = vld [vmem:[%s384 + $0x210] sm:$0xf]
        %v2581 = vld [vmem:[%s384 + $0x214] sm:$0xf]
        %v2582 = vld [vmem:[%s384 + $0x218] sm:$0xf]
        %v2583 = vld [vmem:[%s384 + $0x21c] sm:$0xf]
        %v2584 = vld [vmem:[%s384 + $0x220] sm:$0xf]
        %v2585 = vld [vmem:[%s384 + $0x224] sm:$0xf]
        %v2586 = vld [vmem:[%s384 + $0x228] sm:$0xf]
        %v2587 = vld [vmem:[%s384 + $0x22c] sm:$0xf]
        %v2588 = vld [vmem:[%s384 + $0x230] sm:$0xf]
        %v2589 = vld [vmem:[%s384 + $0x234] sm:$0xf]
        %v2590 = vld [vmem:[%s384 + $0x238] sm:$0xf]
        %v2591 = vld [vmem:[%s384 + $0x23c] sm:$0xf]
        %v2592 = vld [vmem:[%s384 + $0x240] sm:$0xf]
        %v2593 = vld [vmem:[%s384 + $0x244] sm:$0xf]
        %v2594 = vld [vmem:[%s384 + $0x248] sm:$0xf]
        %v2595 = vld [vmem:[%s384 + $0x24c] sm:$0xf]
        %v2596 = vld [vmem:[%s384 + $0x250] sm:$0xf]
        %v2597 = vld [vmem:[%s384 + $0x254] sm:$0xf]
        %v2598 = vld [vmem:[%s384 + $0x258] sm:$0xf]
        %v2599 = vld [vmem:[%s384 + $0x25c] sm:$0xf]
        %v2600 = vld [vmem:[%s384 + $0x260] sm:$0xf]
        %v2601 = vld [vmem:[%s384 + $0x264] sm:$0xf]
        %v2602 = vld [vmem:[%s384 + $0x268] sm:$0xf]
        %v2603 = vld [vmem:[%s384 + $0x26c] sm:$0xf]
        %v2604 = vld [vmem:[%s384 + $0x270] sm:$0xf]
        %v2605 = vld [vmem:[%s384 + $0x274] sm:$0xf]
        %v2606 = vld [vmem:[%s384 + $0x278] sm:$0xf]
        %v2607 = vld [vmem:[%s384 + $0x27c] sm:$0xf]
        %v2608 = vld [vmem:[%s384 + $0x280] sm:$0xf]
        %v2609 = vld [vmem:[%s384 + $0x284] sm:$0xf]
        %v2610 = vld [vmem:[%s384 + $0x288] sm:$0xf]
        %v2611 = vld [vmem:[%s384 + $0x28c] sm:$0xf]
        %v2612 = vld [vmem:[%s384 + $0x290] sm:$0xf]
        %v2613 = vld [vmem:[%s384 + $0x294] sm:$0xf]
        %v2614 = vld [vmem:[%s384 + $0x298] sm:$0xf]
        %v2615 = vld [vmem:[%s384 + $0x29c] sm:$0xf]
        %v2616 = vld [vmem:[%s384 + $0x2a0] sm:$0xf]
        %v2617 = vld [vmem:[%s384 + $0x2a4] sm:$0xf]
        %v2618 = vld [vmem:[%s384 + $0x2a8] sm:$0xf]
        %v2619 = vld [vmem:[%s384 + $0x2ac] sm:$0xf]
        %v2620 = vld [vmem:[%s384 + $0x2b0] sm:$0xf]
        %v2621 = vld [vmem:[%s384 + $0x2b4] sm:$0xf]
        %v2622 = vld [vmem:[%s384 + $0x2b8] sm:$0xf]
        %v2623 = vld [vmem:[%s384 + $0x2bc] sm:$0xf]
        %v2624 = vld [vmem:[%s384 + $0x2c0] sm:$0xf]
        %v2625 = vld [vmem:[%s384 + $0x2c4] sm:$0xf]
        %v2626 = vld [vmem:[%s384 + $0x2c8] sm:$0xf]
        %v2627 = vld [vmem:[%s384 + $0x2cc] sm:$0xf]
        %v2628 = vld [vmem:[%s384 + $0x2d0] sm:$0xf]
        %v2629 = vld [vmem:[%s384 + $0x2d4] sm:$0xf]
        %v2630 = vld [vmem:[%s384 + $0x2d8] sm:$0xf]
        %v2631 = vld [vmem:[%s384 + $0x2dc] sm:$0xf]
        %v2632 = vld [vmem:[%s384 + $0x2e0] sm:$0xf]
        %v2633 = vld [vmem:[%s384 + $0x2e4] sm:$0xf]
        %v2634 = vld [vmem:[%s384 + $0x2e8] sm:$0xf]
        %v2635 = vld [vmem:[%s384 + $0x2ec] sm:$0xf]
        %v2636 = vld [vmem:[%s384 + $0x2f0] sm:$0xf]
        %v2637 = vld [vmem:[%s384 + $0x2f4] sm:$0xf]
        %v2638 = vld [vmem:[%s384 + $0x2f8] sm:$0xf]
        %v2639 = vld [vmem:[%s384 + $0x2fc] sm:$0xf]
        %v2640 = vld [vmem:[%s384 + $0x300] sm:$0xf]
        %v2641 = vld [vmem:[%s384 + $0x304] sm:$0xf]
        %v2642 = vld [vmem:[%s384 + $0x308] sm:$0xf]
        %v2643 = vld [vmem:[%s384 + $0x30c] sm:$0xf]
        %v2644 = vld [vmem:[%s384 + $0x310] sm:$0xf]
        %v2645 = vld [vmem:[%s384 + $0x314] sm:$0xf]
        %v2646 = vld [vmem:[%s384 + $0x318] sm:$0xf]
        %v2647 = vld [vmem:[%s384 + $0x31c] sm:$0xf]
        %v2648 = vld [vmem:[%s384 + $0x320] sm:$0xf]
        %v2649 = vld [vmem:[%s384 + $0x324] sm:$0xf]
        %v2650 = vld [vmem:[%s384 + $0x328] sm:$0xf]
        %v2651 = vld [vmem:[%s384 + $0x32c] sm:$0xf]
        %v2652 = vld [vmem:[%s384 + $0x330] sm:$0xf]
        %v2653 = vld [vmem:[%s384 + $0x334] sm:$0xf]
        %v2654 = vld [vmem:[%s384 + $0x338] sm:$0xf]
        %v2655 = vld [vmem:[%s384 + $0x33c] sm:$0xf]
        %v2656 = vld [vmem:[%s384 + $0x340] sm:$0xf]
        %v2657 = vld [vmem:[%s384 + $0x344] sm:$0xf]
        %v2658 = vld [vmem:[%s384 + $0x348] sm:$0xf]
        %v2659 = vld [vmem:[%s384 + $0x34c] sm:$0xf]
        %v2660 = vld [vmem:[%s384 + $0x350] sm:$0xf]
        %v2661 = vld [vmem:[%s384 + $0x354] sm:$0xf]
        %v2662 = vld [vmem:[%s384 + $0x358] sm:$0xf]
        %v2663 = vld [vmem:[%s384 + $0x35c] sm:$0xf]
        %v2664 = vld [vmem:[%s384 + $0x360] sm:$0xf]
        %v2665 = vld [vmem:[%s384 + $0x364] sm:$0xf]
        %v2666 = vld [vmem:[%s384 + $0x368] sm:$0xf]
        %v2667 = vld [vmem:[%s384 + $0x36c] sm:$0xf]
        %v2668 = vld [vmem:[%s384 + $0x370] sm:$0xf]
        %v2669 = vld [vmem:[%s384 + $0x374] sm:$0xf]
        %v2670 = vld [vmem:[%s384 + $0x378] sm:$0xf]
        %v2671 = vld [vmem:[%s384 + $0x37c] sm:$0xf]
        %v2672 = vld [vmem:[%s384 + $0x380] sm:$0xf]
        %v2673 = vld [vmem:[%s384 + $0x384] sm:$0xf]
        %v2674 = vld [vmem:[%s384 + $0x388] sm:$0xf]
        %v2675 = vld [vmem:[%s384 + $0x38c] sm:$0xf]
        %v2676 = vld [vmem:[%s384 + $0x390] sm:$0xf]
        %v2677 = vld [vmem:[%s384 + $0x394] sm:$0xf]
        %v2678 = vld [vmem:[%s384 + $0x398] sm:$0xf]
        %v2679 = vld [vmem:[%s384 + $0x39c] sm:$0xf]
        %v2680 = vld [vmem:[%s384 + $0x3a0] sm:$0xf]
        %v2681 = vld [vmem:[%s384 + $0x3a4] sm:$0xf]
        %v2682 = vld [vmem:[%s384 + $0x3a8] sm:$0xf]
        %v2683 = vld [vmem:[%s384 + $0x3ac] sm:$0xf]
        %v2684 = vld [vmem:[%s384 + $0x3b0] sm:$0xf]
        %v2685 = vld [vmem:[%s384 + $0x3b4] sm:$0xf]
        %v2686 = vld [vmem:[%s384 + $0x3b8] sm:$0xf]
        %v2687 = vld [vmem:[%s384 + $0x3bc] sm:$0xf]
        %v2688 = vld [vmem:[%s384 + $0x3c0] sm:$0xf]
        %v2689 = vld [vmem:[%s384 + $0x3c4] sm:$0xf]
        %v2690 = vld [vmem:[%s384 + $0x3c8] sm:$0xf]
        %v2691 = vld [vmem:[%s384 + $0x3cc] sm:$0xf]
        %v2692 = vld [vmem:[%s384 + $0x3d0] sm:$0xf]
        %v2693 = vld [vmem:[%s384 + $0x3d4] sm:$0xf]
        %v2694 = vld [vmem:[%s384 + $0x3d8] sm:$0xf]
        %v2695 = vld [vmem:[%s384 + $0x3dc] sm:$0xf]
        %v2696 = vld [vmem:[%s384 + $0x3e0] sm:$0xf]
        %v2697 = vld [vmem:[%s384 + $0x3e4] sm:$0xf]
        %v2698 = vld [vmem:[%s384 + $0x3e8] sm:$0xf]
        %v2699 = vld [vmem:[%s384 + $0x3ec] sm:$0xf]
        %v2700 = vld [vmem:[%s384 + $0x3f0] sm:$0xf]
        %v2701 = vld [vmem:[%s384 + $0x3f4] sm:$0xf]
        %v2702 = vld [vmem:[%s384 + $0x3f8] sm:$0xf]
        %v2703 = vld [vmem:[%s384 + $0x3fc] sm:$0xf]
        %v2704 = vld [vmem:[%s384 + $0x400] sm:$0xf]
        %v2705 = vld [vmem:[%s384 + $0x404] sm:$0xf]
        %v2706 = vld [vmem:[%s384 + $0x408] sm:$0xf]
        %v2707 = vld [vmem:[%s384 + $0x40c] sm:$0xf]
        %v2708 = vld [vmem:[%s384 + $0x410] sm:$0xf]
        %v2709 = vld [vmem:[%s384 + $0x414] sm:$0xf]
        %v2710 = vld [vmem:[%s384 + $0x418] sm:$0xf]
        %v2711 = vld [vmem:[%s384 + $0x41c] sm:$0xf]
        %v2712 = vld [vmem:[%s384 + $0x420] sm:$0xf]
        %v2713 = vld [vmem:[%s384 + $0x424] sm:$0xf]
        %v2714 = vld [vmem:[%s384 + $0x428] sm:$0xf]
        %v2715 = vld [vmem:[%s384 + $0x42c] sm:$0xf]
        %v2716 = vld [vmem:[%s384 + $0x430] sm:$0xf]
        %v2717 = vld [vmem:[%s384 + $0x434] sm:$0xf]
        %v2718 = vld [vmem:[%s384 + $0x438] sm:$0xf]
        %v2719 = vld [vmem:[%s384 + $0x43c] sm:$0xf]
        %v2720 = vld [vmem:[%s384 + $0x440] sm:$0xf]
        %v2721 = vld [vmem:[%s384 + $0x444] sm:$0xf]
        %v2722 = vld [vmem:[%s384 + $0x448] sm:$0xf]
        %v2723 = vld [vmem:[%s384 + $0x44c] sm:$0xf]
        %v2724 = vld [vmem:[%s384 + $0x450] sm:$0xf]
        %v2725 = vld [vmem:[%s384 + $0x454] sm:$0xf]
        %v2726 = vld [vmem:[%s384 + $0x458] sm:$0xf]
        %v2727 = vld [vmem:[%s384 + $0x45c] sm:$0xf]
        %v2728 = vld [vmem:[%s384 + $0x460] sm:$0xf]
        %v2729 = vld [vmem:[%s384 + $0x464] sm:$0xf]
        %v2730 = vld [vmem:[%s384 + $0x468] sm:$0xf]
        %v2731 = vld [vmem:[%s384 + $0x46c] sm:$0xf]
        %v2732 = vld [vmem:[%s384 + $0x470] sm:$0xf]
        %v2733 = vld [vmem:[%s384 + $0x474] sm:$0xf]
        %v2734 = vld [vmem:[%s384 + $0x478] sm:$0xf]
        %v2735 = vld [vmem:[%s384 + $0x47c] sm:$0xf]
        %v2736 = vld [vmem:[%s384 + $0x480] sm:$0xf]
        %v2737 = vld [vmem:[%s384 + $0x484] sm:$0xf]
        %v2738 = vld [vmem:[%s384 + $0x488] sm:$0xf]
        %v2739 = vld [vmem:[%s384 + $0x48c] sm:$0xf]
        %v2740 = vld [vmem:[%s384 + $0x490] sm:$0xf]
        %v2741 = vld [vmem:[%s384 + $0x494] sm:$0xf]
        %v2742 = vld [vmem:[%s384 + $0x498] sm:$0xf]
        %v2743 = vld [vmem:[%s384 + $0x49c] sm:$0xf]
        %v2744 = vld [vmem:[%s384 + $0x4a0] sm:$0xf]
        %v2745 = vld [vmem:[%s384 + $0x4a4] sm:$0xf]
        %v2746 = vld [vmem:[%s384 + $0x4a8] sm:$0xf]
        %v2747 = vld [vmem:[%s384 + $0x4ac] sm:$0xf]
        %v2748 = vld [vmem:[%s384 + $0x4b0] sm:$0xf]
        %v2749 = vld [vmem:[%s384 + $0x4b4] sm:$0xf]
        %v2750 = vld [vmem:[%s384 + $0x4b8] sm:$0xf]
        %v2751 = vld [vmem:[%s384 + $0x4bc] sm:$0xf]
        %v2752 = vld [vmem:[%s384 + $0x4c0] sm:$0xf]
        %v2753 = vld [vmem:[%s384 + $0x4c4] sm:$0xf]
        %v2754 = vld [vmem:[%s384 + $0x4c8] sm:$0xf]
        %v2755 = vld [vmem:[%s384 + $0x4cc] sm:$0xf]
        %v2756 = vld [vmem:[%s384 + $0x4d0] sm:$0xf]
        %v2757 = vld [vmem:[%s384 + $0x4d4] sm:$0xf]
        %v2758 = vld [vmem:[%s384 + $0x4d8] sm:$0xf]
        %v2759 = vld [vmem:[%s384 + $0x4dc] sm:$0xf]
        %v2760 = vld [vmem:[%s384 + $0x4e0] sm:$0xf]
        %v2761 = vld [vmem:[%s384 + $0x4e4] sm:$0xf]
        %v2762 = vld [vmem:[%s384 + $0x4e8] sm:$0xf]
        %v2763 = vld [vmem:[%s384 + $0x4ec] sm:$0xf]
        %v2764 = vld [vmem:[%s384 + $0x4f0] sm:$0xf]
        %v2765 = vld [vmem:[%s384 + $0x4f4] sm:$0xf]
        %v2766 = vld [vmem:[%s384 + $0x4f8] sm:$0xf]
        %v2767 = vld [vmem:[%s384 + $0x4fc] sm:$0xf]
        %v2768 = vld [vmem:[%s384 + $0x500] sm:$0xf]
        %v2769 = vld [vmem:[%s384 + $0x504] sm:$0xf]
        %v2770 = vld [vmem:[%s384 + $0x508] sm:$0xf]
        %v2771 = vld [vmem:[%s384 + $0x50c] sm:$0xf]
        %v2772 = vld [vmem:[%s384 + $0x510] sm:$0xf]
        %v2773 = vld [vmem:[%s384 + $0x514] sm:$0xf]
        %v2774 = vld [vmem:[%s384 + $0x518] sm:$0xf]
        %v2775 = vld [vmem:[%s384 + $0x51c] sm:$0xf]
        %v2776 = vld [vmem:[%s384 + $0x520] sm:$0xf]
        %v2777 = vld [vmem:[%s384 + $0x524] sm:$0xf]
        %v2778 = vld [vmem:[%s384 + $0x528] sm:$0xf]
        %v2779 = vld [vmem:[%s384 + $0x52c] sm:$0xf]
        %v2780 = vld [vmem:[%s384 + $0x530] sm:$0xf]
        %v2781 = vld [vmem:[%s384 + $0x534] sm:$0xf]
        %v2782 = vld [vmem:[%s384 + $0x538] sm:$0xf]
        %v2783 = vld [vmem:[%s384 + $0x53c] sm:$0xf]
        %v2784 = vld [vmem:[%s384 + $0x540] sm:$0xf]
        %v2785 = vld [vmem:[%s384 + $0x544] sm:$0xf]
        %v2786 = vld [vmem:[%s384 + $0x548] sm:$0xf]
        %v2787 = vld [vmem:[%s384 + $0x54c] sm:$0xf]
        %v2788 = vld [vmem:[%s384 + $0x550] sm:$0xf]
        %v2789 = vld [vmem:[%s384 + $0x554] sm:$0xf]
        %v2790 = vld [vmem:[%s384 + $0x558] sm:$0xf]
        %v2791 = vld [vmem:[%s384 + $0x55c] sm:$0xf]
        %v2792 = vld [vmem:[%s384 + $0x560] sm:$0xf]
        %v2793 = vld [vmem:[%s384 + $0x564] sm:$0xf]
        %v2794 = vld [vmem:[%s384 + $0x568] sm:$0xf]
        %v2795 = vld [vmem:[%s384 + $0x56c] sm:$0xf]
        %v2796 = vld [vmem:[%s384 + $0x570] sm:$0xf]
        %v2797 = vld [vmem:[%s384 + $0x574] sm:$0xf]
        %v2798 = vld [vmem:[%s384 + $0x578] sm:$0xf]
        %v2799 = vld [vmem:[%s384 + $0x57c] sm:$0xf]
        %v3152 = vunpack.c.l.b16 %v2448
        %v3153 = vunpack.c.l.b16 %v2449
        %v3154 = vunpack.c.l.b16 %v2450
        %v3155 = vunpack.c.l.b16 %v2451
        %v3156 = vunpack.c.l.b16 %v2452
        %v3157 = vunpack.c.l.b16 %v2453
        %v3158 = vunpack.c.l.b16 %v2454
        %v3159 = vunpack.c.l.b16 %v2455
        %v3160 = vunpack.c.l.b16 %v2456
        %v3161 = vunpack.c.l.b16 %v2457
        %v3162 = vunpack.c.l.b16 %v2458
        %v3163 = vunpack.c.l.b16 %v2459
        %v3164 = vunpack.c.l.b16 %v2460
        %v3165 = vunpack.c.l.b16 %v2461
        %v3166 = vunpack.c.l.b16 %v2462
        %v3167 = vunpack.c.l.b16 %v2463
        %v3168 = vunpack.c.l.b16 %v2464
        %v3169 = vunpack.c.l.b16 %v2465
        %v3170 = vunpack.c.l.b16 %v2466
        %v3171 = vunpack.c.l.b16 %v2467
        %v3172 = vunpack.c.l.b16 %v2468
        %v3173 = vunpack.c.l.b16 %v2469
        %v3174 = vunpack.c.l.b16 %v2470
        %v3175 = vunpack.c.l.b16 %v2471
        %v3176 = vunpack.c.l.b16 %v2472
        %v3177 = vunpack.c.l.b16 %v2473
        %v3178 = vunpack.c.l.b16 %v2474
        %v3179 = vunpack.c.l.b16 %v2475
        %v3180 = vunpack.c.l.b16 %v2476
        %v3181 = vunpack.c.l.b16 %v2477
        %v3182 = vunpack.c.l.b16 %v2478
        %v3183 = vunpack.c.l.b16 %v2479
        %v3184 = vunpack.c.l.b16 %v2480
        %v3185 = vunpack.c.l.b16 %v2481
        %v3186 = vunpack.c.l.b16 %v2482
        %v3187 = vunpack.c.l.b16 %v2483
        %v3188 = vunpack.c.l.b16 %v2484
        %v3189 = vunpack.c.l.b16 %v2485
        %v3190 = vunpack.c.l.b16 %v2486
        %v3191 = vunpack.c.l.b16 %v2487
        %v3192 = vunpack.c.l.b16 %v2488
        %v3193 = vunpack.c.l.b16 %v2489
        %v3194 = vunpack.c.l.b16 %v2490
        %v3195 = vunpack.c.l.b16 %v2491
        %v3196 = vunpack.c.l.b16 %v2492
        %v3197 = vunpack.c.l.b16 %v2493
        %v3198 = vunpack.c.l.b16 %v2494
        %v3199 = vunpack.c.l.b16 %v2495
        %v3200 = vunpack.c.l.b16 %v2496
        %v3201 = vunpack.c.l.b16 %v2497
        %v3202 = vunpack.c.l.b16 %v2498
        %v3203 = vunpack.c.l.b16 %v2499
        %v3204 = vunpack.c.l.b16 %v2500
        %v3205 = vunpack.c.l.b16 %v2501
        %v3206 = vunpack.c.l.b16 %v2502
        %v3207 = vunpack.c.l.b16 %v2503
        %v3208 = vunpack.c.l.b16 %v2504
        %v3209 = vunpack.c.l.b16 %v2505
        %v3210 = vunpack.c.l.b16 %v2506
        %v3211 = vunpack.c.l.b16 %v2507
        %v3212 = vunpack.c.l.b16 %v2508
        %v3213 = vunpack.c.l.b16 %v2509
        %v3214 = vunpack.c.l.b16 %v2510
        %v3215 = vunpack.c.l.b16 %v2511
        %v3216 = vunpack.c.l.b16 %v2512
        %v3217 = vunpack.c.l.b16 %v2513
        %v3218 = vunpack.c.l.b16 %v2514
        %v3219 = vunpack.c.l.b16 %v2515
        %v3220 = vunpack.c.l.b16 %v2516
        %v3221 = vunpack.c.l.b16 %v2517
        %v3222 = vunpack.c.l.b16 %v2518
        %v3223 = vunpack.c.l.b16 %v2519
        %v3224 = vunpack.c.l.b16 %v2520
        %v3225 = vunpack.c.l.b16 %v2521
        %v3226 = vunpack.c.l.b16 %v2522
        %v3227 = vunpack.c.l.b16 %v2523
        %v3228 = vunpack.c.l.b16 %v2524
        %v3229 = vunpack.c.l.b16 %v2525
        %v3230 = vunpack.c.l.b16 %v2526
        %v3231 = vunpack.c.l.b16 %v2527
        %v3232 = vunpack.c.l.b16 %v2528
        %v3233 = vunpack.c.l.b16 %v2529
        %v3234 = vunpack.c.l.b16 %v2530
        %v3235 = vunpack.c.l.b16 %v2531
        %v3236 = vunpack.c.l.b16 %v2532
        %v3237 = vunpack.c.l.b16 %v2533
        %v3238 = vunpack.c.l.b16 %v2534
        %v3239 = vunpack.c.l.b16 %v2535
        %v3240 = vunpack.c.l.b16 %v2536
        %v3241 = vunpack.c.l.b16 %v2537
        %v3242 = vunpack.c.l.b16 %v2538
        %v3243 = vunpack.c.l.b16 %v2539
        %v3244 = vunpack.c.l.b16 %v2540
        %v3245 = vunpack.c.l.b16 %v2541
        %v3246 = vunpack.c.l.b16 %v2542
        %v3247 = vunpack.c.l.b16 %v2543
        %v3248 = vunpack.c.l.b16 %v2544
        %v3249 = vunpack.c.l.b16 %v2545
        %v3250 = vunpack.c.l.b16 %v2546
        %v3251 = vunpack.c.l.b16 %v2547
        %v3252 = vunpack.c.l.b16 %v2548
        %v3253 = vunpack.c.l.b16 %v2549
        %v3254 = vunpack.c.l.b16 %v2550
        %v3255 = vunpack.c.l.b16 %v2551
        %v3256 = vunpack.c.l.b16 %v2552
        %v3257 = vunpack.c.l.b16 %v2553
        %v3258 = vunpack.c.l.b16 %v2554
        %v3259 = vunpack.c.l.b16 %v2555
        %v3260 = vunpack.c.l.b16 %v2556
        %v3261 = vunpack.c.l.b16 %v2557
        %v3262 = vunpack.c.l.b16 %v2558
        %v3263 = vunpack.c.l.b16 %v2559
        %v3264 = vunpack.c.l.b16 %v2560
        %v3265 = vunpack.c.l.b16 %v2561
        %v3266 = vunpack.c.l.b16 %v2562
        %v3267 = vunpack.c.l.b16 %v2563
        %v3268 = vunpack.c.l.b16 %v2564
        %v3269 = vunpack.c.l.b16 %v2565
        %v3270 = vunpack.c.l.b16 %v2566
        %v3271 = vunpack.c.l.b16 %v2567
        %v3272 = vunpack.c.l.b16 %v2568
        %v3273 = vunpack.c.l.b16 %v2569
        %v3274 = vunpack.c.l.b16 %v2570
        %v3275 = vunpack.c.l.b16 %v2571
        %v3276 = vunpack.c.l.b16 %v2572
        %v3277 = vunpack.c.l.b16 %v2573
        %v3278 = vunpack.c.l.b16 %v2574
        %v3279 = vunpack.c.l.b16 %v2575
        %v3280 = vunpack.c.l.b16 %v2576
        %v3281 = vunpack.c.l.b16 %v2577
        %v3282 = vunpack.c.l.b16 %v2578
        %v3283 = vunpack.c.l.b16 %v2579
        %v3284 = vunpack.c.l.b16 %v2580
        %v3285 = vunpack.c.l.b16 %v2581
        %v3286 = vunpack.c.l.b16 %v2582
        %v3287 = vunpack.c.l.b16 %v2583
        %v3288 = vunpack.c.l.b16 %v2584
        %v3289 = vunpack.c.l.b16 %v2585
        %v3290 = vunpack.c.l.b16 %v2586
        %v3291 = vunpack.c.l.b16 %v2587
        %v3292 = vunpack.c.l.b16 %v2588
        %v3293 = vunpack.c.l.b16 %v2589
        %v3294 = vunpack.c.l.b16 %v2590
        %v3295 = vunpack.c.l.b16 %v2591
        %v3296 = vunpack.c.l.b16 %v2592
        %v3297 = vunpack.c.l.b16 %v2593
        %v3298 = vunpack.c.l.b16 %v2594
        %v3299 = vunpack.c.l.b16 %v2595
        %v3300 = vunpack.c.l.b16 %v2596
        %v3301 = vunpack.c.l.b16 %v2597
        %v3302 = vunpack.c.l.b16 %v2598
        %v3303 = vunpack.c.l.b16 %v2599
        %v3304 = vunpack.c.l.b16 %v2600
        %v3305 = vunpack.c.l.b16 %v2601
        %v3306 = vunpack.c.l.b16 %v2602
        %v3307 = vunpack.c.l.b16 %v2603
        %v3308 = vunpack.c.l.b16 %v2604
        %v3309 = vunpack.c.l.b16 %v2605
        %v3310 = vunpack.c.l.b16 %v2606
        %v3311 = vunpack.c.l.b16 %v2607
        %v3312 = vunpack.c.l.b16 %v2608
        %v3313 = vunpack.c.l.b16 %v2609
        %v3314 = vunpack.c.l.b16 %v2610
        %v3315 = vunpack.c.l.b16 %v2611
        %v3316 = vunpack.c.l.b16 %v2612
        %v3317 = vunpack.c.l.b16 %v2613
        %v3318 = vunpack.c.l.b16 %v2614
        %v3319 = vunpack.c.l.b16 %v2615
        %v3320 = vunpack.c.l.b16 %v2616
        %v3321 = vunpack.c.l.b16 %v2617
        %v3322 = vunpack.c.l.b16 %v2618
        %v3323 = vunpack.c.l.b16 %v2619
        %v3324 = vunpack.c.l.b16 %v2620
        %v3325 = vunpack.c.l.b16 %v2621
        %v3326 = vunpack.c.l.b16 %v2622
        %v3327 = vunpack.c.l.b16 %v2623
        %v3328 = vunpack.c.l.b16 %v2624
        %v3329 = vunpack.c.l.b16 %v2625
        %v3330 = vunpack.c.l.b16 %v2626
        %v3331 = vunpack.c.l.b16 %v2627
        %v3332 = vunpack.c.l.b16 %v2628
        %v3333 = vunpack.c.l.b16 %v2629
        %v3334 = vunpack.c.l.b16 %v2630
        %v3335 = vunpack.c.l.b16 %v2631
        %v3336 = vunpack.c.l.b16 %v2632
        %v3337 = vunpack.c.l.b16 %v2633
        %v3338 = vunpack.c.l.b16 %v2634
        %v3339 = vunpack.c.l.b16 %v2635
        %v3340 = vunpack.c.l.b16 %v2636
        %v3341 = vunpack.c.l.b16 %v2637
        %v3342 = vunpack.c.l.b16 %v2638
        %v3343 = vunpack.c.l.b16 %v2639
        %v3344 = vunpack.c.l.b16 %v2640
        %v3345 = vunpack.c.l.b16 %v2641
        %v3346 = vunpack.c.l.b16 %v2642
        %v3347 = vunpack.c.l.b16 %v2643
        %v3348 = vunpack.c.l.b16 %v2644
        %v3349 = vunpack.c.l.b16 %v2645
        %v3350 = vunpack.c.l.b16 %v2646
        %v3351 = vunpack.c.l.b16 %v2647
        %v3352 = vunpack.c.l.b16 %v2648
        %v3353 = vunpack.c.l.b16 %v2649
        %v3354 = vunpack.c.l.b16 %v2650
        %v3355 = vunpack.c.l.b16 %v2651
        %v3356 = vunpack.c.l.b16 %v2652
        %v3357 = vunpack.c.l.b16 %v2653
        %v3358 = vunpack.c.l.b16 %v2654
        %v3359 = vunpack.c.l.b16 %v2655
        %v3360 = vunpack.c.l.b16 %v2656
        %v3361 = vunpack.c.l.b16 %v2657
        %v3362 = vunpack.c.l.b16 %v2658
        %v3363 = vunpack.c.l.b16 %v2659
        %v3364 = vunpack.c.l.b16 %v2660
        %v3365 = vunpack.c.l.b16 %v2661
        %v3366 = vunpack.c.l.b16 %v2662
        %v3367 = vunpack.c.l.b16 %v2663
        %v3368 = vunpack.c.l.b16 %v2664
        %v3369 = vunpack.c.l.b16 %v2665
        %v3370 = vunpack.c.l.b16 %v2666
        %v3371 = vunpack.c.l.b16 %v2667
        %v3372 = vunpack.c.l.b16 %v2668
        %v3373 = vunpack.c.l.b16 %v2669
        %v3374 = vunpack.c.l.b16 %v2670
        %v3375 = vunpack.c.l.b16 %v2671
        %v3376 = vunpack.c.l.b16 %v2672
        %v3377 = vunpack.c.l.b16 %v2673
        %v3378 = vunpack.c.l.b16 %v2674
        %v3379 = vunpack.c.l.b16 %v2675
        %v3380 = vunpack.c.l.b16 %v2676
        %v3381 = vunpack.c.l.b16 %v2677
        %v3382 = vunpack.c.l.b16 %v2678
        %v3383 = vunpack.c.l.b16 %v2679
        %v3384 = vunpack.c.l.b16 %v2680
        %v3385 = vunpack.c.l.b16 %v2681
        %v3386 = vunpack.c.l.b16 %v2682
        %v3387 = vunpack.c.l.b16 %v2683
        %v3388 = vunpack.c.l.b16 %v2684
        %v3389 = vunpack.c.l.b16 %v2685
        %v3390 = vunpack.c.l.b16 %v2686
        %v3391 = vunpack.c.l.b16 %v2687
        %v3392 = vunpack.c.l.b16 %v2688
        %v3393 = vunpack.c.l.b16 %v2689
        %v3394 = vunpack.c.l.b16 %v2690
        %v3395 = vunpack.c.l.b16 %v2691
        %v3396 = vunpack.c.l.b16 %v2692
        %v3397 = vunpack.c.l.b16 %v2693
        %v3398 = vunpack.c.l.b16 %v2694
        %v3399 = vunpack.c.l.b16 %v2695
        %v3400 = vunpack.c.l.b16 %v2696
        %v3401 = vunpack.c.l.b16 %v2697
        %v3402 = vunpack.c.l.b16 %v2698
        %v3403 = vunpack.c.l.b16 %v2699
        %v3404 = vunpack.c.l.b16 %v2700
        %v3405 = vunpack.c.l.b16 %v2701
        %v3406 = vunpack.c.l.b16 %v2702
        %v3407 = vunpack.c.l.b16 %v2703
        %v3408 = vunpack.c.l.b16 %v2704
        %v3409 = vunpack.c.l.b16 %v2705
        %v3410 = vunpack.c.l.b16 %v2706
        %v3411 = vunpack.c.l.b16 %v2707
        %v3412 = vunpack.c.l.b16 %v2708
        %v3413 = vunpack.c.l.b16 %v2709
        %v3414 = vunpack.c.l.b16 %v2710
        %v3415 = vunpack.c.l.b16 %v2711
        %v3416 = vunpack.c.l.b16 %v2712
        %v3417 = vunpack.c.l.b16 %v2713
        %v3418 = vunpack.c.l.b16 %v2714
        %v3419 = vunpack.c.l.b16 %v2715
        %v3420 = vunpack.c.l.b16 %v2716
        %v3421 = vunpack.c.l.b16 %v2717
        %v3422 = vunpack.c.l.b16 %v2718
        %v3423 = vunpack.c.l.b16 %v2719
        %v3424 = vunpack.c.l.b16 %v2720
        %v3425 = vunpack.c.l.b16 %v2721
        %v3426 = vunpack.c.l.b16 %v2722
        %v3427 = vunpack.c.l.b16 %v2723
        %v3428 = vunpack.c.l.b16 %v2724
        %v3429 = vunpack.c.l.b16 %v2725
        %v3430 = vunpack.c.l.b16 %v2726
        %v3431 = vunpack.c.l.b16 %v2727
        %v3432 = vunpack.c.l.b16 %v2728
        %v3433 = vunpack.c.l.b16 %v2729
        %v3434 = vunpack.c.l.b16 %v2730
        %v3435 = vunpack.c.l.b16 %v2731
        %v3436 = vunpack.c.l.b16 %v2732
        %v3437 = vunpack.c.l.b16 %v2733
        %v3438 = vunpack.c.l.b16 %v2734
        %v3439 = vunpack.c.l.b16 %v2735
        %v3440 = vunpack.c.l.b16 %v2736
        %v3441 = vunpack.c.l.b16 %v2737
        %v3442 = vunpack.c.l.b16 %v2738
        %v3443 = vunpack.c.l.b16 %v2739
        %v3444 = vunpack.c.l.b16 %v2740
        %v3445 = vunpack.c.l.b16 %v2741
        %v3446 = vunpack.c.l.b16 %v2742
        %v3447 = vunpack.c.l.b16 %v2743
        %v3448 = vunpack.c.l.b16 %v2744
        %v3449 = vunpack.c.l.b16 %v2745
        %v3450 = vunpack.c.l.b16 %v2746
        %v3451 = vunpack.c.l.b16 %v2747
        %v3452 = vunpack.c.l.b16 %v2748
        %v3453 = vunpack.c.l.b16 %v2749
        %v3454 = vunpack.c.l.b16 %v2750
        %v3455 = vunpack.c.l.b16 %v2751
        %v3456 = vunpack.c.l.b16 %v2752
        %v3457 = vunpack.c.l.b16 %v2753
        %v3458 = vunpack.c.l.b16 %v2754
        %v3459 = vunpack.c.l.b16 %v2755
        %v3460 = vunpack.c.l.b16 %v2756
        %v3461 = vunpack.c.l.b16 %v2757
        %v3462 = vunpack.c.l.b16 %v2758
        %v3463 = vunpack.c.l.b16 %v2759
        %v3464 = vunpack.c.l.b16 %v2760
        %v3465 = vunpack.c.l.b16 %v2761
        %v3466 = vunpack.c.l.b16 %v2762
        %v3467 = vunpack.c.l.b16 %v2763
        %v3468 = vunpack.c.l.b16 %v2764
        %v3469 = vunpack.c.l.b16 %v2765
        %v3470 = vunpack.c.l.b16 %v2766
        %v3471 = vunpack.c.l.b16 %v2767
        %v3472 = vunpack.c.l.b16 %v2768
        %v3473 = vunpack.c.l.b16 %v2769
        %v3474 = vunpack.c.l.b16 %v2770
        %v3475 = vunpack.c.l.b16 %v2771
        %v3476 = vunpack.c.l.b16 %v2772
        %v3477 = vunpack.c.l.b16 %v2773
        %v3478 = vunpack.c.l.b16 %v2774
        %v3479 = vunpack.c.l.b16 %v2775
        %v3480 = vunpack.c.l.b16 %v2776
        %v3481 = vunpack.c.l.b16 %v2777
        %v3482 = vunpack.c.l.b16 %v2778
        %v3483 = vunpack.c.l.b16 %v2779
        %v3484 = vunpack.c.l.b16 %v2780
        %v3485 = vunpack.c.l.b16 %v2781
        %v3486 = vunpack.c.l.b16 %v2782
        %v3487 = vunpack.c.l.b16 %v2783
        %v3488 = vunpack.c.l.b16 %v2784
        %v3489 = vunpack.c.l.b16 %v2785
        %v3490 = vunpack.c.l.b16 %v2786
        %v3491 = vunpack.c.l.b16 %v2787
        %v3492 = vunpack.c.l.b16 %v2788
        %v3493 = vunpack.c.l.b16 %v2789
        %v3494 = vunpack.c.l.b16 %v2790
        %v3495 = vunpack.c.l.b16 %v2791
        %v3496 = vunpack.c.l.b16 %v2792
        %v3497 = vunpack.c.l.b16 %v2793
        %v3498 = vunpack.c.l.b16 %v2794
        %v3499 = vunpack.c.l.b16 %v2795
        %v3500 = vunpack.c.l.b16 %v2796
        %v3501 = vunpack.c.l.b16 %v2797
        %v3502 = vunpack.c.l.b16 %v2798
        %v3503 = vunpack.c.l.b16 %v2799
        %v3504 = vpack.c.b16 %v3153, %v3152
        %v3505 = vpack.c.b16 %v3155, %v3154
        %v3506 = vpack.c.b16 %v3157, %v3156
        %v3507 = vpack.c.b16 %v3159, %v3158
        %v3508 = vpack.c.b16 %v3161, %v3160
        %v3509 = vpack.c.b16 %v3163, %v3162
        %v3510 = vpack.c.b16 %v3165, %v3164
        %v3511 = vpack.c.b16 %v3167, %v3166
        %v3512 = vpack.c.b16 %v3169, %v3168
        %v3513 = vpack.c.b16 %v3171, %v3170
        %v3514 = vpack.c.b16 %v3173, %v3172
        %v3515 = vpack.c.b16 %v3175, %v3174
        %v3516 = vpack.c.b16 %v3177, %v3176
        %v3517 = vpack.c.b16 %v3179, %v3178
        %v3518 = vpack.c.b16 %v3181, %v3180
        %v3519 = vpack.c.b16 %v3183, %v3182
        %v3520 = vpack.c.b16 %v3185, %v3184
        %v3521 = vpack.c.b16 %v3187, %v3186
        %v3522 = vpack.c.b16 %v3189, %v3188
        %v3523 = vpack.c.b16 %v3191, %v3190
        %v3524 = vpack.c.b16 %v3193, %v3192
        %v3525 = vpack.c.b16 %v3195, %v3194
        %v3526 = vpack.c.b16 %v3197, %v3196
        %v3527 = vpack.c.b16 %v3199, %v3198
        %v3528 = vpack.c.b16 %v3201, %v3200
        %v3529 = vpack.c.b16 %v3203, %v3202
        %v3530 = vpack.c.b16 %v3205, %v3204
        %v3531 = vpack.c.b16 %v3207, %v3206
        %v3532 = vpack.c.b16 %v3209, %v3208
        %v3533 = vpack.c.b16 %v3211, %v3210
        %v3534 = vpack.c.b16 %v3213, %v3212
        %v3535 = vpack.c.b16 %v3215, %v3214
        %v3536 = vpack.c.b16 %v3217, %v3216
        %v3537 = vpack.c.b16 %v3219, %v3218
        %v3538 = vpack.c.b16 %v3221, %v3220
        %v3539 = vpack.c.b16 %v3223, %v3222
        %v3540 = vpack.c.b16 %v3225, %v3224
        %v3541 = vpack.c.b16 %v3227, %v3226
        %v3542 = vpack.c.b16 %v3229, %v3228
        %v3543 = vpack.c.b16 %v3231, %v3230
        %v3544 = vpack.c.b16 %v3233, %v3232
        %v3545 = vpack.c.b16 %v3235, %v3234
        %v3546 = vpack.c.b16 %v3237, %v3236
        %v3547 = vpack.c.b16 %v3239, %v3238
        %v3548 = vpack.c.b16 %v3241, %v3240
        %v3549 = vpack.c.b16 %v3243, %v3242
        %v3550 = vpack.c.b16 %v3245, %v3244
        %v3551 = vpack.c.b16 %v3247, %v3246
        %v3552 = vpack.c.b16 %v3249, %v3248
        %v3553 = vpack.c.b16 %v3251, %v3250
        %v3554 = vpack.c.b16 %v3253, %v3252
        %v3555 = vpack.c.b16 %v3255, %v3254
        %v3556 = vpack.c.b16 %v3257, %v3256
        %v3557 = vpack.c.b16 %v3259, %v3258
        %v3558 = vpack.c.b16 %v3261, %v3260
        %v3559 = vpack.c.b16 %v3263, %v3262
        %v3560 = vpack.c.b16 %v3265, %v3264
        %v3561 = vpack.c.b16 %v3267, %v3266
        %v3562 = vpack.c.b16 %v3269, %v3268
        %v3563 = vpack.c.b16 %v3271, %v3270
        %v3564 = vpack.c.b16 %v3273, %v3272
        %v3565 = vpack.c.b16 %v3275, %v3274
        %v3566 = vpack.c.b16 %v3277, %v3276
        %v3567 = vpack.c.b16 %v3279, %v3278
        %v3568 = vpack.c.b16 %v3281, %v3280
        %v3569 = vpack.c.b16 %v3283, %v3282
        %v3570 = vpack.c.b16 %v3285, %v3284
        %v3571 = vpack.c.b16 %v3287, %v3286
        %v3572 = vpack.c.b16 %v3289, %v3288
        %v3573 = vpack.c.b16 %v3291, %v3290
        %v3574 = vpack.c.b16 %v3293, %v3292
        %v3575 = vpack.c.b16 %v3295, %v3294
        %v3576 = vpack.c.b16 %v3297, %v3296
        %v3577 = vpack.c.b16 %v3299, %v3298
        %v3578 = vpack.c.b16 %v3301, %v3300
        %v3579 = vpack.c.b16 %v3303, %v3302
        %v3580 = vpack.c.b16 %v3305, %v3304
        %v3581 = vpack.c.b16 %v3307, %v3306
        %v3582 = vpack.c.b16 %v3309, %v3308
        %v3583 = vpack.c.b16 %v3311, %v3310
        %v3584 = vpack.c.b16 %v3313, %v3312
        %v3585 = vpack.c.b16 %v3315, %v3314
        %v3586 = vpack.c.b16 %v3317, %v3316
        %v3587 = vpack.c.b16 %v3319, %v3318
        %v3588 = vpack.c.b16 %v3321, %v3320
        %v3589 = vpack.c.b16 %v3323, %v3322
        %v3590 = vpack.c.b16 %v3325, %v3324
        %v3591 = vpack.c.b16 %v3327, %v3326
        %v3592 = vpack.c.b16 %v3329, %v3328
        %v3593 = vpack.c.b16 %v3331, %v3330
        %v3594 = vpack.c.b16 %v3333, %v3332
        %v3595 = vpack.c.b16 %v3335, %v3334
        %v3596 = vpack.c.b16 %v3337, %v3336
        %v3597 = vpack.c.b16 %v3339, %v3338
        %v3598 = vpack.c.b16 %v3341, %v3340
        %v3599 = vpack.c.b16 %v3343, %v3342
        %v3600 = vpack.c.b16 %v3345, %v3344
        %v3601 = vpack.c.b16 %v3347, %v3346
        %v3602 = vpack.c.b16 %v3349, %v3348
        %v3603 = vpack.c.b16 %v3351, %v3350
        %v3604 = vpack.c.b16 %v3353, %v3352
        %v3605 = vpack.c.b16 %v3355, %v3354
        %v3606 = vpack.c.b16 %v3357, %v3356
        %v3607 = vpack.c.b16 %v3359, %v3358
        %v3608 = vpack.c.b16 %v3361, %v3360
        %v3609 = vpack.c.b16 %v3363, %v3362
        %v3610 = vpack.c.b16 %v3365, %v3364
        %v3611 = vpack.c.b16 %v3367, %v3366
        %v3612 = vpack.c.b16 %v3369, %v3368
        %v3613 = vpack.c.b16 %v3371, %v3370
        %v3614 = vpack.c.b16 %v3373, %v3372
        %v3615 = vpack.c.b16 %v3375, %v3374
        %v3616 = vpack.c.b16 %v3377, %v3376
        %v3617 = vpack.c.b16 %v3379, %v3378
        %v3618 = vpack.c.b16 %v3381, %v3380
        %v3619 = vpack.c.b16 %v3383, %v3382
        %v3620 = vpack.c.b16 %v3385, %v3384
        %v3621 = vpack.c.b16 %v3387, %v3386
        %v3622 = vpack.c.b16 %v3389, %v3388
        %v3623 = vpack.c.b16 %v3391, %v3390
        %v3624 = vpack.c.b16 %v3393, %v3392
        %v3625 = vpack.c.b16 %v3395, %v3394
        %v3626 = vpack.c.b16 %v3397, %v3396
        %v3627 = vpack.c.b16 %v3399, %v3398
        %v3628 = vpack.c.b16 %v3401, %v3400
        %v3629 = vpack.c.b16 %v3403, %v3402
        %v3630 = vpack.c.b16 %v3405, %v3404
        %v3631 = vpack.c.b16 %v3407, %v3406
        %v3632 = vpack.c.b16 %v3409, %v3408
        %v3633 = vpack.c.b16 %v3411, %v3410
        %v3634 = vpack.c.b16 %v3413, %v3412
        %v3635 = vpack.c.b16 %v3415, %v3414
        %v3636 = vpack.c.b16 %v3417, %v3416
        %v3637 = vpack.c.b16 %v3419, %v3418
        %v3638 = vpack.c.b16 %v3421, %v3420
        %v3639 = vpack.c.b16 %v3423, %v3422
        %v3640 = vpack.c.b16 %v3425, %v3424
        %v3641 = vpack.c.b16 %v3427, %v3426
        %v3642 = vpack.c.b16 %v3429, %v3428
        %v3643 = vpack.c.b16 %v3431, %v3430
        %v3644 = vpack.c.b16 %v3433, %v3432
        %v3645 = vpack.c.b16 %v3435, %v3434
        %v3646 = vpack.c.b16 %v3437, %v3436
        %v3647 = vpack.c.b16 %v3439, %v3438
        %v3648 = vpack.c.b16 %v3441, %v3440
        %v3649 = vpack.c.b16 %v3443, %v3442
        %v3650 = vpack.c.b16 %v3445, %v3444
        %v3651 = vpack.c.b16 %v3447, %v3446
        %v3652 = vpack.c.b16 %v3449, %v3448
        %v3653 = vpack.c.b16 %v3451, %v3450
        %v3654 = vpack.c.b16 %v3453, %v3452
        %v3655 = vpack.c.b16 %v3455, %v3454
        %v3656 = vpack.c.b16 %v3457, %v3456
        %v3657 = vpack.c.b16 %v3459, %v3458
        %v3658 = vpack.c.b16 %v3461, %v3460
        %v3659 = vpack.c.b16 %v3463, %v3462
        %v3660 = vpack.c.b16 %v3465, %v3464
        %v3661 = vpack.c.b16 %v3467, %v3466
        %v3662 = vpack.c.b16 %v3469, %v3468
        %v3663 = vpack.c.b16 %v3471, %v3470
        %v3664 = vpack.c.b16 %v3473, %v3472
        %v3665 = vpack.c.b16 %v3475, %v3474
        %v3666 = vpack.c.b16 %v3477, %v3476
        %v3667 = vpack.c.b16 %v3479, %v3478
        %v3668 = vpack.c.b16 %v3481, %v3480
        %v3669 = vpack.c.b16 %v3483, %v3482
        %v3670 = vpack.c.b16 %v3485, %v3484
        %v3671 = vpack.c.b16 %v3487, %v3486
        %v3672 = vpack.c.b16 %v3489, %v3488
        %v3673 = vpack.c.b16 %v3491, %v3490
        %v3674 = vpack.c.b16 %v3493, %v3492
        %v3675 = vpack.c.b16 %v3495, %v3494
        %v3676 = vpack.c.b16 %v3497, %v3496
        %v3677 = vpack.c.b16 %v3499, %v3498
        %v3678 = vpack.c.b16 %v3501, %v3500
        %v3679 = vpack.c.b16 %v3503, %v3502
        %3856 = vmatprep.subr.bf16.mxu0 0
        %3857 = vmatpush1.bf16.msra.mxu0 %v3511
        %3858 = vmatprep.subr.bf16.mxu0 0
        %3859 = vmatpush1.bf16.msra.mxu0 %v3510
        %3860 = vmatprep.subr.bf16.mxu0 0
        %3861 = vmatpush1.bf16.msra.mxu0 %v3509
        %3862 = vmatprep.subr.bf16.mxu0 0
        %3863 = vmatpush1.bf16.msra.mxu0 %v3508
        %3864 = vmatprep.subr.bf16.mxu0 0
        %3865 = vmatpush1.bf16.msra.mxu0 %v3507
        %3866 = vmatprep.subr.bf16.mxu0 0
        %3867 = vmatpush1.bf16.msra.mxu0 %v3506
        %3868 = vmatprep.subr.bf16.mxu0 0
        %3869 = vmatpush1.bf16.msra.mxu0 %v3505
        %3870 = vmatprep.subr.bf16.mxu0 0
        %3871 = vmatpush1.bf16.msra.mxu0 %v3504
        %3872 = vmatprep.subr.bf16.mxu0 0
        %3873 = vmatpush2.bf16.msra.mxu0 %v3519
        %3874 = vmatprep.subr.bf16.mxu0 0
        %3875 = vmatpush2.bf16.msra.mxu0 %v3518
        %3876 = vmatprep.subr.bf16.mxu0 0
        %3877 = vmatpush2.bf16.msra.mxu0 %v3517
        %3878 = vmatprep.subr.bf16.mxu0 0
        %3879 = vmatpush2.bf16.msra.mxu0 %v3516
        %3880 = vmatprep.subr.bf16.mxu0 0
        %3881 = vmatpush2.bf16.msra.mxu0 %v3515
        %3882 = vmatprep.subr.bf16.mxu0 0
        %3883 = vmatpush2.bf16.msra.mxu0 %v3514
        %3884 = vmatprep.subr.bf16.mxu0 0
        %3885 = vmatpush2.bf16.msra.mxu0 %v3513
        %3886 = vmatprep.subr.bf16.mxu0 0
        %3887 = vmatpush2.bf16.msra.mxu0 %v3512
        %3888 = vmatprep.mubr.bf16.mxu0 %v575
        %3889 = vmatmul.mubr.bf16.gmra.mxu0 %v574
        %v3890 = vpop.f32.mrf.mxu0
        %v3891 = vadd.f32 0.0, %v3890
        %v3892 = vpop.f32.mrf.mxu0
        %v3893 = vpop.f32.mrf.mxu0
        %v3894 = vpop.f32.mrf.mxu0
        %3895 = vdwg.mxu0
        %3896 = vmatprep.subr.bf16.mxu0 0
        %3897 = vmatpush1.bf16.msra.mxu0 %v3527
        %3898 = vmatprep.subr.bf16.mxu0 0
        %3899 = vmatpush1.bf16.msra.mxu0 %v3526
        %3900 = vmatprep.subr.bf16.mxu0 0
        %3901 = vmatpush1.bf16.msra.mxu0 %v3525
        %3902 = vmatprep.subr.bf16.mxu0 0
        %3903 = vmatpush1.bf16.msra.mxu0 %v3524
        %3904 = vmatprep.subr.bf16.mxu0 0
        %3905 = vmatpush1.bf16.msra.mxu0 %v3523
        %3906 = vmatprep.subr.bf16.mxu0 0
        %3907 = vmatpush1.bf16.msra.mxu0 %v3522
        %3908 = vmatprep.subr.bf16.mxu0 0
        %3909 = vmatpush1.bf16.msra.mxu0 %v3521
        %3910 = vmatprep.subr.bf16.mxu0 0
        %3911 = vmatpush1.bf16.msra.mxu0 %v3520
        %3912 = vmatprep.subr.bf16.mxu0 0
        %3913 = vmatpush2.bf16.msra.mxu0 %v3535
        %3914 = vmatprep.subr.bf16.mxu0 0
        %3915 = vmatpush2.bf16.msra.mxu0 %v3534
        %3916 = vmatprep.subr.bf16.mxu0 0
        %3917 = vmatpush2.bf16.msra.mxu0 %v3533
        %3918 = vmatprep.subr.bf16.mxu0 0
        %3919 = vmatpush2.bf16.msra.mxu0 %v3532
        %3920 = vmatprep.subr.bf16.mxu0 0
        %3921 = vmatpush2.bf16.msra.mxu0 %v3531
        %3922 = vmatprep.subr.bf16.mxu0 0
        %3923 = vmatpush2.bf16.msra.mxu0 %v3530
        %3924 = vmatprep.subr.bf16.mxu0 0
        %3925 = vmatpush2.bf16.msra.mxu0 %v3529
        %3926 = vmatprep.subr.bf16.mxu0 0
        %3927 = vmatpush2.bf16.msra.mxu0 %v3528
        %3928 = vmatprep.mubr.bf16.mxu0 %v577
        %3929 = vmatmul.mubr.bf16.gmra.mxu0 %v576
        %v3930 = vpop.f32.mrf.mxu0
        %v3931 = vadd.f32 %v3891, %v3930
        %v3932 = vpop.f32.mrf.mxu0
        %v3933 = vpop.f32.mrf.mxu0
        %v3934 = vpop.f32.mrf.mxu0
        %3935 = vdwg.mxu0
        %3936 = vmatprep.subr.bf16.mxu0 0
        %3937 = vmatpush1.bf16.msra.mxu0 %v3543
        %3938 = vmatprep.subr.bf16.mxu0 0
        %3939 = vmatpush1.bf16.msra.mxu0 %v3542
        %3940 = vmatprep.subr.bf16.mxu0 0
        %3941 = vmatpush1.bf16.msra.mxu0 %v3541
        %3942 = vmatprep.subr.bf16.mxu0 0
        %3943 = vmatpush1.bf16.msra.mxu0 %v3540
        %3944 = vmatprep.subr.bf16.mxu0 0
        %3945 = vmatpush1.bf16.msra.mxu0 %v3539
        %3946 = vmatprep.subr.bf16.mxu0 0
        %3947 = vmatpush1.bf16.msra.mxu0 %v3538
        %3948 = vmatprep.subr.bf16.mxu0 0
        %3949 = vmatpush1.bf16.msra.mxu0 %v3537
        %3950 = vmatprep.subr.bf16.mxu0 0
        %3951 = vmatpush1.bf16.msra.mxu0 %v3536
        %3952 = vmatprep.subr.bf16.mxu0 0
        %3953 = vmatpush2.bf16.msra.mxu0 %v3551
        %3954 = vmatprep.subr.bf16.mxu0 0
        %3955 = vmatpush2.bf16.msra.mxu0 %v3550
        %3956 = vmatprep.subr.bf16.mxu0 0
        %3957 = vmatpush2.bf16.msra.mxu0 %v3549
        %3958 = vmatprep.subr.bf16.mxu0 0
        %3959 = vmatpush2.bf16.msra.mxu0 %v3548
        %3960 = vmatprep.subr.bf16.mxu0 0
        %3961 = vmatpush2.bf16.msra.mxu0 %v3547
        %3962 = vmatprep.subr.bf16.mxu0 0
        %3963 = vmatpush2.bf16.msra.mxu0 %v3546
        %3964 = vmatprep.subr.bf16.mxu0 0
        %3965 = vmatpush2.bf16.msra.mxu0 %v3545
        %3966 = vmatprep.subr.bf16.mxu0 0
        %3967 = vmatpush2.bf16.msra.mxu0 %v3544
        %3968 = vmatprep.mubr.bf16.mxu0 %v579
        %3969 = vmatmul.mubr.bf16.gmra.mxu0 %v578
        %v3970 = vpop.f32.mrf.mxu0
        %v3971 = vadd.f32 %v3931, %v3970
        %v3972 = vpop.f32.mrf.mxu0
        %v3973 = vpop.f32.mrf.mxu0
        %v3974 = vpop.f32.mrf.mxu0
        %3975 = vdwg.mxu0
        %3976 = vmatprep.subr.bf16.mxu0 0
        %3977 = vmatpush1.bf16.msra.mxu0 %v3559
        %3978 = vmatprep.subr.bf16.mxu0 0
        %3979 = vmatpush1.bf16.msra.mxu0 %v3558
        %3980 = vmatprep.subr.bf16.mxu0 0
        %3981 = vmatpush1.bf16.msra.mxu0 %v3557
        %3982 = vmatprep.subr.bf16.mxu0 0
        %3983 = vmatpush1.bf16.msra.mxu0 %v3556
        %3984 = vmatprep.subr.bf16.mxu0 0
        %3985 = vmatpush1.bf16.msra.mxu0 %v3555
        %3986 = vmatprep.subr.bf16.mxu0 0
        %3987 = vmatpush1.bf16.msra.mxu0 %v3554
        %3988 = vmatprep.subr.bf16.mxu0 0
        %3989 = vmatpush1.bf16.msra.mxu0 %v3553
        %3990 = vmatprep.subr.bf16.mxu0 0
        %3991 = vmatpush1.bf16.msra.mxu0 %v3552
        %3992 = vmatprep.subr.bf16.mxu0 0
        %3993 = vmatpush2.bf16.msra.mxu0 %v3567
        %3994 = vmatprep.subr.bf16.mxu0 0
        %3995 = vmatpush2.bf16.msra.mxu0 %v3566
        %3996 = vmatprep.subr.bf16.mxu0 0
        %3997 = vmatpush2.bf16.msra.mxu0 %v3565
        %3998 = vmatprep.subr.bf16.mxu0 0
        %3999 = vmatpush2.bf16.msra.mxu0 %v3564
        %4000 = vmatprep.subr.bf16.mxu0 0
        %4001 = vmatpush2.bf16.msra.mxu0 %v3563
        %4002 = vmatprep.subr.bf16.mxu0 0
        %4003 = vmatpush2.bf16.msra.mxu0 %v3562
        %4004 = vmatprep.subr.bf16.mxu0 0
        %4005 = vmatpush2.bf16.msra.mxu0 %v3561
        %4006 = vmatprep.subr.bf16.mxu0 0
        %4007 = vmatpush2.bf16.msra.mxu0 %v3560
        %4008 = vmatprep.mubr.bf16.mxu0 %v581
        %4009 = vmatmul.mubr.bf16.gmra.mxu0 %v580
        %v4010 = vpop.f32.mrf.mxu0
        %v4011 = vadd.f32 %v3971, %v4010
        %v4012 = vpop.f32.mrf.mxu0
        %v4013 = vpop.f32.mrf.mxu0
        %v4014 = vpop.f32.mrf.mxu0
        %4015 = vdwg.mxu0
        %4016 = vmatprep.subr.bf16.mxu0 0
        %4017 = vmatpush1.bf16.msra.mxu0 %v3575
        %4018 = vmatprep.subr.bf16.mxu0 0
        %4019 = vmatpush1.bf16.msra.mxu0 %v3574
        %4020 = vmatprep.subr.bf16.mxu0 0
        %4021 = vmatpush1.bf16.msra.mxu0 %v3573
        %4022 = vmatprep.subr.bf16.mxu0 0
        %4023 = vmatpush1.bf16.msra.mxu0 %v3572
        %4024 = vmatprep.subr.bf16.mxu0 0
        %4025 = vmatpush1.bf16.msra.mxu0 %v3571
        %4026 = vmatprep.subr.bf16.mxu0 0
        %4027 = vmatpush1.bf16.msra.mxu0 %v3570
        %4028 = vmatprep.subr.bf16.mxu0 0
        %4029 = vmatpush1.bf16.msra.mxu0 %v3569
        %4030 = vmatprep.subr.bf16.mxu0 0
        %4031 = vmatpush1.bf16.msra.mxu0 %v3568
        %4032 = vmatprep.subr.bf16.mxu0 0
        %4033 = vmatpush2.bf16.msra.mxu0 %v3583
        %4034 = vmatprep.subr.bf16.mxu0 0
        %4035 = vmatpush2.bf16.msra.mxu0 %v3582
        %4036 = vmatprep.subr.bf16.mxu0 0
        %4037 = vmatpush2.bf16.msra.mxu0 %v3581
        %4038 = vmatprep.subr.bf16.mxu0 0
        %4039 = vmatpush2.bf16.msra.mxu0 %v3580
        %4040 = vmatprep.subr.bf16.mxu0 0
        %4041 = vmatpush2.bf16.msra.mxu0 %v3579
        %4042 = vmatprep.subr.bf16.mxu0 0
        %4043 = vmatpush2.bf16.msra.mxu0 %v3578
        %4044 = vmatprep.subr.bf16.mxu0 0
        %4045 = vmatpush2.bf16.msra.mxu0 %v3577
        %4046 = vmatprep.subr.bf16.mxu0 0
        %4047 = vmatpush2.bf16.msra.mxu0 %v3576
        %4048 = vmatprep.mubr.bf16.mxu0 %v583
        %4049 = vmatmul.mubr.bf16.gmra.mxu0 %v582
        %v4050 = vpop.f32.mrf.mxu0
        %v4051 = vadd.f32 %v4011, %v4050
        %v4052 = vpop.f32.mrf.mxu0
        %v4053 = vpop.f32.mrf.mxu0
        %v4054 = vpop.f32.mrf.mxu0
        %4055 = vdwg.mxu0
        %4056 = vmatprep.subr.bf16.mxu0 0
        %4057 = vmatpush1.bf16.msra.mxu0 %v3591
        %4058 = vmatprep.subr.bf16.mxu0 0
        %4059 = vmatpush1.bf16.msra.mxu0 %v3590
        %4060 = vmatprep.subr.bf16.mxu0 0
        %4061 = vmatpush1.bf16.msra.mxu0 %v3589
        %4062 = vmatprep.subr.bf16.mxu0 0
        %4063 = vmatpush1.bf16.msra.mxu0 %v3588
        %4064 = vmatprep.subr.bf16.mxu0 0
        %4065 = vmatpush1.bf16.msra.mxu0 %v3587
        %4066 = vmatprep.subr.bf16.mxu0 0
        %4067 = vmatpush1.bf16.msra.mxu0 %v3586
        %4068 = vmatprep.subr.bf16.mxu0 0
        %4069 = vmatpush1.bf16.msra.mxu0 %v3585
        %4070 = vmatprep.subr.bf16.mxu0 0
        %4071 = vmatpush1.bf16.msra.mxu0 %v3584
        %4072 = vmatprep.subr.bf16.mxu0 0
        %4073 = vmatpush2.bf16.msra.mxu0 %v3599
        %4074 = vmatprep.subr.bf16.mxu0 0
        %4075 = vmatpush2.bf16.msra.mxu0 %v3598
        %4076 = vmatprep.subr.bf16.mxu0 0
        %4077 = vmatpush2.bf16.msra.mxu0 %v3597
        %4078 = vmatprep.subr.bf16.mxu0 0
        %4079 = vmatpush2.bf16.msra.mxu0 %v3596
        %4080 = vmatprep.subr.bf16.mxu0 0
        %4081 = vmatpush2.bf16.msra.mxu0 %v3595
        %4082 = vmatprep.subr.bf16.mxu0 0
        %4083 = vmatpush2.bf16.msra.mxu0 %v3594
        %4084 = vmatprep.subr.bf16.mxu0 0
        %4085 = vmatpush2.bf16.msra.mxu0 %v3593
        %4086 = vmatprep.subr.bf16.mxu0 0
        %4087 = vmatpush2.bf16.msra.mxu0 %v3592
        %4088 = vmatprep.mubr.bf16.mxu0 %v585
        %4089 = vmatmul.mubr.bf16.gmra.mxu0 %v584
        %v4090 = vpop.f32.mrf.mxu0
        %v4091 = vadd.f32 %v4051, %v4090
        %v4092 = vpop.f32.mrf.mxu0
        %v4093 = vpop.f32.mrf.mxu0
        %v4094 = vpop.f32.mrf.mxu0
        %4095 = vdwg.mxu0
        %4096 = vmatprep.subr.bf16.mxu0 0
        %4097 = vmatpush1.bf16.msra.mxu0 %v3607
        %4098 = vmatprep.subr.bf16.mxu0 0
        %4099 = vmatpush1.bf16.msra.mxu0 %v3606
        %4100 = vmatprep.subr.bf16.mxu0 0
        %4101 = vmatpush1.bf16.msra.mxu0 %v3605
        %4102 = vmatprep.subr.bf16.mxu0 0
        %4103 = vmatpush1.bf16.msra.mxu0 %v3604
        %4104 = vmatprep.subr.bf16.mxu0 0
        %4105 = vmatpush1.bf16.msra.mxu0 %v3603
        %4106 = vmatprep.subr.bf16.mxu0 0
        %4107 = vmatpush1.bf16.msra.mxu0 %v3602
        %4108 = vmatprep.subr.bf16.mxu0 0
        %4109 = vmatpush1.bf16.msra.mxu0 %v3601
        %4110 = vmatprep.subr.bf16.mxu0 0
        %4111 = vmatpush1.bf16.msra.mxu0 %v3600
        %4112 = vmatprep.subr.bf16.mxu0 0
        %4113 = vmatpush2.bf16.msra.mxu0 %v3615
        %4114 = vmatprep.subr.bf16.mxu0 0
        %4115 = vmatpush2.bf16.msra.mxu0 %v3614
        %4116 = vmatprep.subr.bf16.mxu0 0
        %4117 = vmatpush2.bf16.msra.mxu0 %v3613
        %4118 = vmatprep.subr.bf16.mxu0 0
        %4119 = vmatpush2.bf16.msra.mxu0 %v3612
        %4120 = vmatprep.subr.bf16.mxu0 0
        %4121 = vmatpush2.bf16.msra.mxu0 %v3611
        %4122 = vmatprep.subr.bf16.mxu0 0
        %4123 = vmatpush2.bf16.msra.mxu0 %v3610
        %4124 = vmatprep.subr.bf16.mxu0 0
        %4125 = vmatpush2.bf16.msra.mxu0 %v3609
        %4126 = vmatprep.subr.bf16.mxu0 0
        %4127 = vmatpush2.bf16.msra.mxu0 %v3608
        %4128 = vmatprep.mubr.bf16.mxu0 %v587
        %4129 = vmatmul.mubr.bf16.gmra.mxu0 %v586
        %v4130 = vpop.f32.mrf.mxu0
        %v4131 = vadd.f32 %v4091, %v4130
        %v4132 = vpop.f32.mrf.mxu0
        %v4133 = vpop.f32.mrf.mxu0
        %v4134 = vpop.f32.mrf.mxu0
        %4135 = vdwg.mxu0
        %4136 = vmatprep.subr.bf16.mxu0 0
        %4137 = vmatpush1.bf16.msra.mxu0 %v3623
        %4138 = vmatprep.subr.bf16.mxu0 0
        %4139 = vmatpush1.bf16.msra.mxu0 %v3622
        %4140 = vmatprep.subr.bf16.mxu0 0
        %4141 = vmatpush1.bf16.msra.mxu0 %v3621
        %4142 = vmatprep.subr.bf16.mxu0 0
        %4143 = vmatpush1.bf16.msra.mxu0 %v3620
        %4144 = vmatprep.subr.bf16.mxu0 0
        %4145 = vmatpush1.bf16.msra.mxu0 %v3619
        %4146 = vmatprep.subr.bf16.mxu0 0
        %4147 = vmatpush1.bf16.msra.mxu0 %v3618
        %4148 = vmatprep.subr.bf16.mxu0 0
        %4149 = vmatpush1.bf16.msra.mxu0 %v3617
        %4150 = vmatprep.subr.bf16.mxu0 0
        %4151 = vmatpush1.bf16.msra.mxu0 %v3616
        %4152 = vmatprep.subr.bf16.mxu0 0
        %4153 = vmatpush2.bf16.msra.mxu0 %v3631
        %4154 = vmatprep.subr.bf16.mxu0 0
        %4155 = vmatpush2.bf16.msra.mxu0 %v3630
        %4156 = vmatprep.subr.bf16.mxu0 0
        %4157 = vmatpush2.bf16.msra.mxu0 %v3629
        %4158 = vmatprep.subr.bf16.mxu0 0
        %4159 = vmatpush2.bf16.msra.mxu0 %v3628
        %4160 = vmatprep.subr.bf16.mxu0 0
        %4161 = vmatpush2.bf16.msra.mxu0 %v3627
        %4162 = vmatprep.subr.bf16.mxu0 0
        %4163 = vmatpush2.bf16.msra.mxu0 %v3626
        %4164 = vmatprep.subr.bf16.mxu0 0
        %4165 = vmatpush2.bf16.msra.mxu0 %v3625
        %4166 = vmatprep.subr.bf16.mxu0 0
        %4167 = vmatpush2.bf16.msra.mxu0 %v3624
        %4168 = vmatprep.mubr.bf16.mxu0 %v589
        %4169 = vmatmul.mubr.bf16.gmra.mxu0 %v588
        %v4170 = vpop.f32.mrf.mxu0
        %v4171 = vadd.f32 %v4131, %v4170
        %v4172 = vpop.f32.mrf.mxu0
        %v4173 = vpop.f32.mrf.mxu0
        %v4174 = vpop.f32.mrf.mxu0
        %4175 = vdwg.mxu0
        %4176 = vmatprep.subr.bf16.mxu0 0
        %4177 = vmatpush1.bf16.msra.mxu0 %v3639
        %4178 = vmatprep.subr.bf16.mxu0 0
        %4179 = vmatpush1.bf16.msra.mxu0 %v3638
        %4180 = vmatprep.subr.bf16.mxu0 0
        %4181 = vmatpush1.bf16.msra.mxu0 %v3637
        %4182 = vmatprep.subr.bf16.mxu0 0
        %4183 = vmatpush1.bf16.msra.mxu0 %v3636
        %4184 = vmatprep.subr.bf16.mxu0 0
        %4185 = vmatpush1.bf16.msra.mxu0 %v3635
        %4186 = vmatprep.subr.bf16.mxu0 0
        %4187 = vmatpush1.bf16.msra.mxu0 %v3634
        %4188 = vmatprep.subr.bf16.mxu0 0
        %4189 = vmatpush1.bf16.msra.mxu0 %v3633
        %4190 = vmatprep.subr.bf16.mxu0 0
        %4191 = vmatpush1.bf16.msra.mxu0 %v3632
        %4192 = vmatprep.subr.bf16.mxu0 0
        %4193 = vmatpush2.bf16.msra.mxu0 %v3647
        %4194 = vmatprep.subr.bf16.mxu0 0
        %4195 = vmatpush2.bf16.msra.mxu0 %v3646
        %4196 = vmatprep.subr.bf16.mxu0 0
        %4197 = vmatpush2.bf16.msra.mxu0 %v3645
        %4198 = vmatprep.subr.bf16.mxu0 0
        %4199 = vmatpush2.bf16.msra.mxu0 %v3644
        %4200 = vmatprep.subr.bf16.mxu0 0
        %4201 = vmatpush2.bf16.msra.mxu0 %v3643
        %4202 = vmatprep.subr.bf16.mxu0 0
        %4203 = vmatpush2.bf16.msra.mxu0 %v3642
        %4204 = vmatprep.subr.bf16.mxu0 0
        %4205 = vmatpush2.bf16.msra.mxu0 %v3641
        %4206 = vmatprep.subr.bf16.mxu0 0
        %4207 = vmatpush2.bf16.msra.mxu0 %v3640
        %4208 = vmatprep.mubr.bf16.mxu0 %v591
        %4209 = vmatmul.mubr.bf16.gmra.mxu0 %v590
        %v4210 = vpop.f32.mrf.mxu0
        %v4211 = vadd.f32 %v4171, %v4210
        %v4212 = vpop.f32.mrf.mxu0
        %v4213 = vpop.f32.mrf.mxu0
        %v4214 = vpop.f32.mrf.mxu0
        %4215 = vdwg.mxu0
        %4216 = vmatprep.subr.bf16.mxu0 0
        %4217 = vmatpush1.bf16.msra.mxu0 %v3655
        %4218 = vmatprep.subr.bf16.mxu0 0
        %4219 = vmatpush1.bf16.msra.mxu0 %v3654
        %4220 = vmatprep.subr.bf16.mxu0 0
        %4221 = vmatpush1.bf16.msra.mxu0 %v3653
        %4222 = vmatprep.subr.bf16.mxu0 0
        %4223 = vmatpush1.bf16.msra.mxu0 %v3652
        %4224 = vmatprep.subr.bf16.mxu0 0
        %4225 = vmatpush1.bf16.msra.mxu0 %v3651
        %4226 = vmatprep.subr.bf16.mxu0 0
        %4227 = vmatpush1.bf16.msra.mxu0 %v3650
        %4228 = vmatprep.subr.bf16.mxu0 0
        %4229 = vmatpush1.bf16.msra.mxu0 %v3649
        %4230 = vmatprep.subr.bf16.mxu0 0
        %4231 = vmatpush1.bf16.msra.mxu0 %v3648
        %4232 = vmatprep.subr.bf16.mxu0 0
        %4233 = vmatpush2.bf16.msra.mxu0 %v3663
        %4234 = vmatprep.subr.bf16.mxu0 0
        %4235 = vmatpush2.bf16.msra.mxu0 %v3662
        %4236 = vmatprep.subr.bf16.mxu0 0
        %4237 = vmatpush2.bf16.msra.mxu0 %v3661
        %4238 = vmatprep.subr.bf16.mxu0 0
        %4239 = vmatpush2.bf16.msra.mxu0 %v3660
        %4240 = vmatprep.subr.bf16.mxu0 0
        %4241 = vmatpush2.bf16.msra.mxu0 %v3659
        %4242 = vmatprep.subr.bf16.mxu0 0
        %4243 = vmatpush2.bf16.msra.mxu0 %v3658
        %4244 = vmatprep.subr.bf16.mxu0 0
        %4245 = vmatpush2.bf16.msra.mxu0 %v3657
        %4246 = vmatprep.subr.bf16.mxu0 0
        %4247 = vmatpush2.bf16.msra.mxu0 %v3656
        %4248 = vmatprep.mubr.bf16.mxu0 %v593
        %4249 = vmatmul.mubr.bf16.gmra.mxu0 %v592
        %v4250 = vpop.f32.mrf.mxu0
        %v4251 = vadd.f32 %v4211, %v4250
        %v4252 = vpop.f32.mrf.mxu0
        %v4253 = vpop.f32.mrf.mxu0
        %v4254 = vpop.f32.mrf.mxu0
        %4255 = vdwg.mxu0
        %4256 = vmatprep.subr.bf16.mxu0 0
        %4257 = vmatpush1.bf16.msra.mxu0 %v3671
        %4258 = vmatprep.subr.bf16.mxu0 0
        %4259 = vmatpush1.bf16.msra.mxu0 %v3670
        %4260 = vmatprep.subr.bf16.mxu0 0
        %4261 = vmatpush1.bf16.msra.mxu0 %v3669
        %4262 = vmatprep.subr.bf16.mxu0 0
        %4263 = vmatpush1.bf16.msra.mxu0 %v3668
        %4264 = vmatprep.subr.bf16.mxu0 0
        %4265 = vmatpush1.bf16.msra.mxu0 %v3667
        %4266 = vmatprep.subr.bf16.mxu0 0
        %4267 = vmatpush1.bf16.msra.mxu0 %v3666
        %4268 = vmatprep.subr.bf16.mxu0 0
        %4269 = vmatpush1.bf16.msra.mxu0 %v3665
        %4270 = vmatprep.subr.bf16.mxu0 0
        %4271 = vmatpush1.bf16.msra.mxu0 %v3664
        %4272 = vmatprep.subr.bf16.mxu0 0
        %4273 = vmatpush2.bf16.msra.mxu0 %v3679
        %4274 = vmatprep.subr.bf16.mxu0 0
        %4275 = vmatpush2.bf16.msra.mxu0 %v3678
        %4276 = vmatprep.subr.bf16.mxu0 0
        %4277 = vmatpush2.bf16.msra.mxu0 %v3677
        %4278 = vmatprep.subr.bf16.mxu0 0
        %4279 = vmatpush2.bf16.msra.mxu0 %v3676
        %4280 = vmatprep.subr.bf16.mxu0 0
        %4281 = vmatpush2.bf16.msra.mxu0 %v3675
        %4282 = vmatprep.subr.bf16.mxu0 0
        %4283 = vmatpush2.bf16.msra.mxu0 %v3674
        %4284 = vmatprep.subr.bf16.mxu0 0
        %4285 = vmatpush2.bf16.msra.mxu0 %v3673
        %4286 = vmatprep.subr.bf16.mxu0 0
        %4287 = vmatpush2.bf16.msra.mxu0 %v3672
        %4288 = vmatprep.mubr.bf16.mxu0 %v595
        %4289 = vmatmul.mubr.bf16.gmra.mxu0 %v594
        %v4290 = vpop.f32.mrf.mxu0
        %v4291 = vadd.f32 %v4251, %v4290
        %v4292 = vpop.f32.mrf.mxu0
        %v4293 = vpop.f32.mrf.mxu0
        %v4294 = vpop.f32.mrf.mxu0
        %4295 = vdwg.mxu0
        %v4296 = vadd.f32 %v2447, %v4291
        %4297 = vst [vmem:[#allocation3] sm:$0x3] %v4296
        %p4298 = scmp.eq.s32.totalorder %s28, 1
        // Predicated region
        $region81: #{cnn_ddqn_forward.3} parent=55 // pred_check
          %p4299 = pneg %p4298
        $region82: #{cnn_ddqn_forward.3} parent=55 // pred_check_branch
          %4301 = sbr.rel (%p4299) target = $region84
        $region83: #{cnn_ddqn_forward.3} parent=55 // pred_region
          %v4302 = vld [vmem:[#allocation2] sm:$0x3]
          %v4303 = vld [vmem:[#allocation8] sm:$0x1]
          %v4305 = vlaneseq
          %v4306 = vshrl.u32 %v4305, 7
          %v4307 = vsub.s32 0, %v4306
          %v4308 = vrot.slane %v4303, %v4307
          %v4310 = vadd.f32 %v4302, %v4308
          %v4311 = vmax.f32 %v4310, 0.0
          %v4312 = vld [vmem:[#allocation3] sm:$0x3]
          %v4313 = vld [vmem:[#allocation11] sm:$0x1]
          %v4315 = vlaneseq
          %v4316 = vshrl.u32 %v4315, 7
          %v4317 = vsub.s32 0, %v4316
          %v4318 = vrot.slane %v4313, %v4317
          %v4320 = vadd.f32 %v4312, %v4318
          %v4321 = vmax.f32 %v4320, 0.0
          %v4322 = vld [vmem:[%s5] sm:$0xff]
          %v4323 = vld [vmem:[%s5 + $0x8] sm:$0xff]
          %v4324 = vld [vmem:[%s5 + $0x10] sm:$0xff]
          %v4325 = vld [vmem:[%s5 + $0x18] sm:$0xff]
          %v4326 = vld [vmem:[%s5 + $0x20] sm:$0xff]
          %v4327 = vld [vmem:[%s5 + $0x28] sm:$0xff]
          %v4328 = vld [vmem:[%s5 + $0x30] sm:$0xff]
          %v4329 = vld [vmem:[%s5 + $0x38] sm:$0xff]
          %v4330 = vld [vmem:[%s5 + $0x40] sm:$0xff]
          %v4331 = vld [vmem:[%s5 + $0x48] sm:$0xff]
          %v4332 = vld [vmem:[%s5 + $0x50] sm:$0xff]
          %v4333 = vld [vmem:[%s5 + $0x58] sm:$0xff]
          %v4334 = vld [vmem:[%s5 + $0x60] sm:$0xff]
          %v4335 = vld [vmem:[%s5 + $0x68] sm:$0xff]
          %v4336 = vld [vmem:[%s5 + $0x70] sm:$0xff]
          %v4337 = vld [vmem:[%s5 + $0x78] sm:$0xff]
          %v4338 = vld [vmem:[#allocation4] sm:$0x1]
          %v4340 = vlaneseq
          %v4341 = vshrl.u32 %v4340, 7
          %v4342 = vsub.s32 0, %v4341
          %v4343 = vrot.slane %v4338, %v4342
          %4345 = vmatprep.subr.mxu0 0.0
          %4346 = vmatpush1.msra.mxu0 %v4337
          %4347 = vmatprep.subr.mxu0 0.0
          %4348 = vmatpush1.msra.mxu0 %v4336
          %4349 = vmatprep.subr.mxu0 0.0
          %4350 = vmatpush1.msra.mxu0 %v4335
          %4351 = vmatprep.subr.mxu0 0.0
          %4352 = vmatpush1.msra.mxu0 %v4334
          %4353 = vmatprep.subr.mxu0 0.0
          %4354 = vmatpush1.msra.mxu0 %v4333
          %4355 = vmatprep.subr.mxu0 0.0
          %4356 = vmatpush1.msra.mxu0 %v4332
          %4357 = vmatprep.subr.mxu0 0.0
          %4358 = vmatpush1.msra.mxu0 %v4331
          %4359 = vmatprep.subr.mxu0 0.0
          %4360 = vmatpush1.msra.mxu0 %v4330
          %4361 = vmatprep.subr.mxu0 0.0
          %4362 = vmatpush1.msra.mxu0 %v4329
          %4363 = vmatprep.subr.mxu0 0.0
          %4364 = vmatpush1.msra.mxu0 %v4328
          %4365 = vmatprep.subr.mxu0 0.0
          %4366 = vmatpush1.msra.mxu0 %v4327
          %4367 = vmatprep.subr.mxu0 0.0
          %4368 = vmatpush1.msra.mxu0 %v4326
          %4369 = vmatprep.subr.mxu0 0.0
          %4370 = vmatpush1.msra.mxu0 %v4325
          %4371 = vmatprep.subr.mxu0 0.0
          %4372 = vmatpush1.msra.mxu0 %v4324
          %4373 = vmatprep.subr.mxu0 0.0
          %4374 = vmatpush1.msra.mxu0 %v4323
          %4375 = vmatprep.subr.mxu0 0.0
          %4376 = vmatpush1.msra.mxu0 %v4322
          %4377 = vmatprep.subr.mxu0 0.0
          %4378 = vmatpush2.msra.mxu0 0.0
          %4379 = vmatprep.subr.mxu0 0.0
          %4380 = vmatpush2.msra.mxu0 0.0
          %4381 = vmatprep.subr.mxu0 0.0
          %4382 = vmatpush2.msra.mxu0 0.0
          %4383 = vmatprep.subr.mxu0 0.0
          %4384 = vmatpush2.msra.mxu0 0.0
          %4385 = vmatprep.subr.mxu0 0.0
          %4386 = vmatpush2.msra.mxu0 0.0
          %4387 = vmatprep.subr.mxu0 0.0
          %4388 = vmatpush2.msra.mxu0 0.0
          %4389 = vmatprep.subr.mxu0 0.0
          %4390 = vmatpush2.msra.mxu0 0.0
          %4391 = vmatprep.subr.mxu0 0.0
          %4392 = vmatpush2.msra.mxu0 0.0
          %4393 = vmatprep.subr.mxu0 0.0
          %4394 = vmatpush2.msra.mxu0 0.0
          %4395 = vmatprep.subr.mxu0 0.0
          %4396 = vmatpush2.msra.mxu0 0.0
          %4397 = vmatprep.subr.mxu0 0.0
          %4398 = vmatpush2.msra.mxu0 0.0
          %4399 = vmatprep.subr.mxu0 0.0
          %4400 = vmatpush2.msra.mxu0 0.0
          %4401 = vmatprep.subr.mxu0 0.0
          %4402 = vmatpush2.msra.mxu0 0.0
          %4403 = vmatprep.subr.mxu0 0.0
          %4404 = vmatpush2.msra.mxu0 0.0
          %4405 = vmatprep.subr.mxu0 0.0
          %4406 = vmatpush2.msra.mxu0 0.0
          %4407 = vmatprep.subr.mxu0 0.0
          %4408 = vmatpush2.msra.mxu0 0.0
          %4409 = vmatprep.mubr.f32.mxu0 0.0
          %4410 = vmatmul.mubr.f32.gmra.mxu0 %v4311
          %v4411 = vpop.f32.mrf.mxu0
          %v4412 = vadd.f32 %v4343, %v4411
          %v4413 = vpop.f32.mrf.mxu0
          %4414 = vdwg.mxu0
          %v4415 = vld [vmem:[%s7] sm:$0xff]
          %v4416 = vld [vmem:[%s7 + $0x8] sm:$0xff]
          %v4417 = vld [vmem:[%s7 + $0x10] sm:$0xff]
          %v4418 = vld [vmem:[%s7 + $0x18] sm:$0xff]
          %v4419 = vld [vmem:[%s7 + $0x20] sm:$0xff]
          %v4420 = vld [vmem:[%s7 + $0x28] sm:$0xff]
          %v4421 = vld [vmem:[%s7 + $0x30] sm:$0xff]
          %v4422 = vld [vmem:[%s7 + $0x38] sm:$0xff]
          %v4423 = vld [vmem:[%s7 + $0x40] sm:$0xff]
          %v4424 = vld [vmem:[%s7 + $0x48] sm:$0xff]
          %v4425 = vld [vmem:[%s7 + $0x50] sm:$0xff]
          %v4426 = vld [vmem:[%s7 + $0x58] sm:$0xff]
          %v4427 = vld [vmem:[%s7 + $0x60] sm:$0xff]
          %v4428 = vld [vmem:[%s7 + $0x68] sm:$0xff]
          %v4429 = vld [vmem:[%s7 + $0x70] sm:$0xff]
          %v4430 = vld [vmem:[%s7 + $0x78] sm:$0xff]
          %v4431 = vld [vmem:[#allocation12] sm:$0x1]
          %v4433 = vlaneseq
          %v4434 = vshrl.u32 %v4433, 7
          %v4435 = vsub.s32 0, %v4434
          %v4436 = vrot.slane %v4431, %v4435
          %4438 = vmatprep.subr.mxu0 0.0
          %4439 = vmatpush1.msra.mxu0 %v4430
          %4440 = vmatprep.subr.mxu0 0.0
          %4441 = vmatpush1.msra.mxu0 %v4429
          %4442 = vmatprep.subr.mxu0 0.0
          %4443 = vmatpush1.msra.mxu0 %v4428
          %4444 = vmatprep.subr.mxu0 0.0
          %4445 = vmatpush1.msra.mxu0 %v4427
          %4446 = vmatprep.subr.mxu0 0.0
          %4447 = vmatpush1.msra.mxu0 %v4426
          %4448 = vmatprep.subr.mxu0 0.0
          %4449 = vmatpush1.msra.mxu0 %v4425
          %4450 = vmatprep.subr.mxu0 0.0
          %4451 = vmatpush1.msra.mxu0 %v4424
          %4452 = vmatprep.subr.mxu0 0.0
          %4453 = vmatpush1.msra.mxu0 %v4423
          %4454 = vmatprep.subr.mxu0 0.0
          %4455 = vmatpush1.msra.mxu0 %v4422
          %4456 = vmatprep.subr.mxu0 0.0
          %4457 = vmatpush1.msra.mxu0 %v4421
          %4458 = vmatprep.subr.mxu0 0.0
          %4459 = vmatpush1.msra.mxu0 %v4420
          %4460 = vmatprep.subr.mxu0 0.0
          %4461 = vmatpush1.msra.mxu0 %v4419
          %4462 = vmatprep.subr.mxu0 0.0
          %4463 = vmatpush1.msra.mxu0 %v4418
          %4464 = vmatprep.subr.mxu0 0.0
          %4465 = vmatpush1.msra.mxu0 %v4417
          %4466 = vmatprep.subr.mxu0 0.0
          %4467 = vmatpush1.msra.mxu0 %v4416
          %4468 = vmatprep.subr.mxu0 0.0
          %4469 = vmatpush1.msra.mxu0 %v4415
          %4470 = vmatprep.subr.mxu0 0.0
          %4471 = vmatpush2.msra.mxu0 0.0
          %4472 = vmatprep.subr.mxu0 0.0
          %4473 = vmatpush2.msra.mxu0 0.0
          %4474 = vmatprep.subr.mxu0 0.0
          %4475 = vmatpush2.msra.mxu0 0.0
          %4476 = vmatprep.subr.mxu0 0.0
          %4477 = vmatpush2.msra.mxu0 0.0
          %4478 = vmatprep.subr.mxu0 0.0
          %4479 = vmatpush2.msra.mxu0 0.0
          %4480 = vmatprep.subr.mxu0 0.0
          %4481 = vmatpush2.msra.mxu0 0.0
          %4482 = vmatprep.subr.mxu0 0.0
          %4483 = vmatpush2.msra.mxu0 0.0
          %4484 = vmatprep.subr.mxu0 0.0
          %4485 = vmatpush2.msra.mxu0 0.0
          %4486 = vmatprep.subr.mxu0 0.0
          %4487 = vmatpush2.msra.mxu0 0.0
          %4488 = vmatprep.subr.mxu0 0.0
          %4489 = vmatpush2.msra.mxu0 0.0
          %4490 = vmatprep.subr.mxu0 0.0
          %4491 = vmatpush2.msra.mxu0 0.0
          %4492 = vmatprep.subr.mxu0 0.0
          %4493 = vmatpush2.msra.mxu0 0.0
          %4494 = vmatprep.subr.mxu0 0.0
          %4495 = vmatpush2.msra.mxu0 0.0
          %4496 = vmatprep.subr.mxu0 0.0
          %4497 = vmatpush2.msra.mxu0 0.0
          %4498 = vmatprep.subr.mxu0 0.0
          %4499 = vmatpush2.msra.mxu0 0.0
          %4500 = vmatprep.subr.mxu0 0.0
          %4501 = vmatpush2.msra.mxu0 0.0
          %4502 = vmatprep.mubr.f32.mxu0 0.0
          %4503 = vmatmul.mubr.f32.gmra.mxu0 %v4321
          %v4504 = vpop.f32.mrf.mxu0
          %v4505 = vadd.f32 %v4436, %v4504
          %v4506 = vpop.f32.mrf.mxu0
          %4507 = vdwg.mxu0
          %4509 = vset.pattern.permute.xlu0 0
          %4510 = vperm.xlu0 %4509, %v4412
          %v4511 = vpop.permute.xlu0 %4510
          %v4513 = vadd.f32 %v4511, %v4505
          %vm4514 = vcmask 123904
          %v4515 = vsel %vm4514, %v4505, 0.0
          %4516 = vadd.xlane.f32.xlu0 %v4515
          %v4517 = vpop.xlane.xlu0 %4516
          %v4518 = vrcp.pop 16.0
          %v4519 = vmul.f32 %v4517, %v4518
          %v4520 = vsub.f32 %v4513, %v4519
          %4521 = vst.msk [vmem:[#allocation14] sm:$0x3] %vm4514, %v4520
        $region84: #{cnn_ddqn_forward.3} parent=55 // pred_fallthru
          _
        // Predicated region
        $region85: #{cnn_ddqn_forward.3} parent=55 // pred_check
          %p4522 = pneg %p245
        $region86: #{cnn_ddqn_forward.3} parent=55 // pred_check_branch
          %4524 = sbr.rel (%p4522) target = $region88
        $region87: #{cnn_ddqn_forward.3} parent=55 // pred_region
          %s4526 = ssub.s32 32, 32
          %4527 = vsyncadd [#allocation7], %s4526
          %s4529 = sshll.u32 [#allocation14], 4
          %s4530 = int_to_ptr.vmem [resolvable:$true] %s4529
          %4532 = dma.vmem_to_hbm [thread:$0]  %s4530, 32, %s9, [#allocation7]
        $region88: #{cnn_ddqn_forward.3} parent=55 // pred_fallthru
          _
        // Predicated region
        $region89: #{cnn_ddqn_forward.3} parent=55 // pred_check
          %p4533 = pneg %p245
        $region90: #{cnn_ddqn_forward.3} parent=55 // pred_check_branch
          %4535 = sbr.rel (%p4533) target = $region92
        $region91: #{cnn_ddqn_forward.3} parent=55 // pred_region
          %4536 = dma.done [#allocation7], 32
        $region92: #{cnn_ddqn_forward.3} parent=55 // pred_fallthru
          _
      $region56: #{cnn_ddqn_forward.3} parent=5 // pred_fallthru
        _
      %p4537 = scmp.le.s32.totalorder 2, %s23
      // Predicated region
      $region93: #{cnn_ddqn_forward.3} parent=5 // pred_check
        %p4538 = pneg %p4537
      $region94: #{cnn_ddqn_forward.3} parent=5 // pred_check_branch
        %4540 = sbr.rel (%p4538) target = $region96
      $region95: #{cnn_ddqn_forward.3} parent=5 // pred_region
        %s4541 = ssub.s32 %s23, 2
      $region96: #{cnn_ddqn_forward.3} parent=5 // pred_fallthru
        _
    $region6: #{cnn_ddqn_forward.3} parent=1 // loop_footer
      %s27 = sadd.s32 1, %s23
    $region7: #{cnn_ddqn_forward.3} parent=1 // loop_footer_branch
      %22 = sbr.rel target = $region3
    $region8: #{cnn_ddqn_forward.3} parent=1 // loop_exit
      _
    %4542 = vsyncpa [#allocation6], 1
    %s4543 = scalar_lea.sflag [#allocation6], 1
    %4544 = vsyncpa %s4543, 1
    %4545 = vsyncpa [#allocation9], 1
    %4546 = vsyncpa [#allocation13], 1
    %4547 = vsyncpa [#allocation7], 1
    %s4548 = scalar_lea.sflag [#allocation7], 1
    %4549 = vsyncpa %s4548, 1

</llo_original>
